<compile_context>
chip_gen: v5e
topology: v5e:2x2
jax: 0.10.0
libtpu: 0.0.40
codegen_flags: <defaults>
</compile_context>

<pallas_src>
import functools
import math

import jax
import jax.numpy as jnp
from jax import lax
from jax.experimental import pallas as pl
from jax.experimental.pallas import tpu as pltpu


_NEG = -10000000.0            # same masked-fill value as the PyTorch reference
_CDIST_CHUNK_BYTES = 1 << 20  # ~1 MiB live cdist chunk (padded) per batch element


def _round_up(x, m):
    return (x + m - 1) // m * m


def _tpu_params():
    """(scoped_default_bytes, max_vmem_limit_bytes, cdist_dtype) for the local chip."""
    kind = ""
    try:
        kind = jax.devices()[0].device_kind.lower()
    except Exception:
        pass
    is_v6 = "v6" in kind
    is_v7 = "v7" in kind
    # scoped-VMEM default the compiler applies when vmem_limit_bytes is unset:
    # 16 MiB on v5e-class (and older / unknown, conservatively), 32 MiB on v6e/v7x.
    scoped_default = (32 if (is_v6 or is_v7) else 16) * 1024 * 1024
    # cap for a raised limit: leave headroom under physical VMEM (v7x: 64 MiB/TC).
    max_limit = (52 if is_v7 else 100) * 1024 * 1024
    try:  # refine from the runtime when available (80% of physical capacity)
        cap = int(pltpu.get_tpu_info().vmem_capacity_bytes)
        max_limit = min(max_limit, max(scoped_default, int(cap * 0.8)))
    except Exception:
        pass
    # bf16 abs-diff only where the VALU natively supports bf16 (v6e / v7x);
    # v5e (and unknown chips) keep the f32 path.
    cdist_dtype = jnp.bfloat16 if (is_v6 or is_v7) else jnp.float32
    return scoped_default, max_limit, cdist_dtype


# ----------------------------- IFE kernel (one grid step = Bblk batch elements) -----------------------------

def _ife_kernel(scal_ref, a_ref, b_ref, at_ref, bt_ref, ma_ref, mbt_ref,
                amac_ref, bmac_ref, *, mxu_dtype, d_chunk, bblk):
    """scal_ref: SMEM (2,) f32 = [alpha, beta].
    a_ref (bblk,Na,D) f32, b_ref (bblk,Nb,D) f32,
    at_ref (bblk,D,Na) / bt_ref (bblk,D,Nb) in the cdist compute dtype,
    ma_ref (bblk,Na,1) f32, mbt_ref (bblk,1,Nb) f32.
    Outputs: amac_ref (bblk,Na,D), bmac_ref (bblk,Nb,D) f32."""
    alpha = scal_ref[0]
    beta = scal_ref[1]

    for bi in range(bblk):                               # static batch-block loop
        a = a_ref[bi]                                    # (Na, D) f32
        b = b_ref[bi]                                    # (Nb, D) f32
        at = at_ref[bi]                                  # (D, Na)
        bt = bt_ref[bi]                                  # (D, Nb)
        ma = ma_ref[bi]                                  # (Na, 1) 0/1
        mbt = mbt_ref[bi]                                # (1, Nb) 0/1
        na, d = a.shape
        nb = b.shape[0]

        valid = (ma * mbt) != 0.0                        # (Na, Nb) == torch mask

        # bf16 MXU operands, f32 accumulate; elementwise / softmax math stays f32.
        a_mx = a.astype(mxu_dtype)
        b_mx = b.astype(mxu_dtype)

        # ---- normal_attn: (a @ b^T) * alpha, masked (contract D directly) ----
        ab = lax.dot_general(a_mx, b_mx, (((1,), (1,)), ((), ())),
                             preferred_element_type=jnp.float32)      # (Na, Nb)
        normal = jnp.where(valid, ab * alpha, _NEG)

        # ---- diff_attn: sigmoid(mask(-beta * L1-cdist(a, b))) ----
        # Feature axis leads the chunk, so the reduction is a plain elementwise
        # accumulate over axis 0 (VALU) -- never a 128-lane XLU reduce.
        l1 = jnp.zeros((na, nb), jnp.float32)
        for d0 in range(0, d, d_chunk):                               # static trip count
            dc = min(d_chunk, d - d0)
            chunk = jnp.abs(at[d0:d0 + dc, :, None] - bt[d0:d0 + dc, None, :])
            l1 = l1 + jnp.sum(chunk, axis=0, dtype=jnp.float32)       # (Na, Nb)
        diff = jax.nn.sigmoid(jnp.where(valid, l1 * (-beta), _NEG))

        attn = normal * diff                                          # (Na, Nb)

        # ---- both softmaxes from ONE exp (global-max shift is valid per row AND col) ----
        e = jnp.exp(attn - jnp.max(attn))
        row_inv = pl.reciprocal(jnp.sum(e, axis=1, keepdims=True), approx=True)  # (Na, 1)
        col_inv = pl.reciprocal(jnp.sum(e, axis=0, keepdims=True), approx=True)  # (1, Nb)

        p_row = (e * row_inv).astype(mxu_dtype)           # softmax(attn, dim=2)
        # softmax(attn, dim=1)^T, transposed ONCE explicitly so the b_mac matmul
        # below is a natural (M,K)x(K,N) contraction (no hidden vxpose before MXU).
        p_colt = jnp.transpose(e * col_inv).astype(mxu_dtype)         # (Nb, Na)

        # a_mac = softmax_row @ b
        amac_ref[bi] = lax.dot_general(p_row, b_mx, (((1,), (0,)), ((), ())),
                                       preferred_element_type=jnp.float32)
        # b_mac = softmax_col^T @ a
        bmac_ref[bi] = lax.dot_general(p_colt, a_mx, (((1,), (0,)), ((), ())),
                                       preferred_element_type=jnp.float32)


# ----------------------------- wrapper (LocalInteractionLayer.forward) -----------------------------

def local_interaction(a, b, mask_a, mask_b, alpha, beta, *, mxu_dtype=jnp.bfloat16):
    """Returns (a_mac, b_mac), matching LocalInteractionLayer.forward."""
    B, Na, D = a.shape
    Nb = b.shape[1]
    assert b.shape == (B, Nb, D)

    scoped_default, max_limit, cdist_dtype = _tpu_params()
    cdist_bytes = 2 if cdist_dtype == jnp.bfloat16 else 4

    a = a.astype(jnp.float32)
    b = b.astype(jnp.float32)
    # feature-major copies for the VPU-accumulate cdist (transposed once by XLA)
    at = jnp.swapaxes(a, 1, 2).astype(cdist_dtype)                     # (B, D, Na)
    bt = jnp.swapaxes(b, 1, 2).astype(cdist_dtype)                     # (B, D, Nb)
    ma = mask_a.astype(jnp.float32).reshape(B, Na, 1)
    mbt = mask_b.astype(jnp.float32).reshape(B, Nb, 1).transpose(0, 2, 1)   # (B, 1, Nb)
    scalars = jnp.asarray([alpha, beta], jnp.float32)                   # -> SMEM

    # padded (sublane, lane) tile extents used for every VMEM-footprint estimate
    na8, nb8 = _round_up(Na, 8), _round_up(Nb, 8)
    na128, nb128 = _round_up(Na, 128), _round_up(Nb, 128)
    d8, d128 = _round_up(D, 8), _round_up(D, 128)

    # d_chunk from a live-data budget of the padded (d_chunk, Na, Nb) chunk
    slice_bytes = na8 * nb128 * cdist_bytes
    d_chunk = max(1, min(D, _CDIST_CHUNK_BYTES // slice_bytes))
    if d_chunk > 8:
        d_chunk -= d_chunk % 8

    def _est(bblk):
        # double-buffered input tiles (auto-pipeline)
        inp = (na8 * d128 * 4 + nb8 * d128 * 4                                # a, b
               + d8 * na128 * cdist_bytes + d8 * nb128 * cdist_bytes          # at, bt
               + na8 * 128 * 4 + 8 * nb128 * 4)                               # masks
        out = (na8 + nb8) * d128 * 4                                          # a_mac, b_mac
        inter = (9 * na8 * nb128 * 4          # valid/ab/normal/l1/diff/attn/e/p temporaries
                 + 2 * nb8 * na128 * 4        # transposed column-softmax tile (+ bf16 copy)
                 + (na8 + nb8) * d128 * 2     # a_mx, b_mx bf16 copies
                 + 2 * d_chunk * na8 * nb128 * 4)  # cdist chunk (+ f32 convert slack)
        return int(1.4 * bblk * (2 * inp + 2 * out + inter))

    # batch elements per grid step: largest divisor of B that fits the budget,
    # keeping >= 2 grid steps when B >= 2 (v7x has two TensorCores).
    budget = int(0.9 * max_limit)
    max_bblk = B if B < 2 else max(1, B // 2)
    bblk = 1
    for cand in range(max_bblk, 0, -1):
        if B % cand == 0 and _est(cand) <= budget:
            bblk = cand
            break

    est = _est(bblk)
    vmem_limit = min(max_limit, est) if est > scoped_default else None

    kernel = functools.partial(_ife_kernel, mxu_dtype=mxu_dtype,
                               d_chunk=d_chunk, bblk=bblk)

    return pl.pallas_call(
        kernel,
        out_shape=(jax.ShapeDtypeStruct((B, Na, D), jnp.float32),
                   jax.ShapeDtypeStruct((B, Nb, D), jnp.float32)),
        grid=(B // bblk,),
        in_specs=[
            pl.BlockSpec(memory_space=pltpu.MemorySpace.SMEM),   # [alpha, beta] scalars
            pl.BlockSpec((bblk, Na, D), lambda i: (i, 0, 0)),
            pl.BlockSpec((bblk, Nb, D), lambda i: (i, 0, 0)),
            pl.BlockSpec((bblk, D, Na), lambda i: (i, 0, 0)),
            pl.BlockSpec((bblk, D, Nb), lambda i: (i, 0, 0)),
            pl.BlockSpec((bblk, Na, 1), lambda i: (i, 0, 0)),
            pl.BlockSpec((bblk, 1, Nb), lambda i: (i, 0, 0)),
        ],
        out_specs=(pl.BlockSpec((bblk, Na, D), lambda i: (i, 0, 0)),
                   pl.BlockSpec((bblk, Nb, D), lambda i: (i, 0, 0))),
        compiler_params=pltpu.CompilerParams(
            dimension_semantics=("parallel",),    # batch blocks are independent
            vmem_limit_bytes=vmem_limit),
    )(scalars, a, b, at, bt, ma, mbt)


# ----------------------------- pure-JAX f32 reference -----------------------------

def _reference(a, b, mask_a, mask_b, alpha, beta):
    mask = jnp.matmul(mask_a.astype(jnp.float32),
                      jnp.swapaxes(mask_b.astype(jnp.float32), 1, 2)) != 0.0
    normal = jnp.where(mask, jnp.einsum("bnd,bmd->bnm", a, b) * alpha, _NEG)
    l1 = jnp.sum(jnp.abs(a[:, :, None, :] - b[:, None, :, :]), axis=-1)
    diff = jax.nn.sigmoid(jnp.where(mask, l1 * (-beta), _NEG))
    attn = normal * diff
    a_mac = jnp.einsum("bnm,bmd->bnd", jax.nn.softmax(attn, axis=2), b)
    b_mac = jnp.einsum("bnm,bnd->bmd", jax.nn.softmax(attn, axis=1), a)
    return a_mac, b_mac


# ----------------------------- main -----------------------------

if __name__ == "__main__":
    B, Na, Nb, D = 2, 16, 24, 128    # batch, tokens in a, tokens in b, input_size

    key = jax.random.PRNGKey(0)
    ka, kb = jax.random.split(key)
    a = jax.random.normal(ka, (B, Na, D), jnp.float32)
    b = jax.random.normal(kb, (B, Nb, D), jnp.float32)

    # 0/1 masks with trailing padding positions (no fully-masked rows)
    len_a = jnp.array([Na, Na - 5])
    len_b = jnp.array([Nb - 7, Nb])
    mask_a = (jnp.arange(Na)[None, :] < len_a[:, None]).astype(jnp.float32)[..., None]
    mask_b = (jnp.arange(Nb)[None, :] < len_b[:, None]).astype(jnp.float32)[..., None]

    alpha = 1.0 / math.sqrt(D)       # IFE nn.Parameter init values
    beta = 1.0 / math.sqrt(D)

    fwd = jax.jit(functools.partial(local_interaction, alpha=alpha, beta=beta))
    a_mac, b_mac = fwd(a, b, mask_a, mask_b)
    a_mac, b_mac = jax.block_until_ready((a_mac, b_mac))

    assert a_mac.shape == (B, Na, D) and b_mac.shape == (B, Nb, D)
    assert bool(jnp.all(jnp.isfinite(a_mac))) and bool(jnp.all(jnp.isfinite(b_mac)))

    # tolerance covers the bf16 MXU/cdist operands and the approx reciprocal
    a_ref_out, b_ref_out = _reference(a, b, mask_a, mask_b, alpha, beta)
    assert bool(jnp.allclose(a_mac, a_ref_out, atol=5e-2, rtol=5e-2)), \
        float(jnp.max(jnp.abs(a_mac - a_ref_out)))
    assert bool(jnp.allclose(b_mac, b_ref_out, atol=5e-2, rtol=5e-2)), \
        float(jnp.max(jnp.abs(b_mac - b_ref_out)))

    print("KERNEL_OK")
</pallas_src>

<mosaic_0001>
module attributes {stable_mosaic.version = 11 : i64} {
  func.func @_ife_kernel(%arg0: i32, %arg1: memref<2xf32, #tpu.memory_space<smem>>, %arg2: memref<1x16x128xf32, #tpu.memory_space<vmem>>, %arg3: memref<1x24x128xf32, #tpu.memory_space<vmem>>, %arg4: memref<1x128x16xf32, #tpu.memory_space<vmem>>, %arg5: memref<1x128x24xf32, #tpu.memory_space<vmem>>, %arg6: memref<1x16x1xf32, #tpu.memory_space<vmem>>, %arg7: memref<1x1x24xf32, #tpu.memory_space<vmem>>, %arg8: memref<1x16x128xf32, #tpu.memory_space<vmem>>, %arg9: memref<1x24x128xf32, #tpu.memory_space<vmem>>) attributes {dimension_semantics = [#tpu.dimension_semantics<parallel>], iteration_bounds = array<i64: 2>, scalar_prefetch = 0 : i64, scratch_operands = 0 : i64, tpu.core_type = #tpu.core_type<tc>, window_params = [{transform_indices = @transform_0, window_bounds = array<i64: 2>}, {transform_indices = @transform_1, window_bounds = array<i64: 1, 16, 128>}, {transform_indices = @transform_2, window_bounds = array<i64: 1, 24, 128>}, {transform_indices = @transform_3, window_bounds = array<i64: 1, 128, 16>}, {transform_indices = @transform_4, window_bounds = array<i64: 1, 128, 24>}, {transform_indices = @transform_5, window_bounds = array<i64: 1, 16, 1>}, {transform_indices = @transform_6, window_bounds = array<i64: 1, 1, 24>}, {transform_indices = @transform_7, window_bounds = array<i64: 1, 16, 128>}, {transform_indices = @transform_8, window_bounds = array<i64: 1, 24, 128>}]} {
    %c0 = arith.constant 0 : index
    %0 = memref.load %arg1[%c0] : memref<2xf32, #tpu.memory_space<smem>>
    %c1 = arith.constant 1 : index
    %1 = memref.load %arg1[%c1] : memref<2xf32, #tpu.memory_space<smem>>
    %c0_0 = arith.constant 0 : index
    %c0_1 = arith.constant 0 : index
    %c0_2 = arith.constant 0 : index
    %2 = vector.load %arg2[%c0_0, %c0_1, %c0_2] : memref<1x16x128xf32, #tpu.memory_space<vmem>>, vector<1x16x128xf32>
    %3 = vector.shape_cast %2 : vector<1x16x128xf32> to vector<16x128xf32>
    %c0_3 = arith.constant 0 : index
    %c0_4 = arith.constant 0 : index
    %c0_5 = arith.constant 0 : index
    %4 = vector.load %arg3[%c0_3, %c0_4, %c0_5] : memref<1x24x128xf32, #tpu.memory_space<vmem>>, vector<1x24x128xf32>
    %5 = vector.shape_cast %4 : vector<1x24x128xf32> to vector<24x128xf32>
    %c0_6 = arith.constant 0 : index
    %c0_7 = arith.constant 0 : index
    %c0_8 = arith.constant 0 : index
    %6 = vector.load %arg4[%c0_6, %c0_7, %c0_8] : memref<1x128x16xf32, #tpu.memory_space<vmem>>, vector<1x128x16xf32>
    %7 = vector.shape_cast %6 : vector<1x128x16xf32> to vector<128x16xf32>
    %c0_9 = arith.constant 0 : index
    %c0_10 = arith.constant 0 : index
    %c0_11 = arith.constant 0 : index
    %8 = vector.load %arg5[%c0_9, %c0_10, %c0_11] : memref<1x128x24xf32, #tpu.memory_space<vmem>>, vector<1x128x24xf32>
    %9 = vector.shape_cast %8 : vector<1x128x24xf32> to vector<128x24xf32>
    %c0_12 = arith.constant 0 : index
    %c0_13 = arith.constant 0 : index
    %c0_14 = arith.constant 0 : index
    %10 = vector.load %arg6[%c0_12, %c0_13, %c0_14] : memref<1x16x1xf32, #tpu.memory_space<vmem>>, vector<1x16x1xf32>
    %11 = vector.shape_cast %10 : vector<1x16x1xf32> to vector<16x1xf32>
    %c0_15 = arith.constant 0 : index
    %c0_16 = arith.constant 0 : index
    %c0_17 = arith.constant 0 : index
    %12 = vector.load %arg7[%c0_15, %c0_16, %c0_17] : memref<1x1x24xf32, #tpu.memory_space<vmem>>, vector<1x1x24xf32>
    %13 = vector.shape_cast %12 : vector<1x1x24xf32> to vector<1x24xf32>
    %14 = vector.broadcast %11 : vector<16x1xf32> to vector<16x24xf32>
    %15 = vector.broadcast %13 : vector<1x24xf32> to vector<16x24xf32>
    %16 = arith.mulf %14, %15 : vector<16x24xf32>
    %cst = arith.constant 0.000000e+00 : f32
    %17 = vector.broadcast %cst : f32 to vector<16x24xf32>
    %18 = arith.cmpf one, %16, %17 : vector<16x24xf32>
    %19 = arith.truncf %3 : vector<16x128xf32> to vector<16x128xbf16>
    %20 = arith.truncf %5 : vector<24x128xf32> to vector<24x128xbf16>
    %cst_18 = arith.constant dense<0.000000e+00> : vector<16x24xf32>
    %21 = tpu.matmul %19, %20, %cst_18 {dimension_numbers = #tpu.dot_dimension_numbers<[1], [1], [0], [0], [0, 0, 1, 0], [], []>} : vector<16x128xbf16>, vector<24x128xbf16>, vector<16x24xf32> -> vector<16x24xf32>
    %22 = vector.broadcast %0 : f32 to vector<16x24xf32>
    %23 = arith.mulf %21, %22 : vector<16x24xf32>
    %cst_19 = arith.constant -1.000000e+07 : f32
    %24 = vector.broadcast %cst_19 : f32 to vector<16x24xf32>
    %25 = arith.select %18, %23, %24 : vector<16x24xi1>, vector<16x24xf32>
    %cst_20 = arith.constant 0.000000e+00 : f32
    %26 = vector.broadcast %cst_20 : f32 to vector<16x24xf32>
    %27 = vector.shape_cast %7 : vector<128x16xf32> to vector<128x16x1xf32>
    %28 = vector.shape_cast %9 : vector<128x24xf32> to vector<128x1x24xf32>
    %29 = vector.broadcast %27 : vector<128x16x1xf32> to vector<128x16x24xf32>
    %30 = vector.broadcast %28 : vector<128x1x24xf32> to vector<128x16x24xf32>
    %31 = arith.subf %29, %30 : vector<128x16x24xf32>
    %32 = math.absf %31 : vector<128x16x24xf32>
    %cst_21 = arith.constant dense<0.000000e+00> : vector<16x24xf32>
    %33 = vector.multi_reduction <add>, %32, %cst_21 [0] : vector<128x16x24xf32> to vector<16x24xf32>
    %34 = arith.addf %26, %33 : vector<16x24xf32>
    %cst_22 = arith.constant 0.000000e+00 : f32
    %35 = arith.subf %cst_22, %1 : f32
    %36 = vector.broadcast %35 : f32 to vector<16x24xf32>
    %37 = arith.mulf %34, %36 : vector<16x24xf32>
    %cst_23 = arith.constant -1.000000e+07 : f32
    %38 = vector.broadcast %cst_23 : f32 to vector<16x24xf32>
    %39 = arith.select %18, %37, %38 : vector<16x24xi1>, vector<16x24xf32>
    %40 = arith.negf %39 : vector<16x24xf32>
    %41 = math.exp %40 : vector<16x24xf32>
    %cst_24 = arith.constant 1.000000e+00 : f32
    %42 = vector.broadcast %cst_24 : f32 to vector<16x24xf32>
    %43 = arith.addf %42, %41 : vector<16x24xf32>
    %44 = arith.divf %42, %43 : vector<16x24xf32>
    %45 = arith.mulf %25, %44 : vector<16x24xf32>
    %46 = vector.shape_cast %45 : vector<16x24xf32> to vector<1x16x24xf32>
    %cst_25 = arith.constant dense<0xFF800000> : vector<1xf32>
    %47 = vector.multi_reduction <maximumf>, %46, %cst_25 [1, 2] : vector<1x16x24xf32> to vector<1xf32>
    %48 = vector.shape_cast %47 : vector<1xf32> to vector<1x1x1xf32>
    %49 = vector.extract %48[0, 0, 0] : f32 from vector<1x1x1xf32>
    %50 = vector.broadcast %49 : f32 to vector<16x24xf32>
    %51 = arith.subf %45, %50 : vector<16x24xf32>
    %52 = math.exp %51 : vector<16x24xf32>
    %cst_26 = arith.constant dense<0.000000e+00> : vector<16xf32>
    %53 = vector.multi_reduction <add>, %52, %cst_26 [1] : vector<16x24xf32> to vector<16xf32>
    %54 = vector.shape_cast %53 : vector<16xf32> to vector<16x1xf32>
    %55 = tpu.reciprocal %54 {approx = true} : vector<16x1xf32> -> vector<16x1xf32>
    %cst_27 = arith.constant dense<0.000000e+00> : vector<24xf32>
    %56 = vector.multi_reduction <add>, %52, %cst_27 [0] : vector<16x24xf32> to vector<24xf32>
    %57 = vector.shape_cast %56 : vector<24xf32> to vector<1x24xf32>
    %58 = tpu.reciprocal %57 {approx = true} : vector<1x24xf32> -> vector<1x24xf32>
    %59 = vector.broadcast %55 : vector<16x1xf32> to vector<16x24xf32>
    %60 = arith.mulf %52, %59 : vector<16x24xf32>
    %61 = arith.truncf %60 : vector<16x24xf32> to vector<16x24xbf16>
    %62 = vector.broadcast %58 : vector<1x24xf32> to vector<16x24xf32>
    %63 = arith.mulf %52, %62 : vector<16x24xf32>
    %64 = tpu.transpose %63, [1, 0] : vector<16x24xf32> -> vector<24x16xf32>
    %65 = arith.truncf %64 : vector<24x16xf32> to vector<24x16xbf16>
    %cst_28 = arith.constant dense<0.000000e+00> : vector<16x128xf32>
    %66 = tpu.matmul %61, %20, %cst_28 {dimension_numbers = #tpu.dot_dimension_numbers<[1], [0], [0], [1], [0, 0, 1, 1], [], []>} : vector<16x24xbf16>, vector<24x128xbf16>, vector<16x128xf32> -> vector<16x128xf32>
    %c0_29 = arith.constant 0 : index
    %c0_30 = arith.constant 0 : index
    %c0_31 = arith.constant 0 : index
    %67 = vector.load %arg8[%c0_29, %c0_30, %c0_31] : memref<1x16x128xf32, #tpu.memory_space<vmem>>, vector<1x16x128xf32>
    %68 = vector.shape_cast %67 : vector<1x16x128xf32> to vector<16x128xf32>
    %69 = vector.shape_cast %66 : vector<16x128xf32> to vector<1x16x128xf32>
    tpu.vector_store %arg8[%c0_29, %c0_30, %c0_31], %69 {strides = array<i32>} : memref<1x16x128xf32, #tpu.memory_space<vmem>>, vector<1x16x128xf32>,
    %cst_32 = arith.constant dense<0.000000e+00> : vector<24x128xf32>
    %70 = tpu.matmul %65, %19, %cst_32 {dimension_numbers = #tpu.dot_dimension_numbers<[1], [0], [0], [1], [0, 0, 1, 1], [], []>} : vector<24x16xbf16>, vector<16x128xbf16>, vector<24x128xf32> -> vector<24x128xf32>
    %c0_33 = arith.constant 0 : index
    %c0_34 = arith.constant 0 : index
    %c0_35 = arith.constant 0 : index
    %71 = vector.load %arg9[%c0_33, %c0_34, %c0_35] : memref<1x24x128xf32, #tpu.memory_space<vmem>>, vector<1x24x128xf32>
    %72 = vector.shape_cast %71 : vector<1x24x128xf32> to vector<24x128xf32>
    %73 = vector.shape_cast %70 : vector<24x128xf32> to vector<1x24x128xf32>
    tpu.vector_store %arg9[%c0_33, %c0_34, %c0_35], %73 {strides = array<i32>} : memref<1x24x128xf32, #tpu.memory_space<vmem>>, vector<1x24x128xf32>,
    return
  }
  func.func @transform_0(%arg0: i32) -> i32 {
    %c0_i32 = arith.constant 0 : i32
    %c0_i32_0 = arith.constant 0 : i32
    return %c0_i32 : i32
  }
  func.func @transform_1(%arg0: i32) -> (i32, i32, i32) {
    %c0_i32 = arith.constant 0 : i32
    %c0_i32_0 = arith.constant 0 : i32
    %c0_i32_1 = arith.constant 0 : i32
    return %arg0, %c0_i32, %c0_i32_0 : i32, i32, i32
  }
  func.func @transform_2(%arg0: i32) -> (i32, i32, i32) {
    %c0_i32 = arith.constant 0 : i32
    %c0_i32_0 = arith.constant 0 : i32
    %c0_i32_1 = arith.constant 0 : i32
    return %arg0, %c0_i32, %c0_i32_0 : i32, i32, i32
  }
  func.func @transform_3(%arg0: i32) -> (i32, i32, i32) {
    %c0_i32 = arith.constant 0 : i32
    %c0_i32_0 = arith.constant 0 : i32
    %c0_i32_1 = arith.constant 0 : i32
    return %arg0, %c0_i32, %c0_i32_0 : i32, i32, i32
  }
  func.func @transform_4(%arg0: i32) -> (i32, i32, i32) {
    %c0_i32 = arith.constant 0 : i32
    %c0_i32_0 = arith.constant 0 : i32
    %c0_i32_1 = arith.constant 0 : i32
    return %arg0, %c0_i32, %c0_i32_0 : i32, i32, i32
  }
  func.func @transform_5(%arg0: i32) -> (i32, i32, i32) {
    %c0_i32 = arith.constant 0 : i32
    %c0_i32_0 = arith.constant 0 : i32
    %c0_i32_1 = arith.constant 0 : i32
    return %arg0, %c0_i32, %c0_i32_0 : i32, i32, i32
  }
  func.func @transform_6(%arg0: i32) -> (i32, i32, i32) {
    %c0_i32 = arith.constant 0 : i32
    %c0_i32_0 = arith.constant 0 : i32
    %c0_i32_1 = arith.constant 0 : i32
    return %arg0, %c0_i32, %c0_i32_0 : i32, i32, i32
  }
  func.func @transform_7(%arg0: i32) -> (i32, i32, i32) {
    %c0_i32 = arith.constant 0 : i32
    %c0_i32_0 = arith.constant 0 : i32
    %c0_i32_1 = arith.constant 0 : i32
    return %arg0, %c0_i32, %c0_i32_0 : i32, i32, i32
  }
  func.func @transform_8(%arg0: i32) -> (i32, i32, i32) {
    %c0_i32 = arith.constant 0 : i32
    %c0_i32_0 = arith.constant 0 : i32
    %c0_i32_1 = arith.constant 0 : i32
    return %arg0, %c0_i32, %c0_i32_0 : i32, i32, i32
  }
}

</mosaic_0001>

<llo_original>
// kernel: local_interaction.1
$region0: #{local_interaction.1}
  #allocation0 [shape = 'u32[]', space=smem, size = 0x4, offset = 0x4, fixed_abs, tag = 'smem constant byte address 0x4 - core index']
  #allocation1 [shape = 'u32[72,128]{1,0:T(1,128)}', space=vmem, size = 0x9000, scoped, tag = 'internal scratch']
  %s0 = inlined_call_operand.vmem [shape: f32[2], index: 0, kind: input, shape index: {}]
  %s1 = inlined_call_operand.vmem [shape: f32[2,16,128], index: 1, kind: input, shape index: {}]
  %s2 = inlined_call_operand.vmem [shape: f32[2,24,128], index: 2, kind: input, shape index: {}]
  %s3 = inlined_call_operand.vmem [shape: f32[2,128,16], index: 3, kind: input, shape index: {}]
  %s4 = inlined_call_operand.vmem [shape: f32[2,128,24], index: 4, kind: input, shape index: {}]
  %s5 = inlined_call_operand.vmem [shape: f32[2,16,1], index: 5, kind: input, shape index: {}]
  %s6 = inlined_call_operand.vmem [shape: f32[2,1,24], index: 6, kind: input, shape index: {}]
  %s7 = inlined_call_operand.hbm [shape: f32[2,16,128], index: 7, kind: output, shape index: {0}]
  %s8 = inlined_call_operand.hbm [shape: f32[2,24,128], index: 8, kind: output, shape index: {1}]
  %9 = xla_tuple %s7, %s8
  %s10 = sld [smem:[#allocation0]]
  $region73: #{local_interaction.1} parent=0
    _
  %s12 = ssub.s32 1, %s10
  %s13 = scalar_select 0, %s12, %s10
  $region1: #{local_interaction.1} parent=0
    #allocation2 [shape = 'u8[512]{0}', space=smem, size = 0x200, scoped, tag = 'input window, operand 0, single buffered']
    #allocation3 [shape = 's32[2]{0}', space=sflag, size = 0x8, scoped, tag = 'scoped memory for local_interaction.1']
    #allocation4 [shape = 's32[2]{0}', space=sflag, size = 0x8, scoped, tag = 'scoped memory for local_interaction.1']
    #allocation5 [shape = 'u8[16384]{0}', space=vmem, size = 0x4000, scoped, tag = 'output window, operand 0']
    #allocation6 [shape = 'u8[24576]{0}', space=vmem, size = 0x6000, scoped, tag = 'output window, operand 1']
    #allocation7 [shape = 's32[2]{0}', space=sflag, size = 0x8, scoped, tag = 'scoped memory for local_interaction.1']
    %14 = vsyncpa [#allocation4], 0
    %15 = vsyncpa [#allocation3], 0
    %s16 = scalar_lea.sflag [#allocation3], 1
    %17 = vsyncpa %s16, 0
    %18 = vsyncpa [#allocation7], 0
    %s19 = scalar_lea.sflag [#allocation7], 1
    %20 = vsyncpa %s19, 0
    loop: start=0, step=1, limit=4
    $region2: #{local_interaction.1} parent=1 // loop_pre_header
      _
    $region3: #{local_interaction.1} parent=1 // loop_header
      %s22 = sphi 0, %s26
      %p23 = scmp.ge.s32.totalorder %s22, 4
      %s30 = sphi 0, %s30
      %s32 = sphi 0, %s30
      %s33 = sphi 0, %s32
      %s47 = sphi 0, %s33
      %s53 = sphi 0, %s55
      %s56 = sphi 0, %s53
      %s57 = sphi 0, %s56
      %s73 = sphi 0, %s57
      %s79 = sphi 0, %s81
      %s82 = sphi 0, %s79
      %s83 = sphi 0, %s82
      %s99 = sphi 0, %s83
      %s105 = sphi 0, %s107
      %s108 = sphi 0, %s105
      %s109 = sphi 0, %s108
      %s125 = sphi 0, %s109
      %s131 = sphi 0, %s133
      %s134 = sphi 0, %s131
      %s135 = sphi 0, %s134
      %s151 = sphi 0, %s135
      %s157 = sphi 0, %s159
      %s160 = sphi 0, %s157
      %s161 = sphi 0, %s160
      %s177 = sphi 0, %s161
      %s183 = sphi 0, %s185
      %s186 = sphi 0, %s183
      %s187 = sphi 0, %s186
      %s203 = sphi 0, %s187
      %s209 = sphi 0, %s211
      %s212 = sphi 0, %s209
      %s213 = sphi 0, %s212
      %s229 = sphi 0, %s213
      %s235 = sphi 0, %s237
      %s238 = sphi 0, %s235
      %s239 = sphi 0, %s238
      %s255 = sphi 0, %s239
    $region4: #{local_interaction.1} parent=1 // loop_header_branch
      %25 = sbr.rel (%p23) target = $region8
    $region5: #{local_interaction.1} parent=1 // loop_body
      %s27 = ssub.s32 %s22, 1
      %s28 = ssub.s32 %s22, 2
      %s29 = sadd.s32 %s22, 1
      %s31 = sadd.s32 %s30, 1
      %p34 = scmp.eq.s32.totalorder %s22, 1
      %p35 = scmp.ne.s32.totalorder %s30, %s32
      %p36 = scmp.eq.s32.totalorder %s22, 0
      %p37 = por %p35, %p36
      %p38 = scmp.ne.s32.totalorder %s30, %s32
      %p39 = scmp.eq.s32.totalorder %s27, 1
      %p40 = por %p38, %p39
      %p41 = scmp.ne.s32.totalorder %s32, %s33
      %p42 = scmp.eq.s32.totalorder %s27, 0
      %p43 = por %p41, %p42
      %p44 = scmp.ne.s32.totalorder %s32, %s33
      %p45 = scmp.eq.s32.totalorder %s28, 1
      %p46 = por %p44, %p45
      %p48 = scmp.ne.s32.totalorder %s33, %s47
      %p49 = scmp.eq.s32.totalorder %s28, 0
      %p50 = por %p48, %p49
      %s51 = ssub.s32 %s22, %s29
      %p52 = scmp.eq.s32.totalorder %s51, 0
      %s54 = sadd.s32 %s53, 1
      %s55 = scalar_select %p52, %s53, %s54
      %p58 = pneg %p52
      %p59 = scmp.eq.s32.totalorder %s22, 1
      %p60 = por %p58, %p59
      %p61 = scmp.ne.s32.totalorder %s53, %s56
      %p62 = scmp.eq.s32.totalorder %s22, 0
      %p63 = por %p61, %p62
      %p64 = scmp.ne.s32.totalorder %s53, %s56
      %p65 = scmp.eq.s32.totalorder %s27, 1
      %p66 = por %p64, %p65
      %p67 = scmp.ne.s32.totalorder %s56, %s57
      %p68 = scmp.eq.s32.totalorder %s27, 0
      %p69 = por %p67, %p68
      %p70 = scmp.ne.s32.totalorder %s56, %s57
      %p71 = scmp.eq.s32.totalorder %s28, 1
      %p72 = por %p70, %p71
      %p74 = scmp.ne.s32.totalorder %s57, %s73
      %p75 = scmp.eq.s32.totalorder %s28, 0
      %p76 = por %p74, %p75
      %s77 = ssub.s32 %s22, %s29
      %p78 = scmp.eq.s32.totalorder %s77, 0
      %s80 = sadd.s32 %s79, 1
      %s81 = scalar_select %p78, %s79, %s80
      %p84 = pneg %p78
      %p85 = scmp.eq.s32.totalorder %s22, 1
      %p86 = por %p84, %p85
      %p87 = scmp.ne.s32.totalorder %s79, %s82
      %p88 = scmp.eq.s32.totalorder %s22, 0
      %p89 = por %p87, %p88
      %p90 = scmp.ne.s32.totalorder %s79, %s82
      %p91 = scmp.eq.s32.totalorder %s27, 1
      %p92 = por %p90, %p91
      %p93 = scmp.ne.s32.totalorder %s82, %s83
      %p94 = scmp.eq.s32.totalorder %s27, 0
      %p95 = por %p93, %p94
      %p96 = scmp.ne.s32.totalorder %s82, %s83
      %p97 = scmp.eq.s32.totalorder %s28, 1
      %p98 = por %p96, %p97
      %p100 = scmp.ne.s32.totalorder %s83, %s99
      %p101 = scmp.eq.s32.totalorder %s28, 0
      %p102 = por %p100, %p101
      %s103 = ssub.s32 %s22, %s29
      %p104 = scmp.eq.s32.totalorder %s103, 0
      %s106 = sadd.s32 %s105, 1
      %s107 = scalar_select %p104, %s105, %s106
      %p110 = pneg %p104
      %p111 = scmp.eq.s32.totalorder %s22, 1
      %p112 = por %p110, %p111
      %p113 = scmp.ne.s32.totalorder %s105, %s108
      %p114 = scmp.eq.s32.totalorder %s22, 0
      %p115 = por %p113, %p114
      %p116 = scmp.ne.s32.totalorder %s105, %s108
      %p117 = scmp.eq.s32.totalorder %s27, 1
      %p118 = por %p116, %p117
      %p119 = scmp.ne.s32.totalorder %s108, %s109
      %p120 = scmp.eq.s32.totalorder %s27, 0
      %p121 = por %p119, %p120
      %p122 = scmp.ne.s32.totalorder %s108, %s109
      %p123 = scmp.eq.s32.totalorder %s28, 1
      %p124 = por %p122, %p123
      %p126 = scmp.ne.s32.totalorder %s109, %s125
      %p127 = scmp.eq.s32.totalorder %s28, 0
      %p128 = por %p126, %p127
      %s129 = ssub.s32 %s22, %s29
      %p130 = scmp.eq.s32.totalorder %s129, 0
      %s132 = sadd.s32 %s131, 1
      %s133 = scalar_select %p130, %s131, %s132
      %p136 = pneg %p130
      %p137 = scmp.eq.s32.totalorder %s22, 1
      %p138 = por %p136, %p137
      %p139 = scmp.ne.s32.totalorder %s131, %s134
      %p140 = scmp.eq.s32.totalorder %s22, 0
      %p141 = por %p139, %p140
      %p142 = scmp.ne.s32.totalorder %s131, %s134
      %p143 = scmp.eq.s32.totalorder %s27, 1
      %p144 = por %p142, %p143
      %p145 = scmp.ne.s32.totalorder %s134, %s135
      %p146 = scmp.eq.s32.totalorder %s27, 0
      %p147 = por %p145, %p146
      %p148 = scmp.ne.s32.totalorder %s134, %s135
      %p149 = scmp.eq.s32.totalorder %s28, 1
      %p150 = por %p148, %p149
      %p152 = scmp.ne.s32.totalorder %s135, %s151
      %p153 = scmp.eq.s32.totalorder %s28, 0
      %p154 = por %p152, %p153
      %s155 = ssub.s32 %s22, %s29
      %p156 = scmp.eq.s32.totalorder %s155, 0
      %s158 = sadd.s32 %s157, 1
      %s159 = scalar_select %p156, %s157, %s158
      %p162 = pneg %p156
      %p163 = scmp.eq.s32.totalorder %s22, 1
      %p164 = por %p162, %p163
      %p165 = scmp.ne.s32.totalorder %s157, %s160
      %p166 = scmp.eq.s32.totalorder %s22, 0
      %p167 = por %p165, %p166
      %p168 = scmp.ne.s32.totalorder %s157, %s160
      %p169 = scmp.eq.s32.totalorder %s27, 1
      %p170 = por %p168, %p169
      %p171 = scmp.ne.s32.totalorder %s160, %s161
      %p172 = scmp.eq.s32.totalorder %s27, 0
      %p173 = por %p171, %p172
      %p174 = scmp.ne.s32.totalorder %s160, %s161
      %p175 = scmp.eq.s32.totalorder %s28, 1
      %p176 = por %p174, %p175
      %p178 = scmp.ne.s32.totalorder %s161, %s177
      %p179 = scmp.eq.s32.totalorder %s28, 0
      %p180 = por %p178, %p179
      %s181 = ssub.s32 %s22, %s29
      %p182 = scmp.eq.s32.totalorder %s181, 0
      %s184 = sadd.s32 %s183, 1
      %s185 = scalar_select %p182, %s183, %s184
      %p188 = pneg %p182
      %p189 = scmp.eq.s32.totalorder %s22, 1
      %p190 = por %p188, %p189
      %p191 = scmp.ne.s32.totalorder %s183, %s186
      %p192 = scmp.eq.s32.totalorder %s22, 0
      %p193 = por %p191, %p192
      %p194 = scmp.ne.s32.totalorder %s183, %s186
      %p195 = scmp.eq.s32.totalorder %s27, 1
      %p196 = por %p194, %p195
      %p197 = scmp.ne.s32.totalorder %s186, %s187
      %p198 = scmp.eq.s32.totalorder %s27, 0
      %p199 = por %p197, %p198
      %p200 = scmp.ne.s32.totalorder %s186, %s187
      %p201 = scmp.eq.s32.totalorder %s28, 1
      %p202 = por %p200, %p201
      %p204 = scmp.ne.s32.totalorder %s187, %s203
      %p205 = scmp.eq.s32.totalorder %s28, 0
      %p206 = por %p204, %p205
      %s207 = ssub.s32 %s22, %s29
      %p208 = scmp.eq.s32.totalorder %s207, 0
      %s210 = sadd.s32 %s209, 1
      %s211 = scalar_select %p208, %s209, %s210
      %p214 = pneg %p208
      %p215 = scmp.eq.s32.totalorder %s22, 1
      %p216 = por %p214, %p215
      %p217 = scmp.ne.s32.totalorder %s209, %s212
      %p218 = scmp.eq.s32.totalorder %s22, 0
      %p219 = por %p217, %p218
      %p220 = scmp.ne.s32.totalorder %s209, %s212
      %p221 = scmp.eq.s32.totalorder %s27, 1
      %p222 = por %p220, %p221
      %p223 = scmp.ne.s32.totalorder %s212, %s213
      %p224 = scmp.eq.s32.totalorder %s27, 0
      %p225 = por %p223, %p224
      %p226 = scmp.ne.s32.totalorder %s212, %s213
      %p227 = scmp.eq.s32.totalorder %s28, 1
      %p228 = por %p226, %p227
      %p230 = scmp.ne.s32.totalorder %s213, %s229
      %p231 = scmp.eq.s32.totalorder %s28, 0
      %p232 = por %p230, %p231
      %s233 = ssub.s32 %s22, %s29
      %p234 = scmp.eq.s32.totalorder %s233, 0
      %s236 = sadd.s32 %s235, 1
      %s237 = scalar_select %p234, %s235, %s236
      %p240 = pneg %p234
      %p241 = scmp.eq.s32.totalorder %s22, 1
      %p242 = por %p240, %p241
      %p243 = scmp.ne.s32.totalorder %s235, %s238
      %p244 = scmp.eq.s32.totalorder %s22, 0
      %p245 = por %p243, %p244
      %p246 = scmp.ne.s32.totalorder %s235, %s238
      %p247 = scmp.eq.s32.totalorder %s27, 1
      %p248 = por %p246, %p247
      %p249 = scmp.ne.s32.totalorder %s238, %s239
      %p250 = scmp.eq.s32.totalorder %s27, 0
      %p251 = por %p249, %p250
      %p252 = scmp.ne.s32.totalorder %s238, %s239
      %p253 = scmp.eq.s32.totalorder %s28, 1
      %p254 = por %p252, %p253
      %p256 = scmp.ne.s32.totalorder %s239, %s255
      %p257 = scmp.eq.s32.totalorder %s28, 0
      %p258 = por %p256, %p257
      %p259 = scmp.le.s32.totalorder 1, %s22
      %p260 = scmp.lt.s32.totalorder %s22, 3
      %p261 = pnand %p259, %p260
      %p262 = pneg %p261
      // Predicated region
      $region9: #{local_interaction.1} parent=5 // pred_check
        _
      $region10: #{local_interaction.1} parent=5 // pred_check_branch
        %264 = sbr.rel (%p261) target = $region12
      $region11: #{local_interaction.1} parent=5 // pred_region
        %s265 = ssub.s32 %s22, 1
        // Predicated region
        $region13: #{local_interaction.1} parent=11 // pred_check
          %p266 = pneg %p43
        $region14: #{local_interaction.1} parent=11 // pred_check_branch
          %268 = sbr.rel (%p266) target = $region16
        $region15: #{local_interaction.1} parent=11 // pred_region
          %270 = vsyncadd [#allocation4], 0
          %s272 = sshll.u32 %s0, 4
          %s273 = int_to_ptr.vmem [resolvable:$true] %s272
          %275 = dma.vmem_to_smem %s273, 16, [#allocation2], [#allocation4]
        $region16: #{local_interaction.1} parent=11 // pred_fallthru
          _
      $region12: #{local_interaction.1} parent=5 // pred_fallthru
        _
      %p276 = scmp.lt.s32.totalorder %s22, 2
      // Predicated region
      $region17: #{local_interaction.1} parent=5 // pred_check
        %p277 = pneg %p276
      $region18: #{local_interaction.1} parent=5 // pred_check_branch
        %279 = sbr.rel (%p277) target = $region20
      $region19: #{local_interaction.1} parent=5 // pred_region
        // Predicated region
        $region21: #{local_interaction.1} parent=19 // pred_check
          %p280 = pneg %p63
        $region22: #{local_interaction.1} parent=19 // pred_check_branch
          %282 = sbr.rel (%p280) target = $region24
        $region23: #{local_interaction.1} parent=19 // pred_region
          %p283 = scmp.lt.s32.totalorder %s22, 1
          %s284 = scalar_select %p283, %s22, 1
          %s285 = smul.addr %s284, 2
          %s286 = smul.addr %s285, 8
          %s287 = scalar_lea.vmem %s1, %s286
        $region24: #{local_interaction.1} parent=19 // pred_fallthru
          _
        // Predicated region
        $region25: #{local_interaction.1} parent=19 // pred_check
          %p288 = pneg %p89
        $region26: #{local_interaction.1} parent=19 // pred_check_branch
          %290 = sbr.rel (%p288) target = $region28
        $region27: #{local_interaction.1} parent=19 // pred_region
          %p291 = scmp.lt.s32.totalorder %s22, 1
          %s292 = scalar_select %p291, %s22, 1
          %s293 = smul.addr %s292, 3
          %s294 = smul.addr %s293, 8
          %s295 = scalar_lea.vmem %s2, %s294
        $region28: #{local_interaction.1} parent=19 // pred_fallthru
          _
        // Predicated region
        $region29: #{local_interaction.1} parent=19 // pred_check
          %p296 = pneg %p115
        $region30: #{local_interaction.1} parent=19 // pred_check_branch
          %298 = sbr.rel (%p296) target = $region32
        $region31: #{local_interaction.1} parent=19 // pred_region
          %p299 = scmp.lt.s32.totalorder %s22, 1
          %s300 = scalar_select %p299, %s22, 1
          %s301 = smul.addr %s300, 16
          %s302 = smul.addr %s301, 8
          %s303 = scalar_lea.vmem %s3, %s302
        $region32: #{local_interaction.1} parent=19 // pred_fallthru
          _
        // Predicated region
        $region33: #{local_interaction.1} parent=19 // pred_check
          %p304 = pneg %p141
        $region34: #{local_interaction.1} parent=19 // pred_check_branch
          %306 = sbr.rel (%p304) target = $region36
        $region35: #{local_interaction.1} parent=19 // pred_region
          %p307 = scmp.lt.s32.totalorder %s22, 1
          %s308 = scalar_select %p307, %s22, 1
          %s309 = smul.addr %s308, 16
          %s310 = smul.addr %s309, 8
          %s311 = scalar_lea.vmem %s4, %s310
        $region36: #{local_interaction.1} parent=19 // pred_fallthru
          _
        // Predicated region
        $region37: #{local_interaction.1} parent=19 // pred_check
          %p312 = pneg %p167
        $region38: #{local_interaction.1} parent=19 // pred_check_branch
          %314 = sbr.rel (%p312) target = $region40
        $region39: #{local_interaction.1} parent=19 // pred_region
          %p315 = scmp.lt.s32.totalorder %s22, 1
          %s316 = scalar_select %p315, %s22, 1
          %s317 = smul.addr %s316, 2
          %s318 = smul.addr %s317, 8
          %s319 = scalar_lea.vmem %s5, %s318
        $region40: #{local_interaction.1} parent=19 // pred_fallthru
          _
        // Predicated region
        $region41: #{local_interaction.1} parent=19 // pred_check
          %p320 = pneg %p193
        $region42: #{local_interaction.1} parent=19 // pred_check_branch
          %322 = sbr.rel (%p320) target = $region44
        $region43: #{local_interaction.1} parent=19 // pred_region
          %p323 = scmp.lt.s32.totalorder %s22, 1
          %s324 = scalar_select %p323, %s22, 1
          %s325 = scalar_lea.vmem %s6, %s324
        $region44: #{local_interaction.1} parent=19 // pred_fallthru
          _
      $region20: #{local_interaction.1} parent=5 // pred_fallthru
        _
      %p326 = scmp.le.s32.totalorder 1, %s22
      %p327 = scmp.lt.s32.totalorder %s22, 3
      %p328 = pnand %p326, %p327
      %p329 = pneg %p328
      // Predicated region
      $region45: #{local_interaction.1} parent=5 // pred_check
        _
      $region46: #{local_interaction.1} parent=5 // pred_check_branch
        %331 = sbr.rel (%p328) target = $region48
      $region47: #{local_interaction.1} parent=5 // pred_region
        %s332 = ssub.s32 %s22, 1
        // Predicated region
        $region49: #{local_interaction.1} parent=47 // pred_check
          %p333 = pneg %p43
        $region50: #{local_interaction.1} parent=47 // pred_check_branch
          %335 = sbr.rel (%p333) target = $region52
        $region51: #{local_interaction.1} parent=47 // pred_region
          %337 = dma.done [#allocation4], 16
        $region52: #{local_interaction.1} parent=47 // pred_fallthru
          _
        %338 = sfence
        %p339 = pneg %p43
        %p340 = pneg %p40
        %p341 = scmp.lt.s32.totalorder %s27, 1
        %s342 = scalar_select %p341, %s27, 1
        %s343 = smul.addr %s342, 2
        %s344 = smul.addr %s343, 8
        %s345 = scalar_lea.vmem %s1, %s344
        %p346 = pneg %p69
        %p347 = pneg %p66
        %p348 = scmp.lt.s32.totalorder %s27, 1
        %s349 = scalar_select %p348, %s27, 1
        %s350 = smul.addr %s349, 3
        %s351 = smul.addr %s350, 8
        %s352 = scalar_lea.vmem %s2, %s351
        %p353 = pneg %p95
        %p354 = pneg %p92
        %p355 = scmp.lt.s32.totalorder %s27, 1
        %s356 = scalar_select %p355, %s27, 1
        %s357 = smul.addr %s356, 16
        %s358 = smul.addr %s357, 8
        %s359 = scalar_lea.vmem %s3, %s358
        %p360 = pneg %p121
        %p361 = pneg %p118
        %p362 = scmp.lt.s32.totalorder %s27, 1
        %s363 = scalar_select %p362, %s27, 1
        %s364 = smul.addr %s363, 16
        %s365 = smul.addr %s364, 8
        %s366 = scalar_lea.vmem %s4, %s365
        %p367 = pneg %p147
        %p368 = pneg %p144
        %p369 = scmp.lt.s32.totalorder %s27, 1
        %s370 = scalar_select %p369, %s27, 1
        %s371 = smul.addr %s370, 2
        %s372 = smul.addr %s371, 8
        %s373 = scalar_lea.vmem %s5, %s372
        %p374 = pneg %p173
        %p375 = pneg %p170
        %p376 = scmp.lt.s32.totalorder %s27, 1
        %s377 = scalar_select %p376, %s27, 1
        %s378 = scalar_lea.vmem %s6, %s377
        %p379 = pneg %p199
        %p380 = pneg %p196
        %p381 = pneg %p225
        %p382 = pneg %p222
        %s383 = sand.u32 %s212, 1
        %s384 = scalar_lea.sflag [#allocation3], %s383
        %s385 = sand.u32 %s212, 1
        %s386 = smul.addr %s385, 16
        %s387 = scalar_lea.vmem [#allocation5], %s386
        %p388 = pneg %p251
        %p389 = pneg %p248
        %s390 = sand.u32 %s238, 1
        %s391 = scalar_lea.sflag [#allocation7], %s390
        %s392 = sand.u32 %s238, 1
        %s393 = smul.addr %s392, 24
        %s394 = scalar_lea.vmem [#allocation6], %s393
        %p395 = scmp.lt.s32.totalorder %s27, 1
        %s396 = scalar_select %p395, %s27, 1
        %s397 = smul.addr %s396, 2
        %s398 = smul.addr %s397, 8
        %s399 = scalar_lea.vmem %s1, %s398
        %p400 = scmp.lt.s32.totalorder %s27, 1
        %s401 = scalar_select %p400, %s27, 1
        %s402 = smul.addr %s401, 3
        %s403 = smul.addr %s402, 8
        %s404 = scalar_lea.vmem %s2, %s403
        %p405 = scmp.lt.s32.totalorder %s27, 1
        %s406 = scalar_select %p405, %s27, 1
        %s407 = smul.addr %s406, 16
        %s408 = smul.addr %s407, 8
        %s409 = scalar_lea.vmem %s3, %s408
        %p410 = scmp.lt.s32.totalorder %s27, 1
        %s411 = scalar_select %p410, %s27, 1
        %s412 = smul.addr %s411, 16
        %s413 = smul.addr %s412, 8
        %s414 = scalar_lea.vmem %s4, %s413
        %p415 = scmp.lt.s32.totalorder %s27, 1
        %s416 = scalar_select %p415, %s27, 1
        %s417 = smul.addr %s416, 2
        %s418 = smul.addr %s417, 8
        %s419 = scalar_lea.vmem %s5, %s418
        %p420 = scmp.lt.s32.totalorder %s27, 1
        %s421 = scalar_select %p420, %s27, 1
        %s422 = scalar_lea.vmem %s6, %s421
        %s424 = sld [smem:[#allocation2]]
        %s425 = sld [smem:[#allocation2 + $0x1]]
        %v426 = vld [vmem:[%s399] sm:$0xff]
        %v427 = vld [vmem:[%s399 + $0x8] sm:$0xff]
        %v428 = vld [vmem:[%s404] sm:$0xff]
        %v429 = vld [vmem:[%s404 + $0x8] sm:$0xff]
        %v430 = vld [vmem:[%s404 + $0x10] sm:$0xff]
        %v431 = vld [vmem:[%s409] sm:$0xff]
        %v432 = vld [vmem:[%s409 + $0x8] sm:$0xff]
        %v433 = vld [vmem:[%s409 + $0x10] sm:$0xff]
        %v434 = vld [vmem:[%s409 + $0x18] sm:$0xff]
        %v435 = vld [vmem:[%s409 + $0x20] sm:$0xff]
        %v436 = vld [vmem:[%s409 + $0x28] sm:$0xff]
        %v437 = vld [vmem:[%s409 + $0x30] sm:$0xff]
        %v438 = vld [vmem:[%s409 + $0x38] sm:$0xff]
        %v439 = vld [vmem:[%s409 + $0x40] sm:$0xff]
        %v440 = vld [vmem:[%s409 + $0x48] sm:$0xff]
        %v441 = vld [vmem:[%s409 + $0x50] sm:$0xff]
        %v442 = vld [vmem:[%s409 + $0x58] sm:$0xff]
        %v443 = vld [vmem:[%s409 + $0x60] sm:$0xff]
        %v444 = vld [vmem:[%s409 + $0x68] sm:$0xff]
        %v445 = vld [vmem:[%s409 + $0x70] sm:$0xff]
        %v446 = vld [vmem:[%s409 + $0x78] sm:$0xff]
        %v447 = vld [vmem:[%s414] sm:$0xff]
        %v448 = vld [vmem:[%s414 + $0x8] sm:$0xff]
        %v449 = vld [vmem:[%s414 + $0x10] sm:$0xff]
        %v450 = vld [vmem:[%s414 + $0x18] sm:$0xff]
        %v451 = vld [vmem:[%s414 + $0x20] sm:$0xff]
        %v452 = vld [vmem:[%s414 + $0x28] sm:$0xff]
        %v453 = vld [vmem:[%s414 + $0x30] sm:$0xff]
        %v454 = vld [vmem:[%s414 + $0x38] sm:$0xff]
        %v455 = vld [vmem:[%s414 + $0x40] sm:$0xff]
        %v456 = vld [vmem:[%s414 + $0x48] sm:$0xff]
        %v457 = vld [vmem:[%s414 + $0x50] sm:$0xff]
        %v458 = vld [vmem:[%s414 + $0x58] sm:$0xff]
        %v459 = vld [vmem:[%s414 + $0x60] sm:$0xff]
        %v460 = vld [vmem:[%s414 + $0x68] sm:$0xff]
        %v461 = vld [vmem:[%s414 + $0x70] sm:$0xff]
        %v462 = vld [vmem:[%s414 + $0x78] sm:$0xff]
        %v463 = vld [vmem:[%s419] sm:$0xff]
        %v464 = vld [vmem:[%s419 + $0x8] sm:$0xff]
        %v465 = vld [vmem:[%s422] sm:$0x1]
        %467 = vset.pattern.permute.xlu0 0
        %468 = vperm.xlu0 %467, %v463
        %v469 = vpop.permute.xlu0 %468
        %472 = vset.pattern.permute.xlu0 0
        %473 = vperm.xlu0 %472, %v464
        %v474 = vpop.permute.xlu0 %473
        %v477 = vperm.slane %v465, 0
        %v479 = vmul.f32 %v469, %v477
        %v480 = vmul.f32 %v474, %v477
        %vm481 = vcmp.ne.f32.partialorder %v479, 0.0
        %vm482 = vcmp.ne.f32.partialorder %v480, 0.0
        %v483 = vpack.c.bf16 %v427, %v426
        %v484 = vpack.c.bf16 %v429, %v428
        %v485 = vpack.c.bf16 %v430, %v430
        %486 = vmatpush.bf16.xpose.msra.mxu0 0
        %487 = vmatpush.bf16.xpose.msra.mxu0 0
        %488 = vmatpush.bf16.xpose.msra.mxu0 0
        %489 = vmatpush.bf16.xpose.msra.mxu0 0
        %490 = vmatpush.bf16.xpose.msra.mxu0 0
        %491 = vmatpush.bf16.xpose.msra.mxu0 0
        %492 = vmatpush.bf16.xpose.msra.mxu0 %v485
        %493 = vmatpush.bf16.xpose.msra.mxu0 %v484
        %494 = vmatmul.bf16.gmra.mxu0 %v483
        %v495 = vpop.f32.mrf.mxu0
        %v496 = vadd.f32 0.0, %v495
        %v497 = vpop.f32.mrf.mxu0
        %v498 = vadd.f32 0.0, %v497
        %499 = vdwg.mxu0
        %v500 = vstv %s424
        %v501 = vmul.f32 %v496, %v500
        %v502 = vmul.f32 %v498, %v500
        %v503 = vsel %vm481, %v501, -10000000.0
        %v504 = vsel %vm482, %v502, -10000000.0
        %v505 = vperm.slane %v431, 0
        %v506 = vlaneseq
        %v507 = vshrl.u32 %v506, 7
        %509 = vset.pattern.permute.xlu0 %v507
        %510 = vperm.xlu0 %509, %v505
        %v511 = vpop.permute.xlu0 %510
        %v512 = vlaneseq
        %v513 = vshrl.u32 %v512, 7
        %v514 = vadd.s32 %v513, 8
        %515 = vset.pattern.permute.xlu0 %v514
        %516 = vperm.xlu0 %515, %v505
        %v517 = vpop.permute.xlu0 %516
        %v518 = vperm.slane %v431, 1
        %v519 = vlaneseq
        %v520 = vshrl.u32 %v519, 7
        %522 = vset.pattern.permute.xlu0 %v520
        %523 = vperm.xlu0 %522, %v518
        %v524 = vpop.permute.xlu0 %523
        %v525 = vlaneseq
        %v526 = vshrl.u32 %v525, 7
        %v527 = vadd.s32 %v526, 8
        %528 = vset.pattern.permute.xlu0 %v527
        %529 = vperm.xlu0 %528, %v518
        %v530 = vpop.permute.xlu0 %529
        %v531 = vperm.slane %v431, 2
        %v532 = vlaneseq
        %v533 = vshrl.u32 %v532, 7
        %535 = vset.pattern.permute.xlu0 %v533
        %536 = vperm.xlu0 %535, %v531
        %v537 = vpop.permute.xlu0 %536
        %v538 = vlaneseq
        %v539 = vshrl.u32 %v538, 7
        %v540 = vadd.s32 %v539, 8
        %541 = vset.pattern.permute.xlu0 %v540
        %542 = vperm.xlu0 %541, %v531
        %v543 = vpop.permute.xlu0 %542
        %v544 = vperm.slane %v431, 3
        %v545 = vlaneseq
        %v546 = vshrl.u32 %v545, 7
        %548 = vset.pattern.permute.xlu0 %v546
        %549 = vperm.xlu0 %548, %v544
        %v550 = vpop.permute.xlu0 %549
        %v551 = vlaneseq
        %v552 = vshrl.u32 %v551, 7
        %v553 = vadd.s32 %v552, 8
        %554 = vset.pattern.permute.xlu0 %v553
        %555 = vperm.xlu0 %554, %v544
        %v556 = vpop.permute.xlu0 %555
        %v557 = vperm.slane %v431, 4
        %v558 = vlaneseq
        %v559 = vshrl.u32 %v558, 7
        %561 = vset.pattern.permute.xlu0 %v559
        %562 = vperm.xlu0 %561, %v557
        %v563 = vpop.permute.xlu0 %562
        %v564 = vlaneseq
        %v565 = vshrl.u32 %v564, 7
        %v566 = vadd.s32 %v565, 8
        %567 = vset.pattern.permute.xlu0 %v566
        %568 = vperm.xlu0 %567, %v557
        %v569 = vpop.permute.xlu0 %568
        %v570 = vperm.slane %v431, 5
        %v571 = vlaneseq
        %v572 = vshrl.u32 %v571, 7
        %574 = vset.pattern.permute.xlu0 %v572
        %575 = vperm.xlu0 %574, %v570
        %v576 = vpop.permute.xlu0 %575
        %v577 = vlaneseq
        %v578 = vshrl.u32 %v577, 7
        %v579 = vadd.s32 %v578, 8
        %580 = vset.pattern.permute.xlu0 %v579
        %581 = vperm.xlu0 %580, %v570
        %v582 = vpop.permute.xlu0 %581
        %v583 = vperm.slane %v431, 6
        %v584 = vlaneseq
        %v585 = vshrl.u32 %v584, 7
        %587 = vset.pattern.permute.xlu0 %v585
        %588 = vperm.xlu0 %587, %v583
        %v589 = vpop.permute.xlu0 %588
        %v590 = vlaneseq
        %v591 = vshrl.u32 %v590, 7
        %v592 = vadd.s32 %v591, 8
        %593 = vset.pattern.permute.xlu0 %v592
        %594 = vperm.xlu0 %593, %v583
        %v595 = vpop.permute.xlu0 %594
        %v596 = vperm.slane %v431, 7
        %v597 = vlaneseq
        %v598 = vshrl.u32 %v597, 7
        %600 = vset.pattern.permute.xlu0 %v598
        %601 = vperm.xlu0 %600, %v596
        %v602 = vpop.permute.xlu0 %601
        %v603 = vlaneseq
        %v604 = vshrl.u32 %v603, 7
        %v605 = vadd.s32 %v604, 8
        %606 = vset.pattern.permute.xlu0 %v605
        %607 = vperm.xlu0 %606, %v596
        %v608 = vpop.permute.xlu0 %607
        %v609 = vperm.slane %v432, 0
        %v610 = vlaneseq
        %v611 = vshrl.u32 %v610, 7
        %613 = vset.pattern.permute.xlu0 %v611
        %614 = vperm.xlu0 %613, %v609
        %v615 = vpop.permute.xlu0 %614
        %v616 = vlaneseq
        %v617 = vshrl.u32 %v616, 7
        %v618 = vadd.s32 %v617, 8
        %619 = vset.pattern.permute.xlu0 %v618
        %620 = vperm.xlu0 %619, %v609
        %v621 = vpop.permute.xlu0 %620
        %v622 = vperm.slane %v432, 1
        %v623 = vlaneseq
        %v624 = vshrl.u32 %v623, 7
        %626 = vset.pattern.permute.xlu0 %v624
        %627 = vperm.xlu0 %626, %v622
        %v628 = vpop.permute.xlu0 %627
        %v629 = vlaneseq
        %v630 = vshrl.u32 %v629, 7
        %v631 = vadd.s32 %v630, 8
        %632 = vset.pattern.permute.xlu0 %v631
        %633 = vperm.xlu0 %632, %v622
        %v634 = vpop.permute.xlu0 %633
        %v635 = vperm.slane %v432, 2
        %v636 = vlaneseq
        %v637 = vshrl.u32 %v636, 7
        %639 = vset.pattern.permute.xlu0 %v637
        %640 = vperm.xlu0 %639, %v635
        %v641 = vpop.permute.xlu0 %640
        %v642 = vlaneseq
        %v643 = vshrl.u32 %v642, 7
        %v644 = vadd.s32 %v643, 8
        %645 = vset.pattern.permute.xlu0 %v644
        %646 = vperm.xlu0 %645, %v635
        %v647 = vpop.permute.xlu0 %646
        %v648 = vperm.slane %v432, 3
        %v649 = vlaneseq
        %v650 = vshrl.u32 %v649, 7
        %652 = vset.pattern.permute.xlu0 %v650
        %653 = vperm.xlu0 %652, %v648
        %v654 = vpop.permute.xlu0 %653
        %v655 = vlaneseq
        %v656 = vshrl.u32 %v655, 7
        %v657 = vadd.s32 %v656, 8
        %658 = vset.pattern.permute.xlu0 %v657
        %659 = vperm.xlu0 %658, %v648
        %v660 = vpop.permute.xlu0 %659
        %v661 = vperm.slane %v432, 4
        %v662 = vlaneseq
        %v663 = vshrl.u32 %v662, 7
        %665 = vset.pattern.permute.xlu0 %v663
        %666 = vperm.xlu0 %665, %v661
        %v667 = vpop.permute.xlu0 %666
        %v668 = vlaneseq
        %v669 = vshrl.u32 %v668, 7
        %v670 = vadd.s32 %v669, 8
        %671 = vset.pattern.permute.xlu0 %v670
        %672 = vperm.xlu0 %671, %v661
        %v673 = vpop.permute.xlu0 %672
        %v674 = vperm.slane %v432, 5
        %v675 = vlaneseq
        %v676 = vshrl.u32 %v675, 7
        %678 = vset.pattern.permute.xlu0 %v676
        %679 = vperm.xlu0 %678, %v674
        %v680 = vpop.permute.xlu0 %679
        %v681 = vlaneseq
        %v682 = vshrl.u32 %v681, 7
        %v683 = vadd.s32 %v682, 8
        %684 = vset.pattern.permute.xlu0 %v683
        %685 = vperm.xlu0 %684, %v674
        %v686 = vpop.permute.xlu0 %685
        %v687 = vperm.slane %v432, 6
        %v688 = vlaneseq
        %v689 = vshrl.u32 %v688, 7
        %691 = vset.pattern.permute.xlu0 %v689
        %692 = vperm.xlu0 %691, %v687
        %v693 = vpop.permute.xlu0 %692
        %v694 = vlaneseq
        %v695 = vshrl.u32 %v694, 7
        %v696 = vadd.s32 %v695, 8
        %697 = vset.pattern.permute.xlu0 %v696
        %698 = vperm.xlu0 %697, %v687
        %v699 = vpop.permute.xlu0 %698
        %v700 = vperm.slane %v432, 7
        %v701 = vlaneseq
        %v702 = vshrl.u32 %v701, 7
        %704 = vset.pattern.permute.xlu0 %v702
        %705 = vperm.xlu0 %704, %v700
        %v706 = vpop.permute.xlu0 %705
        %v707 = vlaneseq
        %v708 = vshrl.u32 %v707, 7
        %v709 = vadd.s32 %v708, 8
        %710 = vset.pattern.permute.xlu0 %v709
        %711 = vperm.xlu0 %710, %v700
        %v712 = vpop.permute.xlu0 %711
        %v713 = vperm.slane %v433, 0
        %v714 = vlaneseq
        %v715 = vshrl.u32 %v714, 7
        %717 = vset.pattern.permute.xlu0 %v715
        %718 = vperm.xlu0 %717, %v713
        %v719 = vpop.permute.xlu0 %718
        %v720 = vlaneseq
        %v721 = vshrl.u32 %v720, 7
        %v722 = vadd.s32 %v721, 8
        %723 = vset.pattern.permute.xlu0 %v722
        %724 = vperm.xlu0 %723, %v713
        %v725 = vpop.permute.xlu0 %724
        %v726 = vperm.slane %v433, 1
        %v727 = vlaneseq
        %v728 = vshrl.u32 %v727, 7
        %730 = vset.pattern.permute.xlu0 %v728
        %731 = vperm.xlu0 %730, %v726
        %v732 = vpop.permute.xlu0 %731
        %v733 = vlaneseq
        %v734 = vshrl.u32 %v733, 7
        %v735 = vadd.s32 %v734, 8
        %736 = vset.pattern.permute.xlu0 %v735
        %737 = vperm.xlu0 %736, %v726
        %v738 = vpop.permute.xlu0 %737
        %v739 = vperm.slane %v433, 2
        %v740 = vlaneseq
        %v741 = vshrl.u32 %v740, 7
        %743 = vset.pattern.permute.xlu0 %v741
        %744 = vperm.xlu0 %743, %v739
        %v745 = vpop.permute.xlu0 %744
        %v746 = vlaneseq
        %v747 = vshrl.u32 %v746, 7
        %v748 = vadd.s32 %v747, 8
        %749 = vset.pattern.permute.xlu0 %v748
        %750 = vperm.xlu0 %749, %v739
        %v751 = vpop.permute.xlu0 %750
        %v752 = vperm.slane %v433, 3
        %v753 = vlaneseq
        %v754 = vshrl.u32 %v753, 7
        %756 = vset.pattern.permute.xlu0 %v754
        %757 = vperm.xlu0 %756, %v752
        %v758 = vpop.permute.xlu0 %757
        %v759 = vlaneseq
        %v760 = vshrl.u32 %v759, 7
        %v761 = vadd.s32 %v760, 8
        %762 = vset.pattern.permute.xlu0 %v761
        %763 = vperm.xlu0 %762, %v752
        %v764 = vpop.permute.xlu0 %763
        %v765 = vperm.slane %v433, 4
        %v766 = vlaneseq
        %v767 = vshrl.u32 %v766, 7
        %769 = vset.pattern.permute.xlu0 %v767
        %770 = vperm.xlu0 %769, %v765
        %v771 = vpop.permute.xlu0 %770
        %v772 = vlaneseq
        %v773 = vshrl.u32 %v772, 7
        %v774 = vadd.s32 %v773, 8
        %775 = vset.pattern.permute.xlu0 %v774
        %776 = vperm.xlu0 %775, %v765
        %v777 = vpop.permute.xlu0 %776
        %v778 = vperm.slane %v433, 5
        %v779 = vlaneseq
        %v780 = vshrl.u32 %v779, 7
        %782 = vset.pattern.permute.xlu0 %v780
        %783 = vperm.xlu0 %782, %v778
        %v784 = vpop.permute.xlu0 %783
        %v785 = vlaneseq
        %v786 = vshrl.u32 %v785, 7
        %v787 = vadd.s32 %v786, 8
        %788 = vset.pattern.permute.xlu0 %v787
        %789 = vperm.xlu0 %788, %v778
        %v790 = vpop.permute.xlu0 %789
        %v791 = vperm.slane %v433, 6
        %v792 = vlaneseq
        %v793 = vshrl.u32 %v792, 7
        %795 = vset.pattern.permute.xlu0 %v793
        %796 = vperm.xlu0 %795, %v791
        %v797 = vpop.permute.xlu0 %796
        %v798 = vlaneseq
        %v799 = vshrl.u32 %v798, 7
        %v800 = vadd.s32 %v799, 8
        %801 = vset.pattern.permute.xlu0 %v800
        %802 = vperm.xlu0 %801, %v791
        %v803 = vpop.permute.xlu0 %802
        %v804 = vperm.slane %v433, 7
        %v805 = vlaneseq
        %v806 = vshrl.u32 %v805, 7
        %808 = vset.pattern.permute.xlu0 %v806
        %809 = vperm.xlu0 %808, %v804
        %v810 = vpop.permute.xlu0 %809
        %v811 = vlaneseq
        %v812 = vshrl.u32 %v811, 7
        %v813 = vadd.s32 %v812, 8
        %814 = vset.pattern.permute.xlu0 %v813
        %815 = vperm.xlu0 %814, %v804
        %v816 = vpop.permute.xlu0 %815
        %v817 = vperm.slane %v434, 0
        %v818 = vlaneseq
        %v819 = vshrl.u32 %v818, 7
        %821 = vset.pattern.permute.xlu0 %v819
        %822 = vperm.xlu0 %821, %v817
        %v823 = vpop.permute.xlu0 %822
        %v824 = vlaneseq
        %v825 = vshrl.u32 %v824, 7
        %v826 = vadd.s32 %v825, 8
        %827 = vset.pattern.permute.xlu0 %v826
        %828 = vperm.xlu0 %827, %v817
        %v829 = vpop.permute.xlu0 %828
        %v830 = vperm.slane %v434, 1
        %v831 = vlaneseq
        %v832 = vshrl.u32 %v831, 7
        %834 = vset.pattern.permute.xlu0 %v832
        %835 = vperm.xlu0 %834, %v830
        %v836 = vpop.permute.xlu0 %835
        %v837 = vlaneseq
        %v838 = vshrl.u32 %v837, 7
        %v839 = vadd.s32 %v838, 8
        %840 = vset.pattern.permute.xlu0 %v839
        %841 = vperm.xlu0 %840, %v830
        %v842 = vpop.permute.xlu0 %841
        %v843 = vperm.slane %v434, 2
        %v844 = vlaneseq
        %v845 = vshrl.u32 %v844, 7
        %847 = vset.pattern.permute.xlu0 %v845
        %848 = vperm.xlu0 %847, %v843
        %v849 = vpop.permute.xlu0 %848
        %v850 = vlaneseq
        %v851 = vshrl.u32 %v850, 7
        %v852 = vadd.s32 %v851, 8
        %853 = vset.pattern.permute.xlu0 %v852
        %854 = vperm.xlu0 %853, %v843
        %v855 = vpop.permute.xlu0 %854
        %v856 = vperm.slane %v434, 3
        %v857 = vlaneseq
        %v858 = vshrl.u32 %v857, 7
        %860 = vset.pattern.permute.xlu0 %v858
        %861 = vperm.xlu0 %860, %v856
        %v862 = vpop.permute.xlu0 %861
        %v863 = vlaneseq
        %v864 = vshrl.u32 %v863, 7
        %v865 = vadd.s32 %v864, 8
        %866 = vset.pattern.permute.xlu0 %v865
        %867 = vperm.xlu0 %866, %v856
        %v868 = vpop.permute.xlu0 %867
        %v869 = vperm.slane %v434, 4
        %v870 = vlaneseq
        %v871 = vshrl.u32 %v870, 7
        %873 = vset.pattern.permute.xlu0 %v871
        %874 = vperm.xlu0 %873, %v869
        %v875 = vpop.permute.xlu0 %874
        %v876 = vlaneseq
        %v877 = vshrl.u32 %v876, 7
        %v878 = vadd.s32 %v877, 8
        %879 = vset.pattern.permute.xlu0 %v878
        %880 = vperm.xlu0 %879, %v869
        %v881 = vpop.permute.xlu0 %880
        %v882 = vperm.slane %v434, 5
        %v883 = vlaneseq
        %v884 = vshrl.u32 %v883, 7
        %886 = vset.pattern.permute.xlu0 %v884
        %887 = vperm.xlu0 %886, %v882
        %v888 = vpop.permute.xlu0 %887
        %v889 = vlaneseq
        %v890 = vshrl.u32 %v889, 7
        %v891 = vadd.s32 %v890, 8
        %892 = vset.pattern.permute.xlu0 %v891
        %893 = vperm.xlu0 %892, %v882
        %v894 = vpop.permute.xlu0 %893
        %v895 = vperm.slane %v434, 6
        %v896 = vlaneseq
        %v897 = vshrl.u32 %v896, 7
        %899 = vset.pattern.permute.xlu0 %v897
        %900 = vperm.xlu0 %899, %v895
        %v901 = vpop.permute.xlu0 %900
        %v902 = vlaneseq
        %v903 = vshrl.u32 %v902, 7
        %v904 = vadd.s32 %v903, 8
        %905 = vset.pattern.permute.xlu0 %v904
        %906 = vperm.xlu0 %905, %v895
        %v907 = vpop.permute.xlu0 %906
        %v908 = vperm.slane %v434, 7
        %v909 = vlaneseq
        %v910 = vshrl.u32 %v909, 7
        %912 = vset.pattern.permute.xlu0 %v910
        %913 = vperm.xlu0 %912, %v908
        %v914 = vpop.permute.xlu0 %913
        %v915 = vlaneseq
        %v916 = vshrl.u32 %v915, 7
        %v917 = vadd.s32 %v916, 8
        %918 = vset.pattern.permute.xlu0 %v917
        %919 = vperm.xlu0 %918, %v908
        %v920 = vpop.permute.xlu0 %919
        %v921 = vperm.slane %v435, 0
        %v922 = vlaneseq
        %v923 = vshrl.u32 %v922, 7
        %925 = vset.pattern.permute.xlu0 %v923
        %926 = vperm.xlu0 %925, %v921
        %v927 = vpop.permute.xlu0 %926
        %v928 = vlaneseq
        %v929 = vshrl.u32 %v928, 7
        %v930 = vadd.s32 %v929, 8
        %931 = vset.pattern.permute.xlu0 %v930
        %932 = vperm.xlu0 %931, %v921
        %v933 = vpop.permute.xlu0 %932
        %v934 = vperm.slane %v435, 1
        %v935 = vlaneseq
        %v936 = vshrl.u32 %v935, 7
        %938 = vset.pattern.permute.xlu0 %v936
        %939 = vperm.xlu0 %938, %v934
        %v940 = vpop.permute.xlu0 %939
        %v941 = vlaneseq
        %v942 = vshrl.u32 %v941, 7
        %v943 = vadd.s32 %v942, 8
        %944 = vset.pattern.permute.xlu0 %v943
        %945 = vperm.xlu0 %944, %v934
        %v946 = vpop.permute.xlu0 %945
        %v947 = vperm.slane %v435, 2
        %v948 = vlaneseq
        %v949 = vshrl.u32 %v948, 7
        %951 = vset.pattern.permute.xlu0 %v949
        %952 = vperm.xlu0 %951, %v947
        %v953 = vpop.permute.xlu0 %952
        %v954 = vlaneseq
        %v955 = vshrl.u32 %v954, 7
        %v956 = vadd.s32 %v955, 8
        %957 = vset.pattern.permute.xlu0 %v956
        %958 = vperm.xlu0 %957, %v947
        %v959 = vpop.permute.xlu0 %958
        %v960 = vperm.slane %v435, 3
        %v961 = vlaneseq
        %v962 = vshrl.u32 %v961, 7
        %964 = vset.pattern.permute.xlu0 %v962
        %965 = vperm.xlu0 %964, %v960
        %v966 = vpop.permute.xlu0 %965
        %v967 = vlaneseq
        %v968 = vshrl.u32 %v967, 7
        %v969 = vadd.s32 %v968, 8
        %970 = vset.pattern.permute.xlu0 %v969
        %971 = vperm.xlu0 %970, %v960
        %v972 = vpop.permute.xlu0 %971
        %v973 = vperm.slane %v435, 4
        %v974 = vlaneseq
        %v975 = vshrl.u32 %v974, 7
        %977 = vset.pattern.permute.xlu0 %v975
        %978 = vperm.xlu0 %977, %v973
        %v979 = vpop.permute.xlu0 %978
        %v980 = vlaneseq
        %v981 = vshrl.u32 %v980, 7
        %v982 = vadd.s32 %v981, 8
        %983 = vset.pattern.permute.xlu0 %v982
        %984 = vperm.xlu0 %983, %v973
        %v985 = vpop.permute.xlu0 %984
        %v986 = vperm.slane %v435, 5
        %v987 = vlaneseq
        %v988 = vshrl.u32 %v987, 7
        %990 = vset.pattern.permute.xlu0 %v988
        %991 = vperm.xlu0 %990, %v986
        %v992 = vpop.permute.xlu0 %991
        %v993 = vlaneseq
        %v994 = vshrl.u32 %v993, 7
        %v995 = vadd.s32 %v994, 8
        %996 = vset.pattern.permute.xlu0 %v995
        %997 = vperm.xlu0 %996, %v986
        %v998 = vpop.permute.xlu0 %997
        %v999 = vperm.slane %v435, 6
        %v1000 = vlaneseq
        %v1001 = vshrl.u32 %v1000, 7
        %1003 = vset.pattern.permute.xlu0 %v1001
        %1004 = vperm.xlu0 %1003, %v999
        %v1005 = vpop.permute.xlu0 %1004
        %v1006 = vlaneseq
        %v1007 = vshrl.u32 %v1006, 7
        %v1008 = vadd.s32 %v1007, 8
        %1009 = vset.pattern.permute.xlu0 %v1008
        %1010 = vperm.xlu0 %1009, %v999
        %v1011 = vpop.permute.xlu0 %1010
        %v1012 = vperm.slane %v435, 7
        %v1013 = vlaneseq
        %v1014 = vshrl.u32 %v1013, 7
        %1016 = vset.pattern.permute.xlu0 %v1014
        %1017 = vperm.xlu0 %1016, %v1012
        %v1018 = vpop.permute.xlu0 %1017
        %v1019 = vlaneseq
        %v1020 = vshrl.u32 %v1019, 7
        %v1021 = vadd.s32 %v1020, 8
        %1022 = vset.pattern.permute.xlu0 %v1021
        %1023 = vperm.xlu0 %1022, %v1012
        %v1024 = vpop.permute.xlu0 %1023
        %v1025 = vperm.slane %v436, 0
        %v1026 = vlaneseq
        %v1027 = vshrl.u32 %v1026, 7
        %1029 = vset.pattern.permute.xlu0 %v1027
        %1030 = vperm.xlu0 %1029, %v1025
        %v1031 = vpop.permute.xlu0 %1030
        %v1032 = vlaneseq
        %v1033 = vshrl.u32 %v1032, 7
        %v1034 = vadd.s32 %v1033, 8
        %1035 = vset.pattern.permute.xlu0 %v1034
        %1036 = vperm.xlu0 %1035, %v1025
        %v1037 = vpop.permute.xlu0 %1036
        %v1038 = vperm.slane %v436, 1
        %v1039 = vlaneseq
        %v1040 = vshrl.u32 %v1039, 7
        %1042 = vset.pattern.permute.xlu0 %v1040
        %1043 = vperm.xlu0 %1042, %v1038
        %v1044 = vpop.permute.xlu0 %1043
        %v1045 = vlaneseq
        %v1046 = vshrl.u32 %v1045, 7
        %v1047 = vadd.s32 %v1046, 8
        %1048 = vset.pattern.permute.xlu0 %v1047
        %1049 = vperm.xlu0 %1048, %v1038
        %v1050 = vpop.permute.xlu0 %1049
        %v1051 = vperm.slane %v436, 2
        %v1052 = vlaneseq
        %v1053 = vshrl.u32 %v1052, 7
        %1055 = vset.pattern.permute.xlu0 %v1053
        %1056 = vperm.xlu0 %1055, %v1051
        %v1057 = vpop.permute.xlu0 %1056
        %v1058 = vlaneseq
        %v1059 = vshrl.u32 %v1058, 7
        %v1060 = vadd.s32 %v1059, 8
        %1061 = vset.pattern.permute.xlu0 %v1060
        %1062 = vperm.xlu0 %1061, %v1051
        %v1063 = vpop.permute.xlu0 %1062
        %v1064 = vperm.slane %v436, 3
        %v1065 = vlaneseq
        %v1066 = vshrl.u32 %v1065, 7
        %1068 = vset.pattern.permute.xlu0 %v1066
        %1069 = vperm.xlu0 %1068, %v1064
        %v1070 = vpop.permute.xlu0 %1069
        %v1071 = vlaneseq
        %v1072 = vshrl.u32 %v1071, 7
        %v1073 = vadd.s32 %v1072, 8
        %1074 = vset.pattern.permute.xlu0 %v1073
        %1075 = vperm.xlu0 %1074, %v1064
        %v1076 = vpop.permute.xlu0 %1075
        %v1077 = vperm.slane %v436, 4
        %v1078 = vlaneseq
        %v1079 = vshrl.u32 %v1078, 7
        %1081 = vset.pattern.permute.xlu0 %v1079
        %1082 = vperm.xlu0 %1081, %v1077
        %v1083 = vpop.permute.xlu0 %1082
        %v1084 = vlaneseq
        %v1085 = vshrl.u32 %v1084, 7
        %v1086 = vadd.s32 %v1085, 8
        %1087 = vset.pattern.permute.xlu0 %v1086
        %1088 = vperm.xlu0 %1087, %v1077
        %v1089 = vpop.permute.xlu0 %1088
        %v1090 = vperm.slane %v436, 5
        %v1091 = vlaneseq
        %v1092 = vshrl.u32 %v1091, 7
        %1094 = vset.pattern.permute.xlu0 %v1092
        %1095 = vperm.xlu0 %1094, %v1090
        %v1096 = vpop.permute.xlu0 %1095
        %v1097 = vlaneseq
        %v1098 = vshrl.u32 %v1097, 7
        %v1099 = vadd.s32 %v1098, 8
        %1100 = vset.pattern.permute.xlu0 %v1099
        %1101 = vperm.xlu0 %1100, %v1090
        %v1102 = vpop.permute.xlu0 %1101
        %v1103 = vperm.slane %v436, 6
        %v1104 = vlaneseq
        %v1105 = vshrl.u32 %v1104, 7
        %1107 = vset.pattern.permute.xlu0 %v1105
        %1108 = vperm.xlu0 %1107, %v1103
        %v1109 = vpop.permute.xlu0 %1108
        %v1110 = vlaneseq
        %v1111 = vshrl.u32 %v1110, 7
        %v1112 = vadd.s32 %v1111, 8
        %1113 = vset.pattern.permute.xlu0 %v1112
        %1114 = vperm.xlu0 %1113, %v1103
        %v1115 = vpop.permute.xlu0 %1114
        %v1116 = vperm.slane %v436, 7
        %v1117 = vlaneseq
        %v1118 = vshrl.u32 %v1117, 7
        %1120 = vset.pattern.permute.xlu0 %v1118
        %1121 = vperm.xlu0 %1120, %v1116
        %v1122 = vpop.permute.xlu0 %1121
        %v1123 = vlaneseq
        %v1124 = vshrl.u32 %v1123, 7
        %v1125 = vadd.s32 %v1124, 8
        %1126 = vset.pattern.permute.xlu0 %v1125
        %1127 = vperm.xlu0 %1126, %v1116
        %v1128 = vpop.permute.xlu0 %1127
        %v1129 = vperm.slane %v437, 0
        %v1130 = vlaneseq
        %v1131 = vshrl.u32 %v1130, 7
        %1133 = vset.pattern.permute.xlu0 %v1131
        %1134 = vperm.xlu0 %1133, %v1129
        %v1135 = vpop.permute.xlu0 %1134
        %v1136 = vlaneseq
        %v1137 = vshrl.u32 %v1136, 7
        %v1138 = vadd.s32 %v1137, 8
        %1139 = vset.pattern.permute.xlu0 %v1138
        %1140 = vperm.xlu0 %1139, %v1129
        %v1141 = vpop.permute.xlu0 %1140
        %v1142 = vperm.slane %v437, 1
        %v1143 = vlaneseq
        %v1144 = vshrl.u32 %v1143, 7
        %1146 = vset.pattern.permute.xlu0 %v1144
        %1147 = vperm.xlu0 %1146, %v1142
        %v1148 = vpop.permute.xlu0 %1147
        %v1149 = vlaneseq
        %v1150 = vshrl.u32 %v1149, 7
        %v1151 = vadd.s32 %v1150, 8
        %1152 = vset.pattern.permute.xlu0 %v1151
        %1153 = vperm.xlu0 %1152, %v1142
        %v1154 = vpop.permute.xlu0 %1153
        %v1155 = vperm.slane %v437, 2
        %v1156 = vlaneseq
        %v1157 = vshrl.u32 %v1156, 7
        %1159 = vset.pattern.permute.xlu0 %v1157
        %1160 = vperm.xlu0 %1159, %v1155
        %v1161 = vpop.permute.xlu0 %1160
        %v1162 = vlaneseq
        %v1163 = vshrl.u32 %v1162, 7
        %v1164 = vadd.s32 %v1163, 8
        %1165 = vset.pattern.permute.xlu0 %v1164
        %1166 = vperm.xlu0 %1165, %v1155
        %v1167 = vpop.permute.xlu0 %1166
        %v1168 = vperm.slane %v437, 3
        %v1169 = vlaneseq
        %v1170 = vshrl.u32 %v1169, 7
        %1172 = vset.pattern.permute.xlu0 %v1170
        %1173 = vperm.xlu0 %1172, %v1168
        %v1174 = vpop.permute.xlu0 %1173
        %v1175 = vlaneseq
        %v1176 = vshrl.u32 %v1175, 7
        %v1177 = vadd.s32 %v1176, 8
        %1178 = vset.pattern.permute.xlu0 %v1177
        %1179 = vperm.xlu0 %1178, %v1168
        %v1180 = vpop.permute.xlu0 %1179
        %v1181 = vperm.slane %v437, 4
        %v1182 = vlaneseq
        %v1183 = vshrl.u32 %v1182, 7
        %1185 = vset.pattern.permute.xlu0 %v1183
        %1186 = vperm.xlu0 %1185, %v1181
        %v1187 = vpop.permute.xlu0 %1186
        %v1188 = vlaneseq
        %v1189 = vshrl.u32 %v1188, 7
        %v1190 = vadd.s32 %v1189, 8
        %1191 = vset.pattern.permute.xlu0 %v1190
        %1192 = vperm.xlu0 %1191, %v1181
        %v1193 = vpop.permute.xlu0 %1192
        %v1194 = vperm.slane %v437, 5
        %v1195 = vlaneseq
        %v1196 = vshrl.u32 %v1195, 7
        %1198 = vset.pattern.permute.xlu0 %v1196
        %1199 = vperm.xlu0 %1198, %v1194
        %v1200 = vpop.permute.xlu0 %1199
        %v1201 = vlaneseq
        %v1202 = vshrl.u32 %v1201, 7
        %v1203 = vadd.s32 %v1202, 8
        %1204 = vset.pattern.permute.xlu0 %v1203
        %1205 = vperm.xlu0 %1204, %v1194
        %v1206 = vpop.permute.xlu0 %1205
        %v1207 = vperm.slane %v437, 6
        %v1208 = vlaneseq
        %v1209 = vshrl.u32 %v1208, 7
        %1211 = vset.pattern.permute.xlu0 %v1209
        %1212 = vperm.xlu0 %1211, %v1207
        %v1213 = vpop.permute.xlu0 %1212
        %v1214 = vlaneseq
        %v1215 = vshrl.u32 %v1214, 7
        %v1216 = vadd.s32 %v1215, 8
        %1217 = vset.pattern.permute.xlu0 %v1216
        %1218 = vperm.xlu0 %1217, %v1207
        %v1219 = vpop.permute.xlu0 %1218
        %v1220 = vperm.slane %v437, 7
        %v1221 = vlaneseq
        %v1222 = vshrl.u32 %v1221, 7
        %1224 = vset.pattern.permute.xlu0 %v1222
        %1225 = vperm.xlu0 %1224, %v1220
        %v1226 = vpop.permute.xlu0 %1225
        %v1227 = vlaneseq
        %v1228 = vshrl.u32 %v1227, 7
        %v1229 = vadd.s32 %v1228, 8
        %1230 = vset.pattern.permute.xlu0 %v1229
        %1231 = vperm.xlu0 %1230, %v1220
        %v1232 = vpop.permute.xlu0 %1231
        %v1233 = vperm.slane %v438, 0
        %v1234 = vlaneseq
        %v1235 = vshrl.u32 %v1234, 7
        %1237 = vset.pattern.permute.xlu0 %v1235
        %1238 = vperm.xlu0 %1237, %v1233
        %v1239 = vpop.permute.xlu0 %1238
        %v1240 = vlaneseq
        %v1241 = vshrl.u32 %v1240, 7
        %v1242 = vadd.s32 %v1241, 8
        %1243 = vset.pattern.permute.xlu0 %v1242
        %1244 = vperm.xlu0 %1243, %v1233
        %v1245 = vpop.permute.xlu0 %1244
        %v1246 = vperm.slane %v438, 1
        %v1247 = vlaneseq
        %v1248 = vshrl.u32 %v1247, 7
        %1250 = vset.pattern.permute.xlu0 %v1248
        %1251 = vperm.xlu0 %1250, %v1246
        %v1252 = vpop.permute.xlu0 %1251
        %v1253 = vlaneseq
        %v1254 = vshrl.u32 %v1253, 7
        %v1255 = vadd.s32 %v1254, 8
        %1256 = vset.pattern.permute.xlu0 %v1255
        %1257 = vperm.xlu0 %1256, %v1246
        %v1258 = vpop.permute.xlu0 %1257
        %v1259 = vperm.slane %v438, 2
        %v1260 = vlaneseq
        %v1261 = vshrl.u32 %v1260, 7
        %1263 = vset.pattern.permute.xlu0 %v1261
        %1264 = vperm.xlu0 %1263, %v1259
        %v1265 = vpop.permute.xlu0 %1264
        %v1266 = vlaneseq
        %v1267 = vshrl.u32 %v1266, 7
        %v1268 = vadd.s32 %v1267, 8
        %1269 = vset.pattern.permute.xlu0 %v1268
        %1270 = vperm.xlu0 %1269, %v1259
        %v1271 = vpop.permute.xlu0 %1270
        %v1272 = vperm.slane %v438, 3
        %v1273 = vlaneseq
        %v1274 = vshrl.u32 %v1273, 7
        %1276 = vset.pattern.permute.xlu0 %v1274
        %1277 = vperm.xlu0 %1276, %v1272
        %v1278 = vpop.permute.xlu0 %1277
        %v1279 = vlaneseq
        %v1280 = vshrl.u32 %v1279, 7
        %v1281 = vadd.s32 %v1280, 8
        %1282 = vset.pattern.permute.xlu0 %v1281
        %1283 = vperm.xlu0 %1282, %v1272
        %v1284 = vpop.permute.xlu0 %1283
        %v1285 = vperm.slane %v438, 4
        %v1286 = vlaneseq
        %v1287 = vshrl.u32 %v1286, 7
        %1289 = vset.pattern.permute.xlu0 %v1287
        %1290 = vperm.xlu0 %1289, %v1285
        %v1291 = vpop.permute.xlu0 %1290
        %v1292 = vlaneseq
        %v1293 = vshrl.u32 %v1292, 7
        %v1294 = vadd.s32 %v1293, 8
        %1295 = vset.pattern.permute.xlu0 %v1294
        %1296 = vperm.xlu0 %1295, %v1285
        %v1297 = vpop.permute.xlu0 %1296
        %v1298 = vperm.slane %v438, 5
        %v1299 = vlaneseq
        %v1300 = vshrl.u32 %v1299, 7
        %1302 = vset.pattern.permute.xlu0 %v1300
        %1303 = vperm.xlu0 %1302, %v1298
        %v1304 = vpop.permute.xlu0 %1303
        %v1305 = vlaneseq
        %v1306 = vshrl.u32 %v1305, 7
        %v1307 = vadd.s32 %v1306, 8
        %1308 = vset.pattern.permute.xlu0 %v1307
        %1309 = vperm.xlu0 %1308, %v1298
        %v1310 = vpop.permute.xlu0 %1309
        %v1311 = vperm.slane %v438, 6
        %v1312 = vlaneseq
        %v1313 = vshrl.u32 %v1312, 7
        %1315 = vset.pattern.permute.xlu0 %v1313
        %1316 = vperm.xlu0 %1315, %v1311
        %v1317 = vpop.permute.xlu0 %1316
        %v1318 = vlaneseq
        %v1319 = vshrl.u32 %v1318, 7
        %v1320 = vadd.s32 %v1319, 8
        %1321 = vset.pattern.permute.xlu0 %v1320
        %1322 = vperm.xlu0 %1321, %v1311
        %v1323 = vpop.permute.xlu0 %1322
        %v1324 = vperm.slane %v438, 7
        %v1325 = vlaneseq
        %v1326 = vshrl.u32 %v1325, 7
        %1328 = vset.pattern.permute.xlu0 %v1326
        %1329 = vperm.xlu0 %1328, %v1324
        %v1330 = vpop.permute.xlu0 %1329
        %v1331 = vlaneseq
        %v1332 = vshrl.u32 %v1331, 7
        %v1333 = vadd.s32 %v1332, 8
        %1334 = vset.pattern.permute.xlu0 %v1333
        %1335 = vperm.xlu0 %1334, %v1324
        %v1336 = vpop.permute.xlu0 %1335
        %v1337 = vperm.slane %v439, 0
        %v1338 = vlaneseq
        %v1339 = vshrl.u32 %v1338, 7
        %1341 = vset.pattern.permute.xlu0 %v1339
        %1342 = vperm.xlu0 %1341, %v1337
        %v1343 = vpop.permute.xlu0 %1342
        %v1344 = vlaneseq
        %v1345 = vshrl.u32 %v1344, 7
        %v1346 = vadd.s32 %v1345, 8
        %1347 = vset.pattern.permute.xlu0 %v1346
        %1348 = vperm.xlu0 %1347, %v1337
        %v1349 = vpop.permute.xlu0 %1348
        %v1350 = vperm.slane %v439, 1
        %v1351 = vlaneseq
        %v1352 = vshrl.u32 %v1351, 7
        %1354 = vset.pattern.permute.xlu0 %v1352
        %1355 = vperm.xlu0 %1354, %v1350
        %v1356 = vpop.permute.xlu0 %1355
        %v1357 = vlaneseq
        %v1358 = vshrl.u32 %v1357, 7
        %v1359 = vadd.s32 %v1358, 8
        %1360 = vset.pattern.permute.xlu0 %v1359
        %1361 = vperm.xlu0 %1360, %v1350
        %v1362 = vpop.permute.xlu0 %1361
        %v1363 = vperm.slane %v439, 2
        %v1364 = vlaneseq
        %v1365 = vshrl.u32 %v1364, 7
        %1367 = vset.pattern.permute.xlu0 %v1365
        %1368 = vperm.xlu0 %1367, %v1363
        %v1369 = vpop.permute.xlu0 %1368
        %v1370 = vlaneseq
        %v1371 = vshrl.u32 %v1370, 7
        %v1372 = vadd.s32 %v1371, 8
        %1373 = vset.pattern.permute.xlu0 %v1372
        %1374 = vperm.xlu0 %1373, %v1363
        %v1375 = vpop.permute.xlu0 %1374
        %v1376 = vperm.slane %v439, 3
        %v1377 = vlaneseq
        %v1378 = vshrl.u32 %v1377, 7
        %1380 = vset.pattern.permute.xlu0 %v1378
        %1381 = vperm.xlu0 %1380, %v1376
        %v1382 = vpop.permute.xlu0 %1381
        %v1383 = vlaneseq
        %v1384 = vshrl.u32 %v1383, 7
        %v1385 = vadd.s32 %v1384, 8
        %1386 = vset.pattern.permute.xlu0 %v1385
        %1387 = vperm.xlu0 %1386, %v1376
        %v1388 = vpop.permute.xlu0 %1387
        %v1389 = vperm.slane %v439, 4
        %v1390 = vlaneseq
        %v1391 = vshrl.u32 %v1390, 7
        %1393 = vset.pattern.permute.xlu0 %v1391
        %1394 = vperm.xlu0 %1393, %v1389
        %v1395 = vpop.permute.xlu0 %1394
        %v1396 = vlaneseq
        %v1397 = vshrl.u32 %v1396, 7
        %v1398 = vadd.s32 %v1397, 8
        %1399 = vset.pattern.permute.xlu0 %v1398
        %1400 = vperm.xlu0 %1399, %v1389
        %v1401 = vpop.permute.xlu0 %1400
        %v1402 = vperm.slane %v439, 5
        %v1403 = vlaneseq
        %v1404 = vshrl.u32 %v1403, 7
        %1406 = vset.pattern.permute.xlu0 %v1404
        %1407 = vperm.xlu0 %1406, %v1402
        %v1408 = vpop.permute.xlu0 %1407
        %v1409 = vlaneseq
        %v1410 = vshrl.u32 %v1409, 7
        %v1411 = vadd.s32 %v1410, 8
        %1412 = vset.pattern.permute.xlu0 %v1411
        %1413 = vperm.xlu0 %1412, %v1402
        %v1414 = vpop.permute.xlu0 %1413
        %v1415 = vperm.slane %v439, 6
        %v1416 = vlaneseq
        %v1417 = vshrl.u32 %v1416, 7
        %1419 = vset.pattern.permute.xlu0 %v1417
        %1420 = vperm.xlu0 %1419, %v1415
        %v1421 = vpop.permute.xlu0 %1420
        %v1422 = vlaneseq
        %v1423 = vshrl.u32 %v1422, 7
        %v1424 = vadd.s32 %v1423, 8
        %1425 = vset.pattern.permute.xlu0 %v1424
        %1426 = vperm.xlu0 %1425, %v1415
        %v1427 = vpop.permute.xlu0 %1426
        %v1428 = vperm.slane %v439, 7
        %v1429 = vlaneseq
        %v1430 = vshrl.u32 %v1429, 7
        %1432 = vset.pattern.permute.xlu0 %v1430
        %1433 = vperm.xlu0 %1432, %v1428
        %v1434 = vpop.permute.xlu0 %1433
        %v1435 = vlaneseq
        %v1436 = vshrl.u32 %v1435, 7
        %v1437 = vadd.s32 %v1436, 8
        %1438 = vset.pattern.permute.xlu0 %v1437
        %1439 = vperm.xlu0 %1438, %v1428
        %v1440 = vpop.permute.xlu0 %1439
        %v1441 = vperm.slane %v440, 0
        %v1442 = vlaneseq
        %v1443 = vshrl.u32 %v1442, 7
        %1445 = vset.pattern.permute.xlu0 %v1443
        %1446 = vperm.xlu0 %1445, %v1441
        %v1447 = vpop.permute.xlu0 %1446
        %v1448 = vlaneseq
        %v1449 = vshrl.u32 %v1448, 7
        %v1450 = vadd.s32 %v1449, 8
        %1451 = vset.pattern.permute.xlu0 %v1450
        %1452 = vperm.xlu0 %1451, %v1441
        %v1453 = vpop.permute.xlu0 %1452
        %v1454 = vperm.slane %v440, 1
        %v1455 = vlaneseq
        %v1456 = vshrl.u32 %v1455, 7
        %1458 = vset.pattern.permute.xlu0 %v1456
        %1459 = vperm.xlu0 %1458, %v1454
        %v1460 = vpop.permute.xlu0 %1459
        %v1461 = vlaneseq
        %v1462 = vshrl.u32 %v1461, 7
        %v1463 = vadd.s32 %v1462, 8
        %1464 = vset.pattern.permute.xlu0 %v1463
        %1465 = vperm.xlu0 %1464, %v1454
        %v1466 = vpop.permute.xlu0 %1465
        %v1467 = vperm.slane %v440, 2
        %v1468 = vlaneseq
        %v1469 = vshrl.u32 %v1468, 7
        %1471 = vset.pattern.permute.xlu0 %v1469
        %1472 = vperm.xlu0 %1471, %v1467
        %v1473 = vpop.permute.xlu0 %1472
        %v1474 = vlaneseq
        %v1475 = vshrl.u32 %v1474, 7
        %v1476 = vadd.s32 %v1475, 8
        %1477 = vset.pattern.permute.xlu0 %v1476
        %1478 = vperm.xlu0 %1477, %v1467
        %v1479 = vpop.permute.xlu0 %1478
        %v1480 = vperm.slane %v440, 3
        %v1481 = vlaneseq
        %v1482 = vshrl.u32 %v1481, 7
        %1484 = vset.pattern.permute.xlu0 %v1482
        %1485 = vperm.xlu0 %1484, %v1480
        %v1486 = vpop.permute.xlu0 %1485
        %v1487 = vlaneseq
        %v1488 = vshrl.u32 %v1487, 7
        %v1489 = vadd.s32 %v1488, 8
        %1490 = vset.pattern.permute.xlu0 %v1489
        %1491 = vperm.xlu0 %1490, %v1480
        %v1492 = vpop.permute.xlu0 %1491
        %v1493 = vperm.slane %v440, 4
        %v1494 = vlaneseq
        %v1495 = vshrl.u32 %v1494, 7
        %1497 = vset.pattern.permute.xlu0 %v1495
        %1498 = vperm.xlu0 %1497, %v1493
        %v1499 = vpop.permute.xlu0 %1498
        %v1500 = vlaneseq
        %v1501 = vshrl.u32 %v1500, 7
        %v1502 = vadd.s32 %v1501, 8
        %1503 = vset.pattern.permute.xlu0 %v1502
        %1504 = vperm.xlu0 %1503, %v1493
        %v1505 = vpop.permute.xlu0 %1504
        %v1506 = vperm.slane %v440, 5
        %v1507 = vlaneseq
        %v1508 = vshrl.u32 %v1507, 7
        %1510 = vset.pattern.permute.xlu0 %v1508
        %1511 = vperm.xlu0 %1510, %v1506
        %v1512 = vpop.permute.xlu0 %1511
        %v1513 = vlaneseq
        %v1514 = vshrl.u32 %v1513, 7
        %v1515 = vadd.s32 %v1514, 8
        %1516 = vset.pattern.permute.xlu0 %v1515
        %1517 = vperm.xlu0 %1516, %v1506
        %v1518 = vpop.permute.xlu0 %1517
        %v1519 = vperm.slane %v440, 6
        %v1520 = vlaneseq
        %v1521 = vshrl.u32 %v1520, 7
        %1523 = vset.pattern.permute.xlu0 %v1521
        %1524 = vperm.xlu0 %1523, %v1519
        %v1525 = vpop.permute.xlu0 %1524
        %v1526 = vlaneseq
        %v1527 = vshrl.u32 %v1526, 7
        %v1528 = vadd.s32 %v1527, 8
        %1529 = vset.pattern.permute.xlu0 %v1528
        %1530 = vperm.xlu0 %1529, %v1519
        %v1531 = vpop.permute.xlu0 %1530
        %v1532 = vperm.slane %v440, 7
        %v1533 = vlaneseq
        %v1534 = vshrl.u32 %v1533, 7
        %1536 = vset.pattern.permute.xlu0 %v1534
        %1537 = vperm.xlu0 %1536, %v1532
        %v1538 = vpop.permute.xlu0 %1537
        %v1539 = vlaneseq
        %v1540 = vshrl.u32 %v1539, 7
        %v1541 = vadd.s32 %v1540, 8
        %1542 = vset.pattern.permute.xlu0 %v1541
        %1543 = vperm.xlu0 %1542, %v1532
        %v1544 = vpop.permute.xlu0 %1543
        %v1545 = vperm.slane %v441, 0
        %v1546 = vlaneseq
        %v1547 = vshrl.u32 %v1546, 7
        %1549 = vset.pattern.permute.xlu0 %v1547
        %1550 = vperm.xlu0 %1549, %v1545
        %v1551 = vpop.permute.xlu0 %1550
        %v1552 = vlaneseq
        %v1553 = vshrl.u32 %v1552, 7
        %v1554 = vadd.s32 %v1553, 8
        %1555 = vset.pattern.permute.xlu0 %v1554
        %1556 = vperm.xlu0 %1555, %v1545
        %v1557 = vpop.permute.xlu0 %1556
        %v1558 = vperm.slane %v441, 1
        %v1559 = vlaneseq
        %v1560 = vshrl.u32 %v1559, 7
        %1562 = vset.pattern.permute.xlu0 %v1560
        %1563 = vperm.xlu0 %1562, %v1558
        %v1564 = vpop.permute.xlu0 %1563
        %v1565 = vlaneseq
        %v1566 = vshrl.u32 %v1565, 7
        %v1567 = vadd.s32 %v1566, 8
        %1568 = vset.pattern.permute.xlu0 %v1567
        %1569 = vperm.xlu0 %1568, %v1558
        %v1570 = vpop.permute.xlu0 %1569
        %v1571 = vperm.slane %v441, 2
        %v1572 = vlaneseq
        %v1573 = vshrl.u32 %v1572, 7
        %1575 = vset.pattern.permute.xlu0 %v1573
        %1576 = vperm.xlu0 %1575, %v1571
        %v1577 = vpop.permute.xlu0 %1576
        %v1578 = vlaneseq
        %v1579 = vshrl.u32 %v1578, 7
        %v1580 = vadd.s32 %v1579, 8
        %1581 = vset.pattern.permute.xlu0 %v1580
        %1582 = vperm.xlu0 %1581, %v1571
        %v1583 = vpop.permute.xlu0 %1582
        %v1584 = vperm.slane %v441, 3
        %v1585 = vlaneseq
        %v1586 = vshrl.u32 %v1585, 7
        %1588 = vset.pattern.permute.xlu0 %v1586
        %1589 = vperm.xlu0 %1588, %v1584
        %v1590 = vpop.permute.xlu0 %1589
        %v1591 = vlaneseq
        %v1592 = vshrl.u32 %v1591, 7
        %v1593 = vadd.s32 %v1592, 8
        %1594 = vset.pattern.permute.xlu0 %v1593
        %1595 = vperm.xlu0 %1594, %v1584
        %v1596 = vpop.permute.xlu0 %1595
        %v1597 = vperm.slane %v441, 4
        %v1598 = vlaneseq
        %v1599 = vshrl.u32 %v1598, 7
        %1601 = vset.pattern.permute.xlu0 %v1599
        %1602 = vperm.xlu0 %1601, %v1597
        %v1603 = vpop.permute.xlu0 %1602
        %v1604 = vlaneseq
        %v1605 = vshrl.u32 %v1604, 7
        %v1606 = vadd.s32 %v1605, 8
        %1607 = vset.pattern.permute.xlu0 %v1606
        %1608 = vperm.xlu0 %1607, %v1597
        %v1609 = vpop.permute.xlu0 %1608
        %v1610 = vperm.slane %v441, 5
        %v1611 = vlaneseq
        %v1612 = vshrl.u32 %v1611, 7
        %1614 = vset.pattern.permute.xlu0 %v1612
        %1615 = vperm.xlu0 %1614, %v1610
        %v1616 = vpop.permute.xlu0 %1615
        %v1617 = vlaneseq
        %v1618 = vshrl.u32 %v1617, 7
        %v1619 = vadd.s32 %v1618, 8
        %1620 = vset.pattern.permute.xlu0 %v1619
        %1621 = vperm.xlu0 %1620, %v1610
        %v1622 = vpop.permute.xlu0 %1621
        %v1623 = vperm.slane %v441, 6
        %v1624 = vlaneseq
        %v1625 = vshrl.u32 %v1624, 7
        %1627 = vset.pattern.permute.xlu0 %v1625
        %1628 = vperm.xlu0 %1627, %v1623
        %v1629 = vpop.permute.xlu0 %1628
        %v1630 = vlaneseq
        %v1631 = vshrl.u32 %v1630, 7
        %v1632 = vadd.s32 %v1631, 8
        %1633 = vset.pattern.permute.xlu0 %v1632
        %1634 = vperm.xlu0 %1633, %v1623
        %v1635 = vpop.permute.xlu0 %1634
        %v1636 = vperm.slane %v441, 7
        %v1637 = vlaneseq
        %v1638 = vshrl.u32 %v1637, 7
        %1640 = vset.pattern.permute.xlu0 %v1638
        %1641 = vperm.xlu0 %1640, %v1636
        %v1642 = vpop.permute.xlu0 %1641
        %v1643 = vlaneseq
        %v1644 = vshrl.u32 %v1643, 7
        %v1645 = vadd.s32 %v1644, 8
        %1646 = vset.pattern.permute.xlu0 %v1645
        %1647 = vperm.xlu0 %1646, %v1636
        %v1648 = vpop.permute.xlu0 %1647
        %v1649 = vperm.slane %v442, 0
        %v1650 = vlaneseq
        %v1651 = vshrl.u32 %v1650, 7
        %1653 = vset.pattern.permute.xlu0 %v1651
        %1654 = vperm.xlu0 %1653, %v1649
        %v1655 = vpop.permute.xlu0 %1654
        %v1656 = vlaneseq
        %v1657 = vshrl.u32 %v1656, 7
        %v1658 = vadd.s32 %v1657, 8
        %1659 = vset.pattern.permute.xlu0 %v1658
        %1660 = vperm.xlu0 %1659, %v1649
        %v1661 = vpop.permute.xlu0 %1660
        %v1662 = vperm.slane %v442, 1
        %v1663 = vlaneseq
        %v1664 = vshrl.u32 %v1663, 7
        %1666 = vset.pattern.permute.xlu0 %v1664
        %1667 = vperm.xlu0 %1666, %v1662
        %v1668 = vpop.permute.xlu0 %1667
        %v1669 = vlaneseq
        %v1670 = vshrl.u32 %v1669, 7
        %v1671 = vadd.s32 %v1670, 8
        %1672 = vset.pattern.permute.xlu0 %v1671
        %1673 = vperm.xlu0 %1672, %v1662
        %v1674 = vpop.permute.xlu0 %1673
        %v1675 = vperm.slane %v442, 2
        %v1676 = vlaneseq
        %v1677 = vshrl.u32 %v1676, 7
        %1679 = vset.pattern.permute.xlu0 %v1677
        %1680 = vperm.xlu0 %1679, %v1675
        %v1681 = vpop.permute.xlu0 %1680
        %v1682 = vlaneseq
        %v1683 = vshrl.u32 %v1682, 7
        %v1684 = vadd.s32 %v1683, 8
        %1685 = vset.pattern.permute.xlu0 %v1684
        %1686 = vperm.xlu0 %1685, %v1675
        %v1687 = vpop.permute.xlu0 %1686
        %v1688 = vperm.slane %v442, 3
        %v1689 = vlaneseq
        %v1690 = vshrl.u32 %v1689, 7
        %1692 = vset.pattern.permute.xlu0 %v1690
        %1693 = vperm.xlu0 %1692, %v1688
        %v1694 = vpop.permute.xlu0 %1693
        %v1695 = vlaneseq
        %v1696 = vshrl.u32 %v1695, 7
        %v1697 = vadd.s32 %v1696, 8
        %1698 = vset.pattern.permute.xlu0 %v1697
        %1699 = vperm.xlu0 %1698, %v1688
        %v1700 = vpop.permute.xlu0 %1699
        %v1701 = vperm.slane %v442, 4
        %v1702 = vlaneseq
        %v1703 = vshrl.u32 %v1702, 7
        %1705 = vset.pattern.permute.xlu0 %v1703
        %1706 = vperm.xlu0 %1705, %v1701
        %v1707 = vpop.permute.xlu0 %1706
        %v1708 = vlaneseq
        %v1709 = vshrl.u32 %v1708, 7
        %v1710 = vadd.s32 %v1709, 8
        %1711 = vset.pattern.permute.xlu0 %v1710
        %1712 = vperm.xlu0 %1711, %v1701
        %v1713 = vpop.permute.xlu0 %1712
        %v1714 = vperm.slane %v442, 5
        %v1715 = vlaneseq
        %v1716 = vshrl.u32 %v1715, 7
        %1718 = vset.pattern.permute.xlu0 %v1716
        %1719 = vperm.xlu0 %1718, %v1714
        %v1720 = vpop.permute.xlu0 %1719
        %v1721 = vlaneseq
        %v1722 = vshrl.u32 %v1721, 7
        %v1723 = vadd.s32 %v1722, 8
        %1724 = vset.pattern.permute.xlu0 %v1723
        %1725 = vperm.xlu0 %1724, %v1714
        %v1726 = vpop.permute.xlu0 %1725
        %v1727 = vperm.slane %v442, 6
        %v1728 = vlaneseq
        %v1729 = vshrl.u32 %v1728, 7
        %1731 = vset.pattern.permute.xlu0 %v1729
        %1732 = vperm.xlu0 %1731, %v1727
        %v1733 = vpop.permute.xlu0 %1732
        %v1734 = vlaneseq
        %v1735 = vshrl.u32 %v1734, 7
        %v1736 = vadd.s32 %v1735, 8
        %1737 = vset.pattern.permute.xlu0 %v1736
        %1738 = vperm.xlu0 %1737, %v1727
        %v1739 = vpop.permute.xlu0 %1738
        %v1740 = vperm.slane %v442, 7
        %v1741 = vlaneseq
        %v1742 = vshrl.u32 %v1741, 7
        %1744 = vset.pattern.permute.xlu0 %v1742
        %1745 = vperm.xlu0 %1744, %v1740
        %v1746 = vpop.permute.xlu0 %1745
        %v1747 = vlaneseq
        %v1748 = vshrl.u32 %v1747, 7
        %v1749 = vadd.s32 %v1748, 8
        %1750 = vset.pattern.permute.xlu0 %v1749
        %1751 = vperm.xlu0 %1750, %v1740
        %v1752 = vpop.permute.xlu0 %1751
        %v1753 = vperm.slane %v443, 0
        %v1754 = vlaneseq
        %v1755 = vshrl.u32 %v1754, 7
        %1757 = vset.pattern.permute.xlu0 %v1755
        %1758 = vperm.xlu0 %1757, %v1753
        %v1759 = vpop.permute.xlu0 %1758
        %v1760 = vlaneseq
        %v1761 = vshrl.u32 %v1760, 7
        %v1762 = vadd.s32 %v1761, 8
        %1763 = vset.pattern.permute.xlu0 %v1762
        %1764 = vperm.xlu0 %1763, %v1753
        %v1765 = vpop.permute.xlu0 %1764
        %v1766 = vperm.slane %v443, 1
        %v1767 = vlaneseq
        %v1768 = vshrl.u32 %v1767, 7
        %1770 = vset.pattern.permute.xlu0 %v1768
        %1771 = vperm.xlu0 %1770, %v1766
        %v1772 = vpop.permute.xlu0 %1771
        %v1773 = vlaneseq
        %v1774 = vshrl.u32 %v1773, 7
        %v1775 = vadd.s32 %v1774, 8
        %1776 = vset.pattern.permute.xlu0 %v1775
        %1777 = vperm.xlu0 %1776, %v1766
        %v1778 = vpop.permute.xlu0 %1777
        %v1779 = vperm.slane %v443, 2
        %v1780 = vlaneseq
        %v1781 = vshrl.u32 %v1780, 7
        %1783 = vset.pattern.permute.xlu0 %v1781
        %1784 = vperm.xlu0 %1783, %v1779
        %v1785 = vpop.permute.xlu0 %1784
        %v1786 = vlaneseq
        %v1787 = vshrl.u32 %v1786, 7
        %v1788 = vadd.s32 %v1787, 8
        %1789 = vset.pattern.permute.xlu0 %v1788
        %1790 = vperm.xlu0 %1789, %v1779
        %v1791 = vpop.permute.xlu0 %1790
        %v1792 = vperm.slane %v443, 3
        %v1793 = vlaneseq
        %v1794 = vshrl.u32 %v1793, 7
        %1796 = vset.pattern.permute.xlu0 %v1794
        %1797 = vperm.xlu0 %1796, %v1792
        %v1798 = vpop.permute.xlu0 %1797
        %v1799 = vlaneseq
        %v1800 = vshrl.u32 %v1799, 7
        %v1801 = vadd.s32 %v1800, 8
        %1802 = vset.pattern.permute.xlu0 %v1801
        %1803 = vperm.xlu0 %1802, %v1792
        %v1804 = vpop.permute.xlu0 %1803
        %v1805 = vperm.slane %v443, 4
        %v1806 = vlaneseq
        %v1807 = vshrl.u32 %v1806, 7
        %1809 = vset.pattern.permute.xlu0 %v1807
        %1810 = vperm.xlu0 %1809, %v1805
        %v1811 = vpop.permute.xlu0 %1810
        %v1812 = vlaneseq
        %v1813 = vshrl.u32 %v1812, 7
        %v1814 = vadd.s32 %v1813, 8
        %1815 = vset.pattern.permute.xlu0 %v1814
        %1816 = vperm.xlu0 %1815, %v1805
        %v1817 = vpop.permute.xlu0 %1816
        %v1818 = vperm.slane %v443, 5
        %v1819 = vlaneseq
        %v1820 = vshrl.u32 %v1819, 7
        %1822 = vset.pattern.permute.xlu0 %v1820
        %1823 = vperm.xlu0 %1822, %v1818
        %v1824 = vpop.permute.xlu0 %1823
        %v1825 = vlaneseq
        %v1826 = vshrl.u32 %v1825, 7
        %v1827 = vadd.s32 %v1826, 8
        %1828 = vset.pattern.permute.xlu0 %v1827
        %1829 = vperm.xlu0 %1828, %v1818
        %v1830 = vpop.permute.xlu0 %1829
        %v1831 = vperm.slane %v443, 6
        %v1832 = vlaneseq
        %v1833 = vshrl.u32 %v1832, 7
        %1835 = vset.pattern.permute.xlu0 %v1833
        %1836 = vperm.xlu0 %1835, %v1831
        %v1837 = vpop.permute.xlu0 %1836
        %v1838 = vlaneseq
        %v1839 = vshrl.u32 %v1838, 7
        %v1840 = vadd.s32 %v1839, 8
        %1841 = vset.pattern.permute.xlu0 %v1840
        %1842 = vperm.xlu0 %1841, %v1831
        %v1843 = vpop.permute.xlu0 %1842
        %v1844 = vperm.slane %v443, 7
        %v1845 = vlaneseq
        %v1846 = vshrl.u32 %v1845, 7
        %1848 = vset.pattern.permute.xlu0 %v1846
        %1849 = vperm.xlu0 %1848, %v1844
        %v1850 = vpop.permute.xlu0 %1849
        %v1851 = vlaneseq
        %v1852 = vshrl.u32 %v1851, 7
        %v1853 = vadd.s32 %v1852, 8
        %1854 = vset.pattern.permute.xlu0 %v1853
        %1855 = vperm.xlu0 %1854, %v1844
        %v1856 = vpop.permute.xlu0 %1855
        %v1857 = vperm.slane %v444, 0
        %v1858 = vlaneseq
        %v1859 = vshrl.u32 %v1858, 7
        %1861 = vset.pattern.permute.xlu0 %v1859
        %1862 = vperm.xlu0 %1861, %v1857
        %v1863 = vpop.permute.xlu0 %1862
        %v1864 = vlaneseq
        %v1865 = vshrl.u32 %v1864, 7
        %v1866 = vadd.s32 %v1865, 8
        %1867 = vset.pattern.permute.xlu0 %v1866
        %1868 = vperm.xlu0 %1867, %v1857
        %v1869 = vpop.permute.xlu0 %1868
        %v1870 = vperm.slane %v444, 1
        %v1871 = vlaneseq
        %v1872 = vshrl.u32 %v1871, 7
        %1874 = vset.pattern.permute.xlu0 %v1872
        %1875 = vperm.xlu0 %1874, %v1870
        %v1876 = vpop.permute.xlu0 %1875
        %v1877 = vlaneseq
        %v1878 = vshrl.u32 %v1877, 7
        %v1879 = vadd.s32 %v1878, 8
        %1880 = vset.pattern.permute.xlu0 %v1879
        %1881 = vperm.xlu0 %1880, %v1870
        %v1882 = vpop.permute.xlu0 %1881
        %v1883 = vperm.slane %v444, 2
        %v1884 = vlaneseq
        %v1885 = vshrl.u32 %v1884, 7
        %1887 = vset.pattern.permute.xlu0 %v1885
        %1888 = vperm.xlu0 %1887, %v1883
        %v1889 = vpop.permute.xlu0 %1888
        %v1890 = vlaneseq
        %v1891 = vshrl.u32 %v1890, 7
        %v1892 = vadd.s32 %v1891, 8
        %1893 = vset.pattern.permute.xlu0 %v1892
        %1894 = vperm.xlu0 %1893, %v1883
        %v1895 = vpop.permute.xlu0 %1894
        %v1896 = vperm.slane %v444, 3
        %v1897 = vlaneseq
        %v1898 = vshrl.u32 %v1897, 7
        %1900 = vset.pattern.permute.xlu0 %v1898
        %1901 = vperm.xlu0 %1900, %v1896
        %v1902 = vpop.permute.xlu0 %1901
        %v1903 = vlaneseq
        %v1904 = vshrl.u32 %v1903, 7
        %v1905 = vadd.s32 %v1904, 8
        %1906 = vset.pattern.permute.xlu0 %v1905
        %1907 = vperm.xlu0 %1906, %v1896
        %v1908 = vpop.permute.xlu0 %1907
        %v1909 = vperm.slane %v444, 4
        %v1910 = vlaneseq
        %v1911 = vshrl.u32 %v1910, 7
        %1913 = vset.pattern.permute.xlu0 %v1911
        %1914 = vperm.xlu0 %1913, %v1909
        %v1915 = vpop.permute.xlu0 %1914
        %v1916 = vlaneseq
        %v1917 = vshrl.u32 %v1916, 7
        %v1918 = vadd.s32 %v1917, 8
        %1919 = vset.pattern.permute.xlu0 %v1918
        %1920 = vperm.xlu0 %1919, %v1909
        %v1921 = vpop.permute.xlu0 %1920
        %v1922 = vperm.slane %v444, 5
        %v1923 = vlaneseq
        %v1924 = vshrl.u32 %v1923, 7
        %1926 = vset.pattern.permute.xlu0 %v1924
        %1927 = vperm.xlu0 %1926, %v1922
        %v1928 = vpop.permute.xlu0 %1927
        %v1929 = vlaneseq
        %v1930 = vshrl.u32 %v1929, 7
        %v1931 = vadd.s32 %v1930, 8
        %1932 = vset.pattern.permute.xlu0 %v1931
        %1933 = vperm.xlu0 %1932, %v1922
        %v1934 = vpop.permute.xlu0 %1933
        %v1935 = vperm.slane %v444, 6
        %v1936 = vlaneseq
        %v1937 = vshrl.u32 %v1936, 7
        %1939 = vset.pattern.permute.xlu0 %v1937
        %1940 = vperm.xlu0 %1939, %v1935
        %v1941 = vpop.permute.xlu0 %1940
        %v1942 = vlaneseq
        %v1943 = vshrl.u32 %v1942, 7
        %v1944 = vadd.s32 %v1943, 8
        %1945 = vset.pattern.permute.xlu0 %v1944
        %1946 = vperm.xlu0 %1945, %v1935
        %v1947 = vpop.permute.xlu0 %1946
        %v1948 = vperm.slane %v444, 7
        %v1949 = vlaneseq
        %v1950 = vshrl.u32 %v1949, 7
        %1952 = vset.pattern.permute.xlu0 %v1950
        %1953 = vperm.xlu0 %1952, %v1948
        %v1954 = vpop.permute.xlu0 %1953
        %v1955 = vlaneseq
        %v1956 = vshrl.u32 %v1955, 7
        %v1957 = vadd.s32 %v1956, 8
        %1958 = vset.pattern.permute.xlu0 %v1957
        %1959 = vperm.xlu0 %1958, %v1948
        %v1960 = vpop.permute.xlu0 %1959
        %v1961 = vperm.slane %v445, 0
        %v1962 = vlaneseq
        %v1963 = vshrl.u32 %v1962, 7
        %1965 = vset.pattern.permute.xlu0 %v1963
        %1966 = vperm.xlu0 %1965, %v1961
        %v1967 = vpop.permute.xlu0 %1966
        %v1968 = vlaneseq
        %v1969 = vshrl.u32 %v1968, 7
        %v1970 = vadd.s32 %v1969, 8
        %1971 = vset.pattern.permute.xlu0 %v1970
        %1972 = vperm.xlu0 %1971, %v1961
        %v1973 = vpop.permute.xlu0 %1972
        %v1974 = vperm.slane %v445, 1
        %v1975 = vlaneseq
        %v1976 = vshrl.u32 %v1975, 7
        %1978 = vset.pattern.permute.xlu0 %v1976
        %1979 = vperm.xlu0 %1978, %v1974
        %v1980 = vpop.permute.xlu0 %1979
        %v1981 = vlaneseq
        %v1982 = vshrl.u32 %v1981, 7
        %v1983 = vadd.s32 %v1982, 8
        %1984 = vset.pattern.permute.xlu0 %v1983
        %1985 = vperm.xlu0 %1984, %v1974
        %v1986 = vpop.permute.xlu0 %1985
        %v1987 = vperm.slane %v445, 2
        %v1988 = vlaneseq
        %v1989 = vshrl.u32 %v1988, 7
        %1991 = vset.pattern.permute.xlu0 %v1989
        %1992 = vperm.xlu0 %1991, %v1987
        %v1993 = vpop.permute.xlu0 %1992
        %v1994 = vlaneseq
        %v1995 = vshrl.u32 %v1994, 7
        %v1996 = vadd.s32 %v1995, 8
        %1997 = vset.pattern.permute.xlu0 %v1996
        %1998 = vperm.xlu0 %1997, %v1987
        %v1999 = vpop.permute.xlu0 %1998
        %v2000 = vperm.slane %v445, 3
        %v2001 = vlaneseq
        %v2002 = vshrl.u32 %v2001, 7
        %2004 = vset.pattern.permute.xlu0 %v2002
        %2005 = vperm.xlu0 %2004, %v2000
        %v2006 = vpop.permute.xlu0 %2005
        %v2007 = vlaneseq
        %v2008 = vshrl.u32 %v2007, 7
        %v2009 = vadd.s32 %v2008, 8
        %2010 = vset.pattern.permute.xlu0 %v2009
        %2011 = vperm.xlu0 %2010, %v2000
        %v2012 = vpop.permute.xlu0 %2011
        %v2013 = vperm.slane %v445, 4
        %v2014 = vlaneseq
        %v2015 = vshrl.u32 %v2014, 7
        %2017 = vset.pattern.permute.xlu0 %v2015
        %2018 = vperm.xlu0 %2017, %v2013
        %v2019 = vpop.permute.xlu0 %2018
        %v2020 = vlaneseq
        %v2021 = vshrl.u32 %v2020, 7
        %v2022 = vadd.s32 %v2021, 8
        %2023 = vset.pattern.permute.xlu0 %v2022
        %2024 = vperm.xlu0 %2023, %v2013
        %v2025 = vpop.permute.xlu0 %2024
        %v2026 = vperm.slane %v445, 5
        %v2027 = vlaneseq
        %v2028 = vshrl.u32 %v2027, 7
        %2030 = vset.pattern.permute.xlu0 %v2028
        %2031 = vperm.xlu0 %2030, %v2026
        %v2032 = vpop.permute.xlu0 %2031
        %v2033 = vlaneseq
        %v2034 = vshrl.u32 %v2033, 7
        %v2035 = vadd.s32 %v2034, 8
        %2036 = vset.pattern.permute.xlu0 %v2035
        %2037 = vperm.xlu0 %2036, %v2026
        %v2038 = vpop.permute.xlu0 %2037
        %v2039 = vperm.slane %v445, 6
        %v2040 = vlaneseq
        %v2041 = vshrl.u32 %v2040, 7
        %2043 = vset.pattern.permute.xlu0 %v2041
        %2044 = vperm.xlu0 %2043, %v2039
        %v2045 = vpop.permute.xlu0 %2044
        %v2046 = vlaneseq
        %v2047 = vshrl.u32 %v2046, 7
        %v2048 = vadd.s32 %v2047, 8
        %2049 = vset.pattern.permute.xlu0 %v2048
        %2050 = vperm.xlu0 %2049, %v2039
        %v2051 = vpop.permute.xlu0 %2050
        %v2052 = vperm.slane %v445, 7
        %v2053 = vlaneseq
        %v2054 = vshrl.u32 %v2053, 7
        %2056 = vset.pattern.permute.xlu0 %v2054
        %2057 = vperm.xlu0 %2056, %v2052
        %v2058 = vpop.permute.xlu0 %2057
        %v2059 = vlaneseq
        %v2060 = vshrl.u32 %v2059, 7
        %v2061 = vadd.s32 %v2060, 8
        %2062 = vset.pattern.permute.xlu0 %v2061
        %2063 = vperm.xlu0 %2062, %v2052
        %v2064 = vpop.permute.xlu0 %2063
        %v2065 = vperm.slane %v446, 0
        %v2066 = vlaneseq
        %v2067 = vshrl.u32 %v2066, 7
        %2069 = vset.pattern.permute.xlu0 %v2067
        %2070 = vperm.xlu0 %2069, %v2065
        %v2071 = vpop.permute.xlu0 %2070
        %v2072 = vlaneseq
        %v2073 = vshrl.u32 %v2072, 7
        %v2074 = vadd.s32 %v2073, 8
        %2075 = vset.pattern.permute.xlu0 %v2074
        %2076 = vperm.xlu0 %2075, %v2065
        %v2077 = vpop.permute.xlu0 %2076
        %v2078 = vperm.slane %v446, 1
        %v2079 = vlaneseq
        %v2080 = vshrl.u32 %v2079, 7
        %2082 = vset.pattern.permute.xlu0 %v2080
        %2083 = vperm.xlu0 %2082, %v2078
        %v2084 = vpop.permute.xlu0 %2083
        %v2085 = vlaneseq
        %v2086 = vshrl.u32 %v2085, 7
        %v2087 = vadd.s32 %v2086, 8
        %2088 = vset.pattern.permute.xlu0 %v2087
        %2089 = vperm.xlu0 %2088, %v2078
        %v2090 = vpop.permute.xlu0 %2089
        %v2091 = vperm.slane %v446, 2
        %v2092 = vlaneseq
        %v2093 = vshrl.u32 %v2092, 7
        %2095 = vset.pattern.permute.xlu0 %v2093
        %2096 = vperm.xlu0 %2095, %v2091
        %v2097 = vpop.permute.xlu0 %2096
        %v2098 = vlaneseq
        %v2099 = vshrl.u32 %v2098, 7
        %v2100 = vadd.s32 %v2099, 8
        %2101 = vset.pattern.permute.xlu0 %v2100
        %2102 = vperm.xlu0 %2101, %v2091
        %v2103 = vpop.permute.xlu0 %2102
        %v2104 = vperm.slane %v446, 3
        %v2105 = vlaneseq
        %v2106 = vshrl.u32 %v2105, 7
        %2108 = vset.pattern.permute.xlu0 %v2106
        %2109 = vperm.xlu0 %2108, %v2104
        %v2110 = vpop.permute.xlu0 %2109
        %v2111 = vlaneseq
        %v2112 = vshrl.u32 %v2111, 7
        %v2113 = vadd.s32 %v2112, 8
        %2114 = vset.pattern.permute.xlu0 %v2113
        %2115 = vperm.xlu0 %2114, %v2104
        %v2116 = vpop.permute.xlu0 %2115
        %v2117 = vperm.slane %v446, 4
        %v2118 = vlaneseq
        %v2119 = vshrl.u32 %v2118, 7
        %2121 = vset.pattern.permute.xlu0 %v2119
        %2122 = vperm.xlu0 %2121, %v2117
        %v2123 = vpop.permute.xlu0 %2122
        %v2124 = vlaneseq
        %v2125 = vshrl.u32 %v2124, 7
        %v2126 = vadd.s32 %v2125, 8
        %2127 = vset.pattern.permute.xlu0 %v2126
        %2128 = vperm.xlu0 %2127, %v2117
        %v2129 = vpop.permute.xlu0 %2128
        %v2130 = vperm.slane %v446, 5
        %v2131 = vlaneseq
        %v2132 = vshrl.u32 %v2131, 7
        %2134 = vset.pattern.permute.xlu0 %v2132
        %2135 = vperm.xlu0 %2134, %v2130
        %v2136 = vpop.permute.xlu0 %2135
        %v2137 = vlaneseq
        %v2138 = vshrl.u32 %v2137, 7
        %v2139 = vadd.s32 %v2138, 8
        %2140 = vset.pattern.permute.xlu0 %v2139
        %2141 = vperm.xlu0 %2140, %v2130
        %v2142 = vpop.permute.xlu0 %2141
        %v2143 = vperm.slane %v446, 6
        %v2144 = vlaneseq
        %v2145 = vshrl.u32 %v2144, 7
        %2147 = vset.pattern.permute.xlu0 %v2145
        %2148 = vperm.xlu0 %2147, %v2143
        %v2149 = vpop.permute.xlu0 %2148
        %v2150 = vlaneseq
        %v2151 = vshrl.u32 %v2150, 7
        %v2152 = vadd.s32 %v2151, 8
        %2153 = vset.pattern.permute.xlu0 %v2152
        %2154 = vperm.xlu0 %2153, %v2143
        %v2155 = vpop.permute.xlu0 %2154
        %v2156 = vperm.slane %v446, 7
        %v2157 = vlaneseq
        %v2158 = vshrl.u32 %v2157, 7
        %2160 = vset.pattern.permute.xlu0 %v2158
        %2161 = vperm.xlu0 %2160, %v2156
        %v2162 = vpop.permute.xlu0 %2161
        %v2163 = vlaneseq
        %v2164 = vshrl.u32 %v2163, 7
        %v2165 = vadd.s32 %v2164, 8
        %2166 = vset.pattern.permute.xlu0 %v2165
        %2167 = vperm.xlu0 %2166, %v2156
        %v2168 = vpop.permute.xlu0 %2167
        %v2185 = vrot.slane %v447, 1
        %v2186 = vrot.slane %v447, 2
        %v2187 = vrot.slane %v447, 3
        %v2188 = vrot.slane %v447, 4
        %v2189 = vrot.slane %v447, 5
        %v2190 = vrot.slane %v447, 6
        %v2191 = vrot.slane %v447, 7
        %v2192 = vrot.slane %v448, 1
        %v2193 = vrot.slane %v448, 2
        %v2194 = vrot.slane %v448, 3
        %v2195 = vrot.slane %v448, 4
        %v2196 = vrot.slane %v448, 5
        %v2197 = vrot.slane %v448, 6
        %v2198 = vrot.slane %v448, 7
        %v2199 = vrot.slane %v449, 1
        %v2200 = vrot.slane %v449, 2
        %v2201 = vrot.slane %v449, 3
        %v2202 = vrot.slane %v449, 4
        %v2203 = vrot.slane %v449, 5
        %v2204 = vrot.slane %v449, 6
        %v2205 = vrot.slane %v449, 7
        %v2206 = vrot.slane %v450, 1
        %v2207 = vrot.slane %v450, 2
        %v2208 = vrot.slane %v450, 3
        %v2209 = vrot.slane %v450, 4
        %v2210 = vrot.slane %v450, 5
        %v2211 = vrot.slane %v450, 6
        %v2212 = vrot.slane %v450, 7
        %v2213 = vrot.slane %v451, 1
        %v2214 = vrot.slane %v451, 2
        %v2215 = vrot.slane %v451, 3
        %v2216 = vrot.slane %v451, 4
        %v2217 = vrot.slane %v451, 5
        %v2218 = vrot.slane %v451, 6
        %v2219 = vrot.slane %v451, 7
        %v2220 = vrot.slane %v452, 1
        %v2221 = vrot.slane %v452, 2
        %v2222 = vrot.slane %v452, 3
        %v2223 = vrot.slane %v452, 4
        %v2224 = vrot.slane %v452, 5
        %v2225 = vrot.slane %v452, 6
        %v2226 = vrot.slane %v452, 7
        %v2227 = vrot.slane %v453, 1
        %v2228 = vrot.slane %v453, 2
        %v2229 = vrot.slane %v453, 3
        %v2230 = vrot.slane %v453, 4
        %v2231 = vrot.slane %v453, 5
        %v2232 = vrot.slane %v453, 6
        %v2233 = vrot.slane %v453, 7
        %v2234 = vrot.slane %v454, 1
        %v2235 = vrot.slane %v454, 2
        %v2236 = vrot.slane %v454, 3
        %v2237 = vrot.slane %v454, 4
        %v2238 = vrot.slane %v454, 5
        %v2239 = vrot.slane %v454, 6
        %v2240 = vrot.slane %v454, 7
        %v2241 = vrot.slane %v455, 1
        %v2242 = vrot.slane %v455, 2
        %v2243 = vrot.slane %v455, 3
        %v2244 = vrot.slane %v455, 4
        %v2245 = vrot.slane %v455, 5
        %v2246 = vrot.slane %v455, 6
        %v2247 = vrot.slane %v455, 7
        %v2248 = vrot.slane %v456, 1
        %v2249 = vrot.slane %v456, 2
        %v2250 = vrot.slane %v456, 3
        %v2251 = vrot.slane %v456, 4
        %v2252 = vrot.slane %v456, 5
        %v2253 = vrot.slane %v456, 6
        %v2254 = vrot.slane %v456, 7
        %v2255 = vrot.slane %v457, 1
        %v2256 = vrot.slane %v457, 2
        %v2257 = vrot.slane %v457, 3
        %v2258 = vrot.slane %v457, 4
        %v2259 = vrot.slane %v457, 5
        %v2260 = vrot.slane %v457, 6
        %v2261 = vrot.slane %v457, 7
        %v2262 = vrot.slane %v458, 1
        %v2263 = vrot.slane %v458, 2
        %v2264 = vrot.slane %v458, 3
        %v2265 = vrot.slane %v458, 4
        %v2266 = vrot.slane %v458, 5
        %v2267 = vrot.slane %v458, 6
        %v2268 = vrot.slane %v458, 7
        %v2269 = vrot.slane %v459, 1
        %v2270 = vrot.slane %v459, 2
        %v2271 = vrot.slane %v459, 3
        %v2272 = vrot.slane %v459, 4
        %v2273 = vrot.slane %v459, 5
        %v2274 = vrot.slane %v459, 6
        %v2275 = vrot.slane %v459, 7
        %v2276 = vrot.slane %v460, 1
        %v2277 = vrot.slane %v460, 2
        %v2278 = vrot.slane %v460, 3
        %v2279 = vrot.slane %v460, 4
        %v2280 = vrot.slane %v460, 5
        %v2281 = vrot.slane %v460, 6
        %v2282 = vrot.slane %v460, 7
        %v2283 = vrot.slane %v461, 1
        %v2284 = vrot.slane %v461, 2
        %v2285 = vrot.slane %v461, 3
        %v2286 = vrot.slane %v461, 4
        %v2287 = vrot.slane %v461, 5
        %v2288 = vrot.slane %v461, 6
        %v2289 = vrot.slane %v461, 7
        %v2290 = vrot.slane %v462, 1
        %v2291 = vrot.slane %v462, 2
        %v2292 = vrot.slane %v462, 3
        %v2293 = vrot.slane %v462, 4
        %v2294 = vrot.slane %v462, 5
        %v2295 = vrot.slane %v462, 6
        %v2296 = vrot.slane %v462, 7
        %v2297 = vperm.slane %v447, 0
        %v2298 = vperm.slane %v2185, 0
        %v2299 = vperm.slane %v2186, 0
        %v2300 = vperm.slane %v2187, 0
        %v2301 = vperm.slane %v2188, 0
        %v2302 = vperm.slane %v2189, 0
        %v2303 = vperm.slane %v2190, 0
        %v2304 = vperm.slane %v2191, 0
        %v2305 = vperm.slane %v448, 0
        %v2306 = vperm.slane %v2192, 0
        %v2307 = vperm.slane %v2193, 0
        %v2308 = vperm.slane %v2194, 0
        %v2309 = vperm.slane %v2195, 0
        %v2310 = vperm.slane %v2196, 0
        %v2311 = vperm.slane %v2197, 0
        %v2312 = vperm.slane %v2198, 0
        %v2313 = vperm.slane %v449, 0
        %v2314 = vperm.slane %v2199, 0
        %v2315 = vperm.slane %v2200, 0
        %v2316 = vperm.slane %v2201, 0
        %v2317 = vperm.slane %v2202, 0
        %v2318 = vperm.slane %v2203, 0
        %v2319 = vperm.slane %v2204, 0
        %v2320 = vperm.slane %v2205, 0
        %v2321 = vperm.slane %v450, 0
        %v2322 = vperm.slane %v2206, 0
        %v2323 = vperm.slane %v2207, 0
        %v2324 = vperm.slane %v2208, 0
        %v2325 = vperm.slane %v2209, 0
        %v2326 = vperm.slane %v2210, 0
        %v2327 = vperm.slane %v2211, 0
        %v2328 = vperm.slane %v2212, 0
        %v2329 = vperm.slane %v451, 0
        %v2330 = vperm.slane %v2213, 0
        %v2331 = vperm.slane %v2214, 0
        %v2332 = vperm.slane %v2215, 0
        %v2333 = vperm.slane %v2216, 0
        %v2334 = vperm.slane %v2217, 0
        %v2335 = vperm.slane %v2218, 0
        %v2336 = vperm.slane %v2219, 0
        %v2337 = vperm.slane %v452, 0
        %v2338 = vperm.slane %v2220, 0
        %v2339 = vperm.slane %v2221, 0
        %v2340 = vperm.slane %v2222, 0
        %v2341 = vperm.slane %v2223, 0
        %v2342 = vperm.slane %v2224, 0
        %v2343 = vperm.slane %v2225, 0
        %v2344 = vperm.slane %v2226, 0
        %v2345 = vperm.slane %v453, 0
        %v2346 = vperm.slane %v2227, 0
        %v2347 = vperm.slane %v2228, 0
        %v2348 = vperm.slane %v2229, 0
        %v2349 = vperm.slane %v2230, 0
        %v2350 = vperm.slane %v2231, 0
        %v2351 = vperm.slane %v2232, 0
        %v2352 = vperm.slane %v2233, 0
        %v2353 = vperm.slane %v454, 0
        %v2354 = vperm.slane %v2234, 0
        %v2355 = vperm.slane %v2235, 0
        %v2356 = vperm.slane %v2236, 0
        %v2357 = vperm.slane %v2237, 0
        %v2358 = vperm.slane %v2238, 0
        %v2359 = vperm.slane %v2239, 0
        %v2360 = vperm.slane %v2240, 0
        %v2361 = vperm.slane %v455, 0
        %v2362 = vperm.slane %v2241, 0
        %v2363 = vperm.slane %v2242, 0
        %v2364 = vperm.slane %v2243, 0
        %v2365 = vperm.slane %v2244, 0
        %v2366 = vperm.slane %v2245, 0
        %v2367 = vperm.slane %v2246, 0
        %v2368 = vperm.slane %v2247, 0
        %v2369 = vperm.slane %v456, 0
        %v2370 = vperm.slane %v2248, 0
        %v2371 = vperm.slane %v2249, 0
        %v2372 = vperm.slane %v2250, 0
        %v2373 = vperm.slane %v2251, 0
        %v2374 = vperm.slane %v2252, 0
        %v2375 = vperm.slane %v2253, 0
        %v2376 = vperm.slane %v2254, 0
        %v2377 = vperm.slane %v457, 0
        %v2378 = vperm.slane %v2255, 0
        %v2379 = vperm.slane %v2256, 0
        %v2380 = vperm.slane %v2257, 0
        %v2381 = vperm.slane %v2258, 0
        %v2382 = vperm.slane %v2259, 0
        %v2383 = vperm.slane %v2260, 0
        %v2384 = vperm.slane %v2261, 0
        %v2385 = vperm.slane %v458, 0
        %v2386 = vperm.slane %v2262, 0
        %v2387 = vperm.slane %v2263, 0
        %v2388 = vperm.slane %v2264, 0
        %v2389 = vperm.slane %v2265, 0
        %v2390 = vperm.slane %v2266, 0
        %v2391 = vperm.slane %v2267, 0
        %v2392 = vperm.slane %v2268, 0
        %v2393 = vperm.slane %v459, 0
        %v2394 = vperm.slane %v2269, 0
        %v2395 = vperm.slane %v2270, 0
        %v2396 = vperm.slane %v2271, 0
        %v2397 = vperm.slane %v2272, 0
        %v2398 = vperm.slane %v2273, 0
        %v2399 = vperm.slane %v2274, 0
        %v2400 = vperm.slane %v2275, 0
        %v2401 = vperm.slane %v460, 0
        %v2402 = vperm.slane %v2276, 0
        %v2403 = vperm.slane %v2277, 0
        %v2404 = vperm.slane %v2278, 0
        %v2405 = vperm.slane %v2279, 0
        %v2406 = vperm.slane %v2280, 0
        %v2407 = vperm.slane %v2281, 0
        %v2408 = vperm.slane %v2282, 0
        %v2409 = vperm.slane %v461, 0
        %v2410 = vperm.slane %v2283, 0
        %v2411 = vperm.slane %v2284, 0
        %v2412 = vperm.slane %v2285, 0
        %v2413 = vperm.slane %v2286, 0
        %v2414 = vperm.slane %v2287, 0
        %v2415 = vperm.slane %v2288, 0
        %v2416 = vperm.slane %v2289, 0
        %v2417 = vperm.slane %v462, 0
        %v2418 = vperm.slane %v2290, 0
        %v2419 = vperm.slane %v2291, 0
        %v2420 = vperm.slane %v2292, 0
        %v2421 = vperm.slane %v2293, 0
        %v2422 = vperm.slane %v2294, 0
        %v2423 = vperm.slane %v2295, 0
        %v2424 = vperm.slane %v2296, 0
        %v2553 = vsub.f32 %v511, %v2297
        %v2554 = vsub.f32 %v517, %v2297
        %v2555 = vsub.f32 %v524, %v2298
        %v2556 = vsub.f32 %v530, %v2298
        %v2557 = vsub.f32 %v537, %v2299
        %v2558 = vsub.f32 %v543, %v2299
        %v2559 = vsub.f32 %v550, %v2300
        %v2560 = vsub.f32 %v556, %v2300
        %v2561 = vsub.f32 %v563, %v2301
        %v2562 = vsub.f32 %v569, %v2301
        %v2563 = vsub.f32 %v576, %v2302
        %v2564 = vsub.f32 %v582, %v2302
        %v2565 = vsub.f32 %v589, %v2303
        %v2566 = vsub.f32 %v595, %v2303
        %v2567 = vsub.f32 %v602, %v2304
        %v2568 = vsub.f32 %v608, %v2304
        %v2569 = vsub.f32 %v615, %v2305
        %v2570 = vsub.f32 %v621, %v2305
        %v2571 = vsub.f32 %v628, %v2306
        %v2572 = vsub.f32 %v634, %v2306
        %v2573 = vsub.f32 %v641, %v2307
        %v2574 = vsub.f32 %v647, %v2307
        %v2575 = vsub.f32 %v654, %v2308
        %v2576 = vsub.f32 %v660, %v2308
        %v2577 = vsub.f32 %v667, %v2309
        %v2578 = vsub.f32 %v673, %v2309
        %v2579 = vsub.f32 %v680, %v2310
        %v2580 = vsub.f32 %v686, %v2310
        %v2581 = vsub.f32 %v693, %v2311
        %v2582 = vsub.f32 %v699, %v2311
        %v2583 = vsub.f32 %v706, %v2312
        %v2584 = vsub.f32 %v712, %v2312
        %v2585 = vsub.f32 %v719, %v2313
        %v2586 = vsub.f32 %v725, %v2313
        %v2587 = vsub.f32 %v732, %v2314
        %v2588 = vsub.f32 %v738, %v2314
        %v2589 = vsub.f32 %v745, %v2315
        %v2590 = vsub.f32 %v751, %v2315
        %v2591 = vsub.f32 %v758, %v2316
        %v2592 = vsub.f32 %v764, %v2316
        %v2593 = vsub.f32 %v771, %v2317
        %v2594 = vsub.f32 %v777, %v2317
        %v2595 = vsub.f32 %v784, %v2318
        %v2596 = vsub.f32 %v790, %v2318
        %v2597 = vsub.f32 %v797, %v2319
        %v2598 = vsub.f32 %v803, %v2319
        %v2599 = vsub.f32 %v810, %v2320
        %v2600 = vsub.f32 %v816, %v2320
        %v2601 = vsub.f32 %v823, %v2321
        %v2602 = vsub.f32 %v829, %v2321
        %v2603 = vsub.f32 %v836, %v2322
        %v2604 = vsub.f32 %v842, %v2322
        %v2605 = vsub.f32 %v849, %v2323
        %v2606 = vsub.f32 %v855, %v2323
        %v2607 = vsub.f32 %v862, %v2324
        %v2608 = vsub.f32 %v868, %v2324
        %v2609 = vsub.f32 %v875, %v2325
        %v2610 = vsub.f32 %v881, %v2325
        %v2611 = vsub.f32 %v888, %v2326
        %v2612 = vsub.f32 %v894, %v2326
        %v2613 = vsub.f32 %v901, %v2327
        %v2614 = vsub.f32 %v907, %v2327
        %v2615 = vsub.f32 %v914, %v2328
        %v2616 = vsub.f32 %v920, %v2328
        %v2617 = vsub.f32 %v927, %v2329
        %v2618 = vsub.f32 %v933, %v2329
        %v2619 = vsub.f32 %v940, %v2330
        %v2620 = vsub.f32 %v946, %v2330
        %v2621 = vsub.f32 %v953, %v2331
        %v2622 = vsub.f32 %v959, %v2331
        %v2623 = vsub.f32 %v966, %v2332
        %v2624 = vsub.f32 %v972, %v2332
        %v2625 = vsub.f32 %v979, %v2333
        %v2626 = vsub.f32 %v985, %v2333
        %v2627 = vsub.f32 %v992, %v2334
        %v2628 = vsub.f32 %v998, %v2334
        %v2629 = vsub.f32 %v1005, %v2335
        %v2630 = vsub.f32 %v1011, %v2335
        %v2631 = vsub.f32 %v1018, %v2336
        %v2632 = vsub.f32 %v1024, %v2336
        %v2633 = vsub.f32 %v1031, %v2337
        %v2634 = vsub.f32 %v1037, %v2337
        %v2635 = vsub.f32 %v1044, %v2338
        %v2636 = vsub.f32 %v1050, %v2338
        %v2637 = vsub.f32 %v1057, %v2339
        %v2638 = vsub.f32 %v1063, %v2339
        %v2639 = vsub.f32 %v1070, %v2340
        %v2640 = vsub.f32 %v1076, %v2340
        %v2641 = vsub.f32 %v1083, %v2341
        %v2642 = vsub.f32 %v1089, %v2341
        %v2643 = vsub.f32 %v1096, %v2342
        %v2644 = vsub.f32 %v1102, %v2342
        %v2645 = vsub.f32 %v1109, %v2343
        %v2646 = vsub.f32 %v1115, %v2343
        %v2647 = vsub.f32 %v1122, %v2344
        %v2648 = vsub.f32 %v1128, %v2344
        %v2649 = vsub.f32 %v1135, %v2345
        %v2650 = vsub.f32 %v1141, %v2345
        %v2651 = vsub.f32 %v1148, %v2346
        %v2652 = vsub.f32 %v1154, %v2346
        %v2653 = vsub.f32 %v1161, %v2347
        %v2654 = vsub.f32 %v1167, %v2347
        %v2655 = vsub.f32 %v1174, %v2348
        %v2656 = vsub.f32 %v1180, %v2348
        %v2657 = vsub.f32 %v1187, %v2349
        %v2658 = vsub.f32 %v1193, %v2349
        %v2659 = vsub.f32 %v1200, %v2350
        %v2660 = vsub.f32 %v1206, %v2350
        %v2661 = vsub.f32 %v1213, %v2351
        %v2662 = vsub.f32 %v1219, %v2351
        %v2663 = vsub.f32 %v1226, %v2352
        %v2664 = vsub.f32 %v1232, %v2352
        %v2665 = vsub.f32 %v1239, %v2353
        %v2666 = vsub.f32 %v1245, %v2353
        %v2667 = vsub.f32 %v1252, %v2354
        %v2668 = vsub.f32 %v1258, %v2354
        %v2669 = vsub.f32 %v1265, %v2355
        %v2670 = vsub.f32 %v1271, %v2355
        %v2671 = vsub.f32 %v1278, %v2356
        %v2672 = vsub.f32 %v1284, %v2356
        %v2673 = vsub.f32 %v1291, %v2357
        %v2674 = vsub.f32 %v1297, %v2357
        %v2675 = vsub.f32 %v1304, %v2358
        %v2676 = vsub.f32 %v1310, %v2358
        %v2677 = vsub.f32 %v1317, %v2359
        %v2678 = vsub.f32 %v1323, %v2359
        %v2679 = vsub.f32 %v1330, %v2360
        %v2680 = vsub.f32 %v1336, %v2360
        %v2681 = vsub.f32 %v1343, %v2361
        %v2682 = vsub.f32 %v1349, %v2361
        %v2683 = vsub.f32 %v1356, %v2362
        %v2684 = vsub.f32 %v1362, %v2362
        %v2685 = vsub.f32 %v1369, %v2363
        %v2686 = vsub.f32 %v1375, %v2363
        %v2687 = vsub.f32 %v1382, %v2364
        %v2688 = vsub.f32 %v1388, %v2364
        %v2689 = vsub.f32 %v1395, %v2365
        %v2690 = vsub.f32 %v1401, %v2365
        %v2691 = vsub.f32 %v1408, %v2366
        %v2692 = vsub.f32 %v1414, %v2366
        %v2693 = vsub.f32 %v1421, %v2367
        %v2694 = vsub.f32 %v1427, %v2367
        %v2695 = vsub.f32 %v1434, %v2368
        %v2696 = vsub.f32 %v1440, %v2368
        %v2697 = vsub.f32 %v1447, %v2369
        %v2698 = vsub.f32 %v1453, %v2369
        %v2699 = vsub.f32 %v1460, %v2370
        %v2700 = vsub.f32 %v1466, %v2370
        %v2701 = vsub.f32 %v1473, %v2371
        %v2702 = vsub.f32 %v1479, %v2371
        %v2703 = vsub.f32 %v1486, %v2372
        %v2704 = vsub.f32 %v1492, %v2372
        %v2705 = vsub.f32 %v1499, %v2373
        %v2706 = vsub.f32 %v1505, %v2373
        %v2707 = vsub.f32 %v1512, %v2374
        %v2708 = vsub.f32 %v1518, %v2374
        %v2709 = vsub.f32 %v1525, %v2375
        %v2710 = vsub.f32 %v1531, %v2375
        %v2711 = vsub.f32 %v1538, %v2376
        %v2712 = vsub.f32 %v1544, %v2376
        %v2713 = vsub.f32 %v1551, %v2377
        %v2714 = vsub.f32 %v1557, %v2377
        %v2715 = vsub.f32 %v1564, %v2378
        %v2716 = vsub.f32 %v1570, %v2378
        %v2717 = vsub.f32 %v1577, %v2379
        %v2718 = vsub.f32 %v1583, %v2379
        %v2719 = vsub.f32 %v1590, %v2380
        %v2720 = vsub.f32 %v1596, %v2380
        %v2721 = vsub.f32 %v1603, %v2381
        %v2722 = vsub.f32 %v1609, %v2381
        %v2723 = vsub.f32 %v1616, %v2382
        %v2724 = vsub.f32 %v1622, %v2382
        %v2725 = vsub.f32 %v1629, %v2383
        %v2726 = vsub.f32 %v1635, %v2383
        %v2727 = vsub.f32 %v1642, %v2384
        %v2728 = vsub.f32 %v1648, %v2384
        %v2729 = vsub.f32 %v1655, %v2385
        %v2730 = vsub.f32 %v1661, %v2385
        %v2731 = vsub.f32 %v1668, %v2386
        %v2732 = vsub.f32 %v1674, %v2386
        %v2733 = vsub.f32 %v1681, %v2387
        %v2734 = vsub.f32 %v1687, %v2387
        %v2735 = vsub.f32 %v1694, %v2388
        %v2736 = vsub.f32 %v1700, %v2388
        %v2737 = vsub.f32 %v1707, %v2389
        %v2738 = vsub.f32 %v1713, %v2389
        %v2739 = vsub.f32 %v1720, %v2390
        %v2740 = vsub.f32 %v1726, %v2390
        %v2741 = vsub.f32 %v1733, %v2391
        %v2742 = vsub.f32 %v1739, %v2391
        %v2743 = vsub.f32 %v1746, %v2392
        %v2744 = vsub.f32 %v1752, %v2392
        %v2745 = vsub.f32 %v1759, %v2393
        %v2746 = vsub.f32 %v1765, %v2393
        %v2747 = vsub.f32 %v1772, %v2394
        %v2748 = vsub.f32 %v1778, %v2394
        %v2749 = vsub.f32 %v1785, %v2395
        %v2750 = vsub.f32 %v1791, %v2395
        %v2751 = vsub.f32 %v1798, %v2396
        %v2752 = vsub.f32 %v1804, %v2396
        %v2753 = vsub.f32 %v1811, %v2397
        %v2754 = vsub.f32 %v1817, %v2397
        %v2755 = vsub.f32 %v1824, %v2398
        %v2756 = vsub.f32 %v1830, %v2398
        %v2757 = vsub.f32 %v1837, %v2399
        %v2758 = vsub.f32 %v1843, %v2399
        %v2759 = vsub.f32 %v1850, %v2400
        %v2760 = vsub.f32 %v1856, %v2400
        %v2761 = vsub.f32 %v1863, %v2401
        %v2762 = vsub.f32 %v1869, %v2401
        %v2763 = vsub.f32 %v1876, %v2402
        %v2764 = vsub.f32 %v1882, %v2402
        %v2765 = vsub.f32 %v1889, %v2403
        %v2766 = vsub.f32 %v1895, %v2403
        %v2767 = vsub.f32 %v1902, %v2404
        %v2768 = vsub.f32 %v1908, %v2404
        %v2769 = vsub.f32 %v1915, %v2405
        %v2770 = vsub.f32 %v1921, %v2405
        %v2771 = vsub.f32 %v1928, %v2406
        %v2772 = vsub.f32 %v1934, %v2406
        %v2773 = vsub.f32 %v1941, %v2407
        %v2774 = vsub.f32 %v1947, %v2407
        %v2775 = vsub.f32 %v1954, %v2408
        %v2776 = vsub.f32 %v1960, %v2408
        %v2777 = vsub.f32 %v1967, %v2409
        %v2778 = vsub.f32 %v1973, %v2409
        %v2779 = vsub.f32 %v1980, %v2410
        %v2780 = vsub.f32 %v1986, %v2410
        %v2781 = vsub.f32 %v1993, %v2411
        %v2782 = vsub.f32 %v1999, %v2411
        %v2783 = vsub.f32 %v2006, %v2412
        %v2784 = vsub.f32 %v2012, %v2412
        %v2785 = vsub.f32 %v2019, %v2413
        %v2786 = vsub.f32 %v2025, %v2413
        %v2787 = vsub.f32 %v2032, %v2414
        %v2788 = vsub.f32 %v2038, %v2414
        %v2789 = vsub.f32 %v2045, %v2415
        %v2790 = vsub.f32 %v2051, %v2415
        %v2791 = vsub.f32 %v2058, %v2416
        %v2792 = vsub.f32 %v2064, %v2416
        %v2793 = vsub.f32 %v2071, %v2417
        %v2794 = vsub.f32 %v2077, %v2417
        %v2795 = vsub.f32 %v2084, %v2418
        %v2796 = vsub.f32 %v2090, %v2418
        %v2797 = vsub.f32 %v2097, %v2419
        %v2798 = vsub.f32 %v2103, %v2419
        %v2799 = vsub.f32 %v2110, %v2420
        %v2800 = vsub.f32 %v2116, %v2420
        %v2801 = vsub.f32 %v2123, %v2421
        %v2802 = vsub.f32 %v2129, %v2421
        %v2803 = vsub.f32 %v2136, %v2422
        %v2804 = vsub.f32 %v2142, %v2422
        %v2805 = vsub.f32 %v2149, %v2423
        %v2806 = vsub.f32 %v2155, %v2423
        %v2807 = vsub.f32 %v2162, %v2424
        %v2808 = vsub.f32 %v2168, %v2424
        %v2809 = vand.u32 2147483647, %v2553
        %v2810 = vand.u32 2147483647, %v2554
        %v2811 = vand.u32 2147483647, %v2555
        %v2812 = vand.u32 2147483647, %v2556
        %v2813 = vand.u32 2147483647, %v2557
        %v2814 = vand.u32 2147483647, %v2558
        %v2815 = vand.u32 2147483647, %v2559
        %v2816 = vand.u32 2147483647, %v2560
        %v2817 = vand.u32 2147483647, %v2561
        %v2818 = vand.u32 2147483647, %v2562
        %v2819 = vand.u32 2147483647, %v2563
        %v2820 = vand.u32 2147483647, %v2564
        %v2821 = vand.u32 2147483647, %v2565
        %v2822 = vand.u32 2147483647, %v2566
        %v2823 = vand.u32 2147483647, %v2567
        %v2824 = vand.u32 2147483647, %v2568
        %v2825 = vand.u32 2147483647, %v2569
        %v2826 = vand.u32 2147483647, %v2570
        %v2827 = vand.u32 2147483647, %v2571
        %v2828 = vand.u32 2147483647, %v2572
        %v2829 = vand.u32 2147483647, %v2573
        %v2830 = vand.u32 2147483647, %v2574
        %v2831 = vand.u32 2147483647, %v2575
        %v2832 = vand.u32 2147483647, %v2576
        %v2833 = vand.u32 2147483647, %v2577
        %v2834 = vand.u32 2147483647, %v2578
        %v2835 = vand.u32 2147483647, %v2579
        %v2836 = vand.u32 2147483647, %v2580
        %v2837 = vand.u32 2147483647, %v2581
        %v2838 = vand.u32 2147483647, %v2582
        %v2839 = vand.u32 2147483647, %v2583
        %v2840 = vand.u32 2147483647, %v2584
        %v2841 = vand.u32 2147483647, %v2585
        %v2842 = vand.u32 2147483647, %v2586
        %v2843 = vand.u32 2147483647, %v2587
        %v2844 = vand.u32 2147483647, %v2588
        %v2845 = vand.u32 2147483647, %v2589
        %v2846 = vand.u32 2147483647, %v2590
        %v2847 = vand.u32 2147483647, %v2591
        %v2848 = vand.u32 2147483647, %v2592
        %v2849 = vand.u32 2147483647, %v2593
        %v2850 = vand.u32 2147483647, %v2594
        %v2851 = vand.u32 2147483647, %v2595
        %v2852 = vand.u32 2147483647, %v2596
        %v2853 = vand.u32 2147483647, %v2597
        %v2854 = vand.u32 2147483647, %v2598
        %v2855 = vand.u32 2147483647, %v2599
        %v2856 = vand.u32 2147483647, %v2600
        %v2857 = vand.u32 2147483647, %v2601
        %v2858 = vand.u32 2147483647, %v2602
        %v2859 = vand.u32 2147483647, %v2603
        %v2860 = vand.u32 2147483647, %v2604
        %v2861 = vand.u32 2147483647, %v2605
        %v2862 = vand.u32 2147483647, %v2606
        %v2863 = vand.u32 2147483647, %v2607
        %v2864 = vand.u32 2147483647, %v2608
        %v2865 = vand.u32 2147483647, %v2609
        %v2866 = vand.u32 2147483647, %v2610
        %v2867 = vand.u32 2147483647, %v2611
        %v2868 = vand.u32 2147483647, %v2612
        %v2869 = vand.u32 2147483647, %v2613
        %v2870 = vand.u32 2147483647, %v2614
        %v2871 = vand.u32 2147483647, %v2615
        %v2872 = vand.u32 2147483647, %v2616
        %v2873 = vand.u32 2147483647, %v2617
        %v2874 = vand.u32 2147483647, %v2618
        %v2875 = vand.u32 2147483647, %v2619
        %v2876 = vand.u32 2147483647, %v2620
        %v2877 = vand.u32 2147483647, %v2621
        %v2878 = vand.u32 2147483647, %v2622
        %v2879 = vand.u32 2147483647, %v2623
        %v2880 = vand.u32 2147483647, %v2624
        %v2881 = vand.u32 2147483647, %v2625
        %v2882 = vand.u32 2147483647, %v2626
        %v2883 = vand.u32 2147483647, %v2627
        %v2884 = vand.u32 2147483647, %v2628
        %v2885 = vand.u32 2147483647, %v2629
        %v2886 = vand.u32 2147483647, %v2630
        %v2887 = vand.u32 2147483647, %v2631
        %v2888 = vand.u32 2147483647, %v2632
        %v2889 = vand.u32 2147483647, %v2633
        %v2890 = vand.u32 2147483647, %v2634
        %v2891 = vand.u32 2147483647, %v2635
        %v2892 = vand.u32 2147483647, %v2636
        %v2893 = vand.u32 2147483647, %v2637
        %v2894 = vand.u32 2147483647, %v2638
        %v2895 = vand.u32 2147483647, %v2639
        %v2896 = vand.u32 2147483647, %v2640
        %v2897 = vand.u32 2147483647, %v2641
        %v2898 = vand.u32 2147483647, %v2642
        %v2899 = vand.u32 2147483647, %v2643
        %v2900 = vand.u32 2147483647, %v2644
        %v2901 = vand.u32 2147483647, %v2645
        %v2902 = vand.u32 2147483647, %v2646
        %v2903 = vand.u32 2147483647, %v2647
        %v2904 = vand.u32 2147483647, %v2648
        %v2905 = vand.u32 2147483647, %v2649
        %v2906 = vand.u32 2147483647, %v2650
        %v2907 = vand.u32 2147483647, %v2651
        %v2908 = vand.u32 2147483647, %v2652
        %v2909 = vand.u32 2147483647, %v2653
        %v2910 = vand.u32 2147483647, %v2654
        %v2911 = vand.u32 2147483647, %v2655
        %v2912 = vand.u32 2147483647, %v2656
        %v2913 = vand.u32 2147483647, %v2657
        %v2914 = vand.u32 2147483647, %v2658
        %v2915 = vand.u32 2147483647, %v2659
        %v2916 = vand.u32 2147483647, %v2660
        %v2917 = vand.u32 2147483647, %v2661
        %v2918 = vand.u32 2147483647, %v2662
        %v2919 = vand.u32 2147483647, %v2663
        %v2920 = vand.u32 2147483647, %v2664
        %v2921 = vand.u32 2147483647, %v2665
        %v2922 = vand.u32 2147483647, %v2666
        %v2923 = vand.u32 2147483647, %v2667
        %v2924 = vand.u32 2147483647, %v2668
        %v2925 = vand.u32 2147483647, %v2669
        %v2926 = vand.u32 2147483647, %v2670
        %v2927 = vand.u32 2147483647, %v2671
        %v2928 = vand.u32 2147483647, %v2672
        %v2929 = vand.u32 2147483647, %v2673
        %v2930 = vand.u32 2147483647, %v2674
        %v2931 = vand.u32 2147483647, %v2675
        %v2932 = vand.u32 2147483647, %v2676
        %v2933 = vand.u32 2147483647, %v2677
        %v2934 = vand.u32 2147483647, %v2678
        %v2935 = vand.u32 2147483647, %v2679
        %v2936 = vand.u32 2147483647, %v2680
        %v2937 = vand.u32 2147483647, %v2681
        %v2938 = vand.u32 2147483647, %v2682
        %v2939 = vand.u32 2147483647, %v2683
        %v2940 = vand.u32 2147483647, %v2684
        %v2941 = vand.u32 2147483647, %v2685
        %v2942 = vand.u32 2147483647, %v2686
        %v2943 = vand.u32 2147483647, %v2687
        %v2944 = vand.u32 2147483647, %v2688
        %v2945 = vand.u32 2147483647, %v2689
        %v2946 = vand.u32 2147483647, %v2690
        %v2947 = vand.u32 2147483647, %v2691
        %v2948 = vand.u32 2147483647, %v2692
        %v2949 = vand.u32 2147483647, %v2693
        %v2950 = vand.u32 2147483647, %v2694
        %v2951 = vand.u32 2147483647, %v2695
        %v2952 = vand.u32 2147483647, %v2696
        %v2953 = vand.u32 2147483647, %v2697
        %v2954 = vand.u32 2147483647, %v2698
        %v2955 = vand.u32 2147483647, %v2699
        %v2956 = vand.u32 2147483647, %v2700
        %v2957 = vand.u32 2147483647, %v2701
        %v2958 = vand.u32 2147483647, %v2702
        %v2959 = vand.u32 2147483647, %v2703
        %v2960 = vand.u32 2147483647, %v2704
        %v2961 = vand.u32 2147483647, %v2705
        %v2962 = vand.u32 2147483647, %v2706
        %v2963 = vand.u32 2147483647, %v2707
        %v2964 = vand.u32 2147483647, %v2708
        %v2965 = vand.u32 2147483647, %v2709
        %v2966 = vand.u32 2147483647, %v2710
        %v2967 = vand.u32 2147483647, %v2711
        %v2968 = vand.u32 2147483647, %v2712
        %v2969 = vand.u32 2147483647, %v2713
        %v2970 = vand.u32 2147483647, %v2714
        %v2971 = vand.u32 2147483647, %v2715
        %v2972 = vand.u32 2147483647, %v2716
        %v2973 = vand.u32 2147483647, %v2717
        %v2974 = vand.u32 2147483647, %v2718
        %v2975 = vand.u32 2147483647, %v2719
        %v2976 = vand.u32 2147483647, %v2720
        %v2977 = vand.u32 2147483647, %v2721
        %v2978 = vand.u32 2147483647, %v2722
        %v2979 = vand.u32 2147483647, %v2723
        %v2980 = vand.u32 2147483647, %v2724
        %v2981 = vand.u32 2147483647, %v2725
        %v2982 = vand.u32 2147483647, %v2726
        %v2983 = vand.u32 2147483647, %v2727
        %v2984 = vand.u32 2147483647, %v2728
        %v2985 = vand.u32 2147483647, %v2729
        %v2986 = vand.u32 2147483647, %v2730
        %v2987 = vand.u32 2147483647, %v2731
        %v2988 = vand.u32 2147483647, %v2732
        %v2989 = vand.u32 2147483647, %v2733
        %v2990 = vand.u32 2147483647, %v2734
        %v2991 = vand.u32 2147483647, %v2735
        %v2992 = vand.u32 2147483647, %v2736
        %v2993 = vand.u32 2147483647, %v2737
        %v2994 = vand.u32 2147483647, %v2738
        %v2995 = vand.u32 2147483647, %v2739
        %v2996 = vand.u32 2147483647, %v2740
        %v2997 = vand.u32 2147483647, %v2741
        %v2998 = vand.u32 2147483647, %v2742
        %v2999 = vand.u32 2147483647, %v2743
        %v3000 = vand.u32 2147483647, %v2744
        %v3001 = vand.u32 2147483647, %v2745
        %v3002 = vand.u32 2147483647, %v2746
        %v3003 = vand.u32 2147483647, %v2747
        %v3004 = vand.u32 2147483647, %v2748
        %v3005 = vand.u32 2147483647, %v2749
        %v3006 = vand.u32 2147483647, %v2750
        %v3007 = vand.u32 2147483647, %v2751
        %v3008 = vand.u32 2147483647, %v2752
        %v3009 = vand.u32 2147483647, %v2753
        %v3010 = vand.u32 2147483647, %v2754
        %v3011 = vand.u32 2147483647, %v2755
        %v3012 = vand.u32 2147483647, %v2756
        %v3013 = vand.u32 2147483647, %v2757
        %v3014 = vand.u32 2147483647, %v2758
        %v3015 = vand.u32 2147483647, %v2759
        %v3016 = vand.u32 2147483647, %v2760
        %v3017 = vand.u32 2147483647, %v2761
        %v3018 = vand.u32 2147483647, %v2762
        %v3019 = vand.u32 2147483647, %v2763
        %v3020 = vand.u32 2147483647, %v2764
        %v3021 = vand.u32 2147483647, %v2765
        %v3022 = vand.u32 2147483647, %v2766
        %v3023 = vand.u32 2147483647, %v2767
        %v3024 = vand.u32 2147483647, %v2768
        %v3025 = vand.u32 2147483647, %v2769
        %v3026 = vand.u32 2147483647, %v2770
        %v3027 = vand.u32 2147483647, %v2771
        %v3028 = vand.u32 2147483647, %v2772
        %v3029 = vand.u32 2147483647, %v2773
        %v3030 = vand.u32 2147483647, %v2774
        %v3031 = vand.u32 2147483647, %v2775
        %v3032 = vand.u32 2147483647, %v2776
        %v3033 = vand.u32 2147483647, %v2777
        %v3034 = vand.u32 2147483647, %v2778
        %v3035 = vand.u32 2147483647, %v2779
        %v3036 = vand.u32 2147483647, %v2780
        %v3037 = vand.u32 2147483647, %v2781
        %v3038 = vand.u32 2147483647, %v2782
        %v3039 = vand.u32 2147483647, %v2783
        %v3040 = vand.u32 2147483647, %v2784
        %v3041 = vand.u32 2147483647, %v2785
        %v3042 = vand.u32 2147483647, %v2786
        %v3043 = vand.u32 2147483647, %v2787
        %v3044 = vand.u32 2147483647, %v2788
        %v3045 = vand.u32 2147483647, %v2789
        %v3046 = vand.u32 2147483647, %v2790
        %v3047 = vand.u32 2147483647, %v2791
        %v3048 = vand.u32 2147483647, %v2792
        %v3049 = vand.u32 2147483647, %v2793
        %v3050 = vand.u32 2147483647, %v2794
        %v3051 = vand.u32 2147483647, %v2795
        %v3052 = vand.u32 2147483647, %v2796
        %v3053 = vand.u32 2147483647, %v2797
        %v3054 = vand.u32 2147483647, %v2798
        %v3055 = vand.u32 2147483647, %v2799
        %v3056 = vand.u32 2147483647, %v2800
        %v3057 = vand.u32 2147483647, %v2801
        %v3058 = vand.u32 2147483647, %v2802
        %v3059 = vand.u32 2147483647, %v2803
        %v3060 = vand.u32 2147483647, %v2804
        %v3061 = vand.u32 2147483647, %v2805
        %v3062 = vand.u32 2147483647, %v2806
        %v3063 = vand.u32 2147483647, %v2807
        %v3064 = vand.u32 2147483647, %v2808
        %vm3065 = vcmask 195584
        %v3066 = vsel %vm3065, %v2809, 0.0
        %v3067 = vsel %vm3065, %v2811, 0.0
        %v3068 = vadd.f32 %v3066, %v3067
        %v3069 = vsel %vm3065, %v2813, 0.0
        %v3070 = vadd.f32 %v3068, %v3069
        %v3071 = vsel %vm3065, %v2815, 0.0
        %v3072 = vadd.f32 %v3070, %v3071
        %v3073 = vsel %vm3065, %v2817, 0.0
        %v3074 = vadd.f32 %v3072, %v3073
        %v3075 = vsel %vm3065, %v2819, 0.0
        %v3076 = vadd.f32 %v3074, %v3075
        %v3077 = vsel %vm3065, %v2821, 0.0
        %v3078 = vadd.f32 %v3076, %v3077
        %v3079 = vsel %vm3065, %v2823, 0.0
        %v3080 = vadd.f32 %v3078, %v3079
        %v3081 = vsel %vm3065, %v2825, 0.0
        %v3082 = vadd.f32 %v3080, %v3081
        %v3083 = vsel %vm3065, %v2827, 0.0
        %v3084 = vadd.f32 %v3082, %v3083
        %v3085 = vsel %vm3065, %v2829, 0.0
        %v3086 = vadd.f32 %v3084, %v3085
        %v3087 = vsel %vm3065, %v2831, 0.0
        %v3088 = vadd.f32 %v3086, %v3087
        %v3089 = vsel %vm3065, %v2833, 0.0
        %v3090 = vadd.f32 %v3088, %v3089
        %v3091 = vsel %vm3065, %v2835, 0.0
        %v3092 = vadd.f32 %v3090, %v3091
        %v3093 = vsel %vm3065, %v2837, 0.0
        %v3094 = vadd.f32 %v3092, %v3093
        %v3095 = vsel %vm3065, %v2839, 0.0
        %v3096 = vadd.f32 %v3094, %v3095
        %v3097 = vsel %vm3065, %v2841, 0.0
        %v3098 = vadd.f32 %v3096, %v3097
        %v3099 = vsel %vm3065, %v2843, 0.0
        %v3100 = vadd.f32 %v3098, %v3099
        %v3101 = vsel %vm3065, %v2845, 0.0
        %v3102 = vadd.f32 %v3100, %v3101
        %v3103 = vsel %vm3065, %v2847, 0.0
        %v3104 = vadd.f32 %v3102, %v3103
        %v3105 = vsel %vm3065, %v2849, 0.0
        %v3106 = vadd.f32 %v3104, %v3105
        %v3107 = vsel %vm3065, %v2851, 0.0
        %v3108 = vadd.f32 %v3106, %v3107
        %v3109 = vsel %vm3065, %v2853, 0.0
        %v3110 = vadd.f32 %v3108, %v3109
        %v3111 = vsel %vm3065, %v2855, 0.0
        %v3112 = vadd.f32 %v3110, %v3111
        %v3113 = vsel %vm3065, %v2857, 0.0
        %v3114 = vadd.f32 %v3112, %v3113
        %v3115 = vsel %vm3065, %v2859, 0.0
        %v3116 = vadd.f32 %v3114, %v3115
        %v3117 = vsel %vm3065, %v2861, 0.0
        %v3118 = vadd.f32 %v3116, %v3117
        %v3119 = vsel %vm3065, %v2863, 0.0
        %v3120 = vadd.f32 %v3118, %v3119
        %v3121 = vsel %vm3065, %v2865, 0.0
        %v3122 = vadd.f32 %v3120, %v3121
        %v3123 = vsel %vm3065, %v2867, 0.0
        %v3124 = vadd.f32 %v3122, %v3123
        %v3125 = vsel %vm3065, %v2869, 0.0
        %v3126 = vadd.f32 %v3124, %v3125
        %v3127 = vsel %vm3065, %v2871, 0.0
        %v3128 = vadd.f32 %v3126, %v3127
        %v3129 = vsel %vm3065, %v2873, 0.0
        %v3130 = vadd.f32 %v3128, %v3129
        %v3131 = vsel %vm3065, %v2875, 0.0
        %v3132 = vadd.f32 %v3130, %v3131
        %v3133 = vsel %vm3065, %v2877, 0.0
        %v3134 = vadd.f32 %v3132, %v3133
        %v3135 = vsel %vm3065, %v2879, 0.0
        %v3136 = vadd.f32 %v3134, %v3135
        %v3137 = vsel %vm3065, %v2881, 0.0
        %v3138 = vadd.f32 %v3136, %v3137
        %v3139 = vsel %vm3065, %v2883, 0.0
        %v3140 = vadd.f32 %v3138, %v3139
        %v3141 = vsel %vm3065, %v2885, 0.0
        %v3142 = vadd.f32 %v3140, %v3141
        %v3143 = vsel %vm3065, %v2887, 0.0
        %v3144 = vadd.f32 %v3142, %v3143
        %v3145 = vsel %vm3065, %v2889, 0.0
        %v3146 = vadd.f32 %v3144, %v3145
        %v3147 = vsel %vm3065, %v2891, 0.0
        %v3148 = vadd.f32 %v3146, %v3147
        %v3149 = vsel %vm3065, %v2893, 0.0
        %v3150 = vadd.f32 %v3148, %v3149
        %v3151 = vsel %vm3065, %v2895, 0.0
        %v3152 = vadd.f32 %v3150, %v3151
        %v3153 = vsel %vm3065, %v2897, 0.0
        %v3154 = vadd.f32 %v3152, %v3153
        %v3155 = vsel %vm3065, %v2899, 0.0
        %v3156 = vadd.f32 %v3154, %v3155
        %v3157 = vsel %vm3065, %v2901, 0.0
        %v3158 = vadd.f32 %v3156, %v3157
        %v3159 = vsel %vm3065, %v2903, 0.0
        %v3160 = vadd.f32 %v3158, %v3159
        %v3161 = vsel %vm3065, %v2905, 0.0
        %v3162 = vadd.f32 %v3160, %v3161
        %v3163 = vsel %vm3065, %v2907, 0.0
        %v3164 = vadd.f32 %v3162, %v3163
        %v3165 = vsel %vm3065, %v2909, 0.0
        %v3166 = vadd.f32 %v3164, %v3165
        %v3167 = vsel %vm3065, %v2911, 0.0
        %v3168 = vadd.f32 %v3166, %v3167
        %v3169 = vsel %vm3065, %v2913, 0.0
        %v3170 = vadd.f32 %v3168, %v3169
        %v3171 = vsel %vm3065, %v2915, 0.0
        %v3172 = vadd.f32 %v3170, %v3171
        %v3173 = vsel %vm3065, %v2917, 0.0
        %v3174 = vadd.f32 %v3172, %v3173
        %v3175 = vsel %vm3065, %v2919, 0.0
        %v3176 = vadd.f32 %v3174, %v3175
        %v3177 = vsel %vm3065, %v2921, 0.0
        %v3178 = vadd.f32 %v3176, %v3177
        %v3179 = vsel %vm3065, %v2923, 0.0
        %v3180 = vadd.f32 %v3178, %v3179
        %v3181 = vsel %vm3065, %v2925, 0.0
        %v3182 = vadd.f32 %v3180, %v3181
        %v3183 = vsel %vm3065, %v2927, 0.0
        %v3184 = vadd.f32 %v3182, %v3183
        %v3185 = vsel %vm3065, %v2929, 0.0
        %v3186 = vadd.f32 %v3184, %v3185
        %v3187 = vsel %vm3065, %v2931, 0.0
        %v3188 = vadd.f32 %v3186, %v3187
        %v3189 = vsel %vm3065, %v2933, 0.0
        %v3190 = vadd.f32 %v3188, %v3189
        %v3191 = vsel %vm3065, %v2935, 0.0
        %v3192 = vadd.f32 %v3190, %v3191
        %v3193 = vsel %vm3065, %v2937, 0.0
        %v3194 = vadd.f32 %v3192, %v3193
        %v3195 = vsel %vm3065, %v2939, 0.0
        %v3196 = vadd.f32 %v3194, %v3195
        %v3197 = vsel %vm3065, %v2941, 0.0
        %v3198 = vadd.f32 %v3196, %v3197
        %v3199 = vsel %vm3065, %v2943, 0.0
        %v3200 = vadd.f32 %v3198, %v3199
        %v3201 = vsel %vm3065, %v2945, 0.0
        %v3202 = vadd.f32 %v3200, %v3201
        %v3203 = vsel %vm3065, %v2947, 0.0
        %v3204 = vadd.f32 %v3202, %v3203
        %v3205 = vsel %vm3065, %v2949, 0.0
        %v3206 = vadd.f32 %v3204, %v3205
        %v3207 = vsel %vm3065, %v2951, 0.0
        %v3208 = vadd.f32 %v3206, %v3207
        %v3209 = vsel %vm3065, %v2953, 0.0
        %v3210 = vadd.f32 %v3208, %v3209
        %v3211 = vsel %vm3065, %v2955, 0.0
        %v3212 = vadd.f32 %v3210, %v3211
        %v3213 = vsel %vm3065, %v2957, 0.0
        %v3214 = vadd.f32 %v3212, %v3213
        %v3215 = vsel %vm3065, %v2959, 0.0
        %v3216 = vadd.f32 %v3214, %v3215
        %v3217 = vsel %vm3065, %v2961, 0.0
        %v3218 = vadd.f32 %v3216, %v3217
        %v3219 = vsel %vm3065, %v2963, 0.0
        %v3220 = vadd.f32 %v3218, %v3219
        %v3221 = vsel %vm3065, %v2965, 0.0
        %v3222 = vadd.f32 %v3220, %v3221
        %v3223 = vsel %vm3065, %v2967, 0.0
        %v3224 = vadd.f32 %v3222, %v3223
        %v3225 = vsel %vm3065, %v2969, 0.0
        %v3226 = vadd.f32 %v3224, %v3225
        %v3227 = vsel %vm3065, %v2971, 0.0
        %v3228 = vadd.f32 %v3226, %v3227
        %v3229 = vsel %vm3065, %v2973, 0.0
        %v3230 = vadd.f32 %v3228, %v3229
        %v3231 = vsel %vm3065, %v2975, 0.0
        %v3232 = vadd.f32 %v3230, %v3231
        %v3233 = vsel %vm3065, %v2977, 0.0
        %v3234 = vadd.f32 %v3232, %v3233
        %v3235 = vsel %vm3065, %v2979, 0.0
        %v3236 = vadd.f32 %v3234, %v3235
        %v3237 = vsel %vm3065, %v2981, 0.0
        %v3238 = vadd.f32 %v3236, %v3237
        %v3239 = vsel %vm3065, %v2983, 0.0
        %v3240 = vadd.f32 %v3238, %v3239
        %v3241 = vsel %vm3065, %v2985, 0.0
        %v3242 = vadd.f32 %v3240, %v3241
        %v3243 = vsel %vm3065, %v2987, 0.0
        %v3244 = vadd.f32 %v3242, %v3243
        %v3245 = vsel %vm3065, %v2989, 0.0
        %v3246 = vadd.f32 %v3244, %v3245
        %v3247 = vsel %vm3065, %v2991, 0.0
        %v3248 = vadd.f32 %v3246, %v3247
        %v3249 = vsel %vm3065, %v2993, 0.0
        %v3250 = vadd.f32 %v3248, %v3249
        %v3251 = vsel %vm3065, %v2995, 0.0
        %v3252 = vadd.f32 %v3250, %v3251
        %v3253 = vsel %vm3065, %v2997, 0.0
        %v3254 = vadd.f32 %v3252, %v3253
        %v3255 = vsel %vm3065, %v2999, 0.0
        %v3256 = vadd.f32 %v3254, %v3255
        %v3257 = vsel %vm3065, %v3001, 0.0
        %v3258 = vadd.f32 %v3256, %v3257
        %v3259 = vsel %vm3065, %v3003, 0.0
        %v3260 = vadd.f32 %v3258, %v3259
        %v3261 = vsel %vm3065, %v3005, 0.0
        %v3262 = vadd.f32 %v3260, %v3261
        %v3263 = vsel %vm3065, %v3007, 0.0
        %v3264 = vadd.f32 %v3262, %v3263
        %v3265 = vsel %vm3065, %v3009, 0.0
        %v3266 = vadd.f32 %v3264, %v3265
        %v3267 = vsel %vm3065, %v3011, 0.0
        %v3268 = vadd.f32 %v3266, %v3267
        %v3269 = vsel %vm3065, %v3013, 0.0
        %v3270 = vadd.f32 %v3268, %v3269
        %v3271 = vsel %vm3065, %v3015, 0.0
        %v3272 = vadd.f32 %v3270, %v3271
        %v3273 = vsel %vm3065, %v3017, 0.0
        %v3274 = vadd.f32 %v3272, %v3273
        %v3275 = vsel %vm3065, %v3019, 0.0
        %v3276 = vadd.f32 %v3274, %v3275
        %v3277 = vsel %vm3065, %v3021, 0.0
        %v3278 = vadd.f32 %v3276, %v3277
        %v3279 = vsel %vm3065, %v3023, 0.0
        %v3280 = vadd.f32 %v3278, %v3279
        %v3281 = vsel %vm3065, %v3025, 0.0
        %v3282 = vadd.f32 %v3280, %v3281
        %v3283 = vsel %vm3065, %v3027, 0.0
        %v3284 = vadd.f32 %v3282, %v3283
        %v3285 = vsel %vm3065, %v3029, 0.0
        %v3286 = vadd.f32 %v3284, %v3285
        %v3287 = vsel %vm3065, %v3031, 0.0
        %v3288 = vadd.f32 %v3286, %v3287
        %v3289 = vsel %vm3065, %v3033, 0.0
        %v3290 = vadd.f32 %v3288, %v3289
        %v3291 = vsel %vm3065, %v3035, 0.0
        %v3292 = vadd.f32 %v3290, %v3291
        %v3293 = vsel %vm3065, %v3037, 0.0
        %v3294 = vadd.f32 %v3292, %v3293
        %v3295 = vsel %vm3065, %v3039, 0.0
        %v3296 = vadd.f32 %v3294, %v3295
        %v3297 = vsel %vm3065, %v3041, 0.0
        %v3298 = vadd.f32 %v3296, %v3297
        %v3299 = vsel %vm3065, %v3043, 0.0
        %v3300 = vadd.f32 %v3298, %v3299
        %v3301 = vsel %vm3065, %v3045, 0.0
        %v3302 = vadd.f32 %v3300, %v3301
        %v3303 = vsel %vm3065, %v3047, 0.0
        %v3304 = vadd.f32 %v3302, %v3303
        %v3305 = vsel %vm3065, %v3049, 0.0
        %v3306 = vadd.f32 %v3304, %v3305
        %v3307 = vsel %vm3065, %v3051, 0.0
        %v3308 = vadd.f32 %v3306, %v3307
        %v3309 = vsel %vm3065, %v3053, 0.0
        %v3310 = vadd.f32 %v3308, %v3309
        %v3311 = vsel %vm3065, %v3055, 0.0
        %v3312 = vadd.f32 %v3310, %v3311
        %v3313 = vsel %vm3065, %v3057, 0.0
        %v3314 = vadd.f32 %v3312, %v3313
        %v3315 = vsel %vm3065, %v3059, 0.0
        %v3316 = vadd.f32 %v3314, %v3315
        %v3317 = vsel %vm3065, %v3061, 0.0
        %v3318 = vadd.f32 %v3316, %v3317
        %v3319 = vsel %vm3065, %v3063, 0.0
        %v3320 = vadd.f32 %v3318, %v3319
        %v3321 = vsel %vm3065, %v2810, 0.0
        %v3322 = vsel %vm3065, %v2812, 0.0
        %v3323 = vadd.f32 %v3321, %v3322
        %v3324 = vsel %vm3065, %v2814, 0.0
        %v3325 = vadd.f32 %v3323, %v3324
        %v3326 = vsel %vm3065, %v2816, 0.0
        %v3327 = vadd.f32 %v3325, %v3326
        %v3328 = vsel %vm3065, %v2818, 0.0
        %v3329 = vadd.f32 %v3327, %v3328
        %v3330 = vsel %vm3065, %v2820, 0.0
        %v3331 = vadd.f32 %v3329, %v3330
        %v3332 = vsel %vm3065, %v2822, 0.0
        %v3333 = vadd.f32 %v3331, %v3332
        %v3334 = vsel %vm3065, %v2824, 0.0
        %v3335 = vadd.f32 %v3333, %v3334
        %v3336 = vsel %vm3065, %v2826, 0.0
        %v3337 = vadd.f32 %v3335, %v3336
        %v3338 = vsel %vm3065, %v2828, 0.0
        %v3339 = vadd.f32 %v3337, %v3338
        %v3340 = vsel %vm3065, %v2830, 0.0
        %v3341 = vadd.f32 %v3339, %v3340
        %v3342 = vsel %vm3065, %v2832, 0.0
        %v3343 = vadd.f32 %v3341, %v3342
        %v3344 = vsel %vm3065, %v2834, 0.0
        %v3345 = vadd.f32 %v3343, %v3344
        %v3346 = vsel %vm3065, %v2836, 0.0
        %v3347 = vadd.f32 %v3345, %v3346
        %v3348 = vsel %vm3065, %v2838, 0.0
        %v3349 = vadd.f32 %v3347, %v3348
        %v3350 = vsel %vm3065, %v2840, 0.0
        %v3351 = vadd.f32 %v3349, %v3350
        %v3352 = vsel %vm3065, %v2842, 0.0
        %v3353 = vadd.f32 %v3351, %v3352
        %v3354 = vsel %vm3065, %v2844, 0.0
        %v3355 = vadd.f32 %v3353, %v3354
        %v3356 = vsel %vm3065, %v2846, 0.0
        %v3357 = vadd.f32 %v3355, %v3356
        %v3358 = vsel %vm3065, %v2848, 0.0
        %v3359 = vadd.f32 %v3357, %v3358
        %v3360 = vsel %vm3065, %v2850, 0.0
        %v3361 = vadd.f32 %v3359, %v3360
        %v3362 = vsel %vm3065, %v2852, 0.0
        %v3363 = vadd.f32 %v3361, %v3362
        %v3364 = vsel %vm3065, %v2854, 0.0
        %v3365 = vadd.f32 %v3363, %v3364
        %v3366 = vsel %vm3065, %v2856, 0.0
        %v3367 = vadd.f32 %v3365, %v3366
        %v3368 = vsel %vm3065, %v2858, 0.0
        %v3369 = vadd.f32 %v3367, %v3368
        %v3370 = vsel %vm3065, %v2860, 0.0
        %v3371 = vadd.f32 %v3369, %v3370
        %v3372 = vsel %vm3065, %v2862, 0.0
        %v3373 = vadd.f32 %v3371, %v3372
        %v3374 = vsel %vm3065, %v2864, 0.0
        %v3375 = vadd.f32 %v3373, %v3374
        %v3376 = vsel %vm3065, %v2866, 0.0
        %v3377 = vadd.f32 %v3375, %v3376
        %v3378 = vsel %vm3065, %v2868, 0.0
        %v3379 = vadd.f32 %v3377, %v3378
        %v3380 = vsel %vm3065, %v2870, 0.0
        %v3381 = vadd.f32 %v3379, %v3380
        %v3382 = vsel %vm3065, %v2872, 0.0
        %v3383 = vadd.f32 %v3381, %v3382
        %v3384 = vsel %vm3065, %v2874, 0.0
        %v3385 = vadd.f32 %v3383, %v3384
        %v3386 = vsel %vm3065, %v2876, 0.0
        %v3387 = vadd.f32 %v3385, %v3386
        %v3388 = vsel %vm3065, %v2878, 0.0
        %v3389 = vadd.f32 %v3387, %v3388
        %v3390 = vsel %vm3065, %v2880, 0.0
        %v3391 = vadd.f32 %v3389, %v3390
        %v3392 = vsel %vm3065, %v2882, 0.0
        %v3393 = vadd.f32 %v3391, %v3392
        %v3394 = vsel %vm3065, %v2884, 0.0
        %v3395 = vadd.f32 %v3393, %v3394
        %v3396 = vsel %vm3065, %v2886, 0.0
        %v3397 = vadd.f32 %v3395, %v3396
        %v3398 = vsel %vm3065, %v2888, 0.0
        %v3399 = vadd.f32 %v3397, %v3398
        %v3400 = vsel %vm3065, %v2890, 0.0
        %v3401 = vadd.f32 %v3399, %v3400
        %v3402 = vsel %vm3065, %v2892, 0.0
        %v3403 = vadd.f32 %v3401, %v3402
        %v3404 = vsel %vm3065, %v2894, 0.0
        %v3405 = vadd.f32 %v3403, %v3404
        %v3406 = vsel %vm3065, %v2896, 0.0
        %v3407 = vadd.f32 %v3405, %v3406
        %v3408 = vsel %vm3065, %v2898, 0.0
        %v3409 = vadd.f32 %v3407, %v3408
        %v3410 = vsel %vm3065, %v2900, 0.0
        %v3411 = vadd.f32 %v3409, %v3410
        %v3412 = vsel %vm3065, %v2902, 0.0
        %v3413 = vadd.f32 %v3411, %v3412
        %v3414 = vsel %vm3065, %v2904, 0.0
        %v3415 = vadd.f32 %v3413, %v3414
        %v3416 = vsel %vm3065, %v2906, 0.0
        %v3417 = vadd.f32 %v3415, %v3416
        %v3418 = vsel %vm3065, %v2908, 0.0
        %v3419 = vadd.f32 %v3417, %v3418
        %v3420 = vsel %vm3065, %v2910, 0.0
        %v3421 = vadd.f32 %v3419, %v3420
        %v3422 = vsel %vm3065, %v2912, 0.0
        %v3423 = vadd.f32 %v3421, %v3422
        %v3424 = vsel %vm3065, %v2914, 0.0
        %v3425 = vadd.f32 %v3423, %v3424
        %v3426 = vsel %vm3065, %v2916, 0.0
        %v3427 = vadd.f32 %v3425, %v3426
        %v3428 = vsel %vm3065, %v2918, 0.0
        %v3429 = vadd.f32 %v3427, %v3428
        %v3430 = vsel %vm3065, %v2920, 0.0
        %v3431 = vadd.f32 %v3429, %v3430
        %v3432 = vsel %vm3065, %v2922, 0.0
        %v3433 = vadd.f32 %v3431, %v3432
        %v3434 = vsel %vm3065, %v2924, 0.0
        %v3435 = vadd.f32 %v3433, %v3434
        %v3436 = vsel %vm3065, %v2926, 0.0
        %v3437 = vadd.f32 %v3435, %v3436
        %v3438 = vsel %vm3065, %v2928, 0.0
        %v3439 = vadd.f32 %v3437, %v3438
        %v3440 = vsel %vm3065, %v2930, 0.0
        %v3441 = vadd.f32 %v3439, %v3440
        %v3442 = vsel %vm3065, %v2932, 0.0
        %v3443 = vadd.f32 %v3441, %v3442
        %v3444 = vsel %vm3065, %v2934, 0.0
        %v3445 = vadd.f32 %v3443, %v3444
        %v3446 = vsel %vm3065, %v2936, 0.0
        %v3447 = vadd.f32 %v3445, %v3446
        %v3448 = vsel %vm3065, %v2938, 0.0
        %v3449 = vadd.f32 %v3447, %v3448
        %v3450 = vsel %vm3065, %v2940, 0.0
        %v3451 = vadd.f32 %v3449, %v3450
        %v3452 = vsel %vm3065, %v2942, 0.0
        %v3453 = vadd.f32 %v3451, %v3452
        %v3454 = vsel %vm3065, %v2944, 0.0
        %v3455 = vadd.f32 %v3453, %v3454
        %v3456 = vsel %vm3065, %v2946, 0.0
        %v3457 = vadd.f32 %v3455, %v3456
        %v3458 = vsel %vm3065, %v2948, 0.0
        %v3459 = vadd.f32 %v3457, %v3458
        %v3460 = vsel %vm3065, %v2950, 0.0
        %v3461 = vadd.f32 %v3459, %v3460
        %v3462 = vsel %vm3065, %v2952, 0.0
        %v3463 = vadd.f32 %v3461, %v3462
        %v3464 = vsel %vm3065, %v2954, 0.0
        %v3465 = vadd.f32 %v3463, %v3464
        %v3466 = vsel %vm3065, %v2956, 0.0
        %v3467 = vadd.f32 %v3465, %v3466
        %v3468 = vsel %vm3065, %v2958, 0.0
        %v3469 = vadd.f32 %v3467, %v3468
        %v3470 = vsel %vm3065, %v2960, 0.0
        %v3471 = vadd.f32 %v3469, %v3470
        %v3472 = vsel %vm3065, %v2962, 0.0
        %v3473 = vadd.f32 %v3471, %v3472
        %v3474 = vsel %vm3065, %v2964, 0.0
        %v3475 = vadd.f32 %v3473, %v3474
        %v3476 = vsel %vm3065, %v2966, 0.0
        %v3477 = vadd.f32 %v3475, %v3476
        %v3478 = vsel %vm3065, %v2968, 0.0
        %v3479 = vadd.f32 %v3477, %v3478
        %v3480 = vsel %vm3065, %v2970, 0.0
        %v3481 = vadd.f32 %v3479, %v3480
        %v3482 = vsel %vm3065, %v2972, 0.0
        %v3483 = vadd.f32 %v3481, %v3482
        %v3484 = vsel %vm3065, %v2974, 0.0
        %v3485 = vadd.f32 %v3483, %v3484
        %v3486 = vsel %vm3065, %v2976, 0.0
        %v3487 = vadd.f32 %v3485, %v3486
        %v3488 = vsel %vm3065, %v2978, 0.0
        %v3489 = vadd.f32 %v3487, %v3488
        %v3490 = vsel %vm3065, %v2980, 0.0
        %v3491 = vadd.f32 %v3489, %v3490
        %v3492 = vsel %vm3065, %v2982, 0.0
        %v3493 = vadd.f32 %v3491, %v3492
        %v3494 = vsel %vm3065, %v2984, 0.0
        %v3495 = vadd.f32 %v3493, %v3494
        %v3496 = vsel %vm3065, %v2986, 0.0
        %v3497 = vadd.f32 %v3495, %v3496
        %v3498 = vsel %vm3065, %v2988, 0.0
        %v3499 = vadd.f32 %v3497, %v3498
        %v3500 = vsel %vm3065, %v2990, 0.0
        %v3501 = vadd.f32 %v3499, %v3500
        %v3502 = vsel %vm3065, %v2992, 0.0
        %v3503 = vadd.f32 %v3501, %v3502
        %v3504 = vsel %vm3065, %v2994, 0.0
        %v3505 = vadd.f32 %v3503, %v3504
        %v3506 = vsel %vm3065, %v2996, 0.0
        %v3507 = vadd.f32 %v3505, %v3506
        %v3508 = vsel %vm3065, %v2998, 0.0
        %v3509 = vadd.f32 %v3507, %v3508
        %v3510 = vsel %vm3065, %v3000, 0.0
        %v3511 = vadd.f32 %v3509, %v3510
        %v3512 = vsel %vm3065, %v3002, 0.0
        %v3513 = vadd.f32 %v3511, %v3512
        %v3514 = vsel %vm3065, %v3004, 0.0
        %v3515 = vadd.f32 %v3513, %v3514
        %v3516 = vsel %vm3065, %v3006, 0.0
        %v3517 = vadd.f32 %v3515, %v3516
        %v3518 = vsel %vm3065, %v3008, 0.0
        %v3519 = vadd.f32 %v3517, %v3518
        %v3520 = vsel %vm3065, %v3010, 0.0
        %v3521 = vadd.f32 %v3519, %v3520
        %v3522 = vsel %vm3065, %v3012, 0.0
        %v3523 = vadd.f32 %v3521, %v3522
        %v3524 = vsel %vm3065, %v3014, 0.0
        %v3525 = vadd.f32 %v3523, %v3524
        %v3526 = vsel %vm3065, %v3016, 0.0
        %v3527 = vadd.f32 %v3525, %v3526
        %v3528 = vsel %vm3065, %v3018, 0.0
        %v3529 = vadd.f32 %v3527, %v3528
        %v3530 = vsel %vm3065, %v3020, 0.0
        %v3531 = vadd.f32 %v3529, %v3530
        %v3532 = vsel %vm3065, %v3022, 0.0
        %v3533 = vadd.f32 %v3531, %v3532
        %v3534 = vsel %vm3065, %v3024, 0.0
        %v3535 = vadd.f32 %v3533, %v3534
        %v3536 = vsel %vm3065, %v3026, 0.0
        %v3537 = vadd.f32 %v3535, %v3536
        %v3538 = vsel %vm3065, %v3028, 0.0
        %v3539 = vadd.f32 %v3537, %v3538
        %v3540 = vsel %vm3065, %v3030, 0.0
        %v3541 = vadd.f32 %v3539, %v3540
        %v3542 = vsel %vm3065, %v3032, 0.0
        %v3543 = vadd.f32 %v3541, %v3542
        %v3544 = vsel %vm3065, %v3034, 0.0
        %v3545 = vadd.f32 %v3543, %v3544
        %v3546 = vsel %vm3065, %v3036, 0.0
        %v3547 = vadd.f32 %v3545, %v3546
        %v3548 = vsel %vm3065, %v3038, 0.0
        %v3549 = vadd.f32 %v3547, %v3548
        %v3550 = vsel %vm3065, %v3040, 0.0
        %v3551 = vadd.f32 %v3549, %v3550
        %v3552 = vsel %vm3065, %v3042, 0.0
        %v3553 = vadd.f32 %v3551, %v3552
        %v3554 = vsel %vm3065, %v3044, 0.0
        %v3555 = vadd.f32 %v3553, %v3554
        %v3556 = vsel %vm3065, %v3046, 0.0
        %v3557 = vadd.f32 %v3555, %v3556
        %v3558 = vsel %vm3065, %v3048, 0.0
        %v3559 = vadd.f32 %v3557, %v3558
        %v3560 = vsel %vm3065, %v3050, 0.0
        %v3561 = vadd.f32 %v3559, %v3560
        %v3562 = vsel %vm3065, %v3052, 0.0
        %v3563 = vadd.f32 %v3561, %v3562
        %v3564 = vsel %vm3065, %v3054, 0.0
        %v3565 = vadd.f32 %v3563, %v3564
        %v3566 = vsel %vm3065, %v3056, 0.0
        %v3567 = vadd.f32 %v3565, %v3566
        %v3568 = vsel %vm3065, %v3058, 0.0
        %v3569 = vadd.f32 %v3567, %v3568
        %v3570 = vsel %vm3065, %v3060, 0.0
        %v3571 = vadd.f32 %v3569, %v3570
        %v3572 = vsel %vm3065, %v3062, 0.0
        %v3573 = vadd.f32 %v3571, %v3572
        %v3574 = vsel %vm3065, %v3064, 0.0
        %v3575 = vadd.f32 %v3573, %v3574
        %v3576 = vadd.f32 %v3320, 0.0
        %v3577 = vadd.f32 %v3575, 0.0
        %s3578 = ssub.f32 0.0, %s425
        %v3579 = vstv %s3578
        %v3580 = vmul.f32 %v3576, %v3579
        %v3581 = vmul.f32 %v3577, %v3579
        %v3582 = vsel %vm481, %v3580, -10000000.0
        %v3583 = vsel %vm482, %v3581, -10000000.0
        %v3584 = vxor.u32 %v3582, 2147483648
        %v3585 = vxor.u32 %v3583, 2147483648
        %v3586 = vmul.f32 %v3584, 1.442695
        %v3587 = vpow.pop %v3586
        %v3588 = vmul.f32 %v3585, 1.442695
        %v3589 = vpow.pop %v3588
        %v3590 = vadd.f32 %v3587, 1.0
        %v3591 = vadd.f32 %v3589, 1.0
        %v3592 = vrcp.pop %v3590
        %v3593 = vmul.f32 %v3590, %v3592
        %v3594 = vsub.f32 1.0, %v3593
        %v3595 = vmul.f32 %v3592, %v3594
        %v3596 = vadd.f32 %v3592, %v3595
        %vm3597 = vweird.f32 %v3590
        %vm3598 = vweird.f32 %v3592
        %vm3599 = vmor %vm3597, %vm3598
        %v3600 = vsel %vm3599, %v3592, %v3596
        %v3601 = vand.u32 2147483647, %v3590
        %vm3602 = vcmp.eq.f32.partialorder %v3601, 8.507059e+37
        %v3603 = vand.u32 %v3590, 2147483648
        %v3604 = vor.u32 1.1754944e-38, %v3603
        %v3605 = vsel %vm3602, %v3604, %v3600
        %v3606 = vmul.f32 1.0, %v3605
        %v3607 = vrcp.pop %v3591
        %v3608 = vmul.f32 %v3591, %v3607
        %v3609 = vsub.f32 1.0, %v3608
        %v3610 = vmul.f32 %v3607, %v3609
        %v3611 = vadd.f32 %v3607, %v3610
        %vm3612 = vweird.f32 %v3591
        %vm3613 = vweird.f32 %v3607
        %vm3614 = vmor %vm3612, %vm3613
        %v3615 = vsel %vm3614, %v3607, %v3611
        %v3616 = vand.u32 2147483647, %v3591
        %vm3617 = vcmp.eq.f32.partialorder %v3616, 8.507059e+37
        %v3618 = vand.u32 %v3591, 2147483648
        %v3619 = vor.u32 1.1754944e-38, %v3618
        %v3620 = vsel %vm3617, %v3619, %v3615
        %v3621 = vmul.f32 1.0, %v3620
        %v3622 = vmul.f32 %v503, %v3606
        %v3623 = vmul.f32 %v504, %v3621
        %v3624 = vsel %vm3065, %v3622, -inf
        %v3625 = vsel %vm3065, %v3623, -inf
        %v3626 = vmax.f32 %v3624, %v3625
        %3627 = vmax.xlane.f32.xlu0 %v3626
        %v3628 = vpop.xlane.xlu0 %3627
        %v3629 = vrot.slane %v3628, 4
        %v3630 = vmax.f32 %v3628, %v3629
        %v3631 = vrot.slane %v3630, 2
        %v3632 = vmax.f32 %v3630, %v3631
        %v3633 = vrot.slane %v3632, 1
        %v3634 = vmax.f32 %v3632, %v3633
        %s3635 = vtos %v3634
        %v3636 = vstv %s3635
        %v3637 = vsub.f32 %v3622, %v3636
        %v3638 = vsub.f32 %v3623, %v3636
        %v3639 = vmul.f32 %v3637, 1.442695
        %v3640 = vpow.pop %v3639
        %v3641 = vmul.f32 %v3638, 1.442695
        %v3642 = vpow.pop %v3641
        %v3643 = vsel %vm3065, %v3640, 0.0
        %3644 = vadd.xlane.f32.xlu0 %v3643
        %v3645 = vpop.xlane.xlu0 %3644
        %v3646 = vsel %vm3065, %v3642, 0.0
        %3647 = vadd.xlane.f32.xlu0 %v3646
        %v3648 = vpop.xlane.xlu0 %3647
        %v3649 = vrcp.pop %v3645
        %v3650 = vrcp.pop %v3648
        %v3651 = vadd.f32 %v3643, %v3646
        %v3652 = vrot.slane %v3651, 4
        %v3653 = vadd.f32 %v3651, %v3652
        %v3654 = vrot.slane %v3653, 2
        %v3655 = vadd.f32 %v3653, %v3654
        %v3656 = vrot.slane %v3655, 1
        %v3657 = vadd.f32 %v3655, %v3656
        %v3658 = vrcp.pop %v3657
        %v3659 = vmul.f32 %v3640, %v3649
        %v3660 = vmul.f32 %v3642, %v3650
        %v3661 = vpack.c.bf16 %v3660, %v3659
        %v3662 = vmul.f32 %v3640, %v3658
        %v3663 = vmul.f32 %v3642, %v3658
        %3664 = vxpose.xlu0.b32.start [1/16] %v3662, 128
        %3665 = vxpose.xlu0.b32.cont [2/16] %v3663, 128
        %3666 = vxpose.xlu0.b32.cont [3/16] 0.0, 128
        %3667 = vxpose.xlu0.b32.cont [4/16] 0.0, 128
        %3668 = vxpose.xlu0.b32.cont [5/16] 0.0, 128
        %3669 = vxpose.xlu0.b32.cont [6/16] 0.0, 128
        %3670 = vxpose.xlu0.b32.cont [7/16] 0.0, 128
        %3671 = vxpose.xlu0.b32.cont [8/16] 0.0, 128
        %3672 = vxpose.xlu0.b32.cont [9/16] 0.0, 128
        %3673 = vxpose.xlu0.b32.cont [10/16] 0.0, 128
        %3674 = vxpose.xlu0.b32.cont [11/16] 0.0, 128
        %3675 = vxpose.xlu0.b32.cont [12/16] 0.0, 128
        %3676 = vxpose.xlu0.b32.cont [13/16] 0.0, 128
        %3677 = vxpose.xlu0.b32.cont [14/16] 0.0, 128
        %3678 = vxpose.xlu0.b32.cont [15/16] 0.0, 128
        %3679 = vxpose.xlu0.b32.end [16/16] 0.0, 128
        %v3680 = vpop.trf.xlu0
        %v3681 = vpop.trf.xlu0
        %v3682 = vpop.trf.xlu0
        %v3683 = vpop.trf.xlu0
        %v3684 = vpop.trf.xlu0
        %v3685 = vpop.trf.xlu0
        %v3686 = vpop.trf.xlu0
        %v3687 = vpop.trf.xlu0
        %v3688 = vpop.trf.xlu0
        %v3689 = vpop.trf.xlu0
        %v3690 = vpop.trf.xlu0
        %v3691 = vpop.trf.xlu0
        %v3692 = vpop.trf.xlu0
        %v3693 = vpop.trf.xlu0
        %v3694 = vpop.trf.xlu0
        %v3695 = vpop.trf.xlu0
        %v3696 = vpack.c.bf16 %v3681, %v3680
        %v3697 = vpack.c.bf16 %v3682, %v3682
        %v3699 = vsel %vm3065, %v3661, 0
        %vm3701 = vcmask 1043456
        %v3703 = vsel %vm3701, %v485, 0
        %3705 = vmatpush.bf16.msra.mxu0 0
        %3706 = vmatpush.bf16.msra.mxu0 0
        %3707 = vmatpush.bf16.msra.mxu0 0
        %3708 = vmatpush.bf16.msra.mxu0 0
        %3709 = vmatpush.bf16.msra.mxu0 0
        %3710 = vmatpush.bf16.msra.mxu0 0
        %3711 = vmatpush.bf16.msra.mxu0 %v3703
        %3712 = vmatpush.bf16.msra.mxu0 %v484
        %3713 = vmatmul.bf16.gmra.mxu0 %v3699
        %v3714 = vpop.f32.mrf.mxu0
        %v3715 = vadd.f32 0.0, %v3714
        %v3716 = vpop.f32.mrf.mxu0
        %v3717 = vadd.f32 0.0, %v3716
        %3718 = vdwg.mxu0
        %3719 = vst [vmem:[%s387] sm:$0xff] %v3715
        %3720 = vst [vmem:[%s387 + $0x8] sm:$0xff] %v3717
        %vm3721 = vcmask 130048
        %v3723 = vsel %vm3721, %v3696, 0
        %v3726 = vsel %vm3721, %v3697, 0
        %3728 = vmatpush.bf16.msra.mxu0 0
        %3729 = vmatpush.bf16.msra.mxu0 0
        %3730 = vmatpush.bf16.msra.mxu0 0
        %3731 = vmatpush.bf16.msra.mxu0 0
        %3732 = vmatpush.bf16.msra.mxu0 0
        %3733 = vmatpush.bf16.msra.mxu0 0
        %3734 = vmatpush.bf16.msra.mxu0 0
        %3735 = vmatpush.bf16.msra.mxu0 %v483
        %3736 = vmatmul.bf16.gmra.mxu0 %v3723
        %v3737 = vpop.f32.mrf.mxu0
        %v3738 = vadd.f32 0.0, %v3737
        %v3739 = vpop.f32.mrf.mxu0
        %v3740 = vadd.f32 0.0, %v3739
        %3741 = vmatmul.bf16.gmra.mxu0 %v3726
        %v3742 = vpop.f32.mrf.mxu0
        %v3743 = vadd.f32 0.0, %v3742
        %v3744 = vpop.f32.mrf.mxu0
        %3745 = vdwg.mxu0
        %3746 = vst [vmem:[%s394] sm:$0xff] %v3738
        %3747 = vst [vmem:[%s394 + $0x8] sm:$0xff] %v3740
        %3748 = vst [vmem:[%s394 + $0x10] sm:$0xff] %v3743
        %s3749 = sand.u32 %s212, 1
        %s3750 = scalar_lea.sflag [#allocation3], %s3749
        %s3751 = sand.u32 %s212, 1
        %s3752 = smul.addr %s3751, 16
        %s3753 = scalar_lea.vmem [#allocation5], %s3752
        %s3754 = sand.u32 %s238, 1
        %s3755 = scalar_lea.sflag [#allocation7], %s3754
        %s3756 = sand.u32 %s238, 1
        %s3757 = smul.addr %s3756, 24
        %s3758 = scalar_lea.vmem [#allocation6], %s3757
        // Predicated region
        $region53: #{local_interaction.1} parent=47 // pred_check
          %p3759 = pneg %p222
        $region54: #{local_interaction.1} parent=47 // pred_check_branch
          %3761 = sbr.rel (%p3759) target = $region56
        $region55: #{local_interaction.1} parent=47 // pred_region
          %3763 = vsyncadd %s3750, 0
          %s3764 = smul.addr %s27, 2
          %s3765 = smul.addr %s3764, 8
          %s3766 = scalar_lea.hbm %s7, %s3765
          %s3767 = sshll.u32 %s3753, 4
          %s3768 = int_to_ptr.vmem [resolvable:$true] %s3767
          %s3769 = sshll.u32 %s3766, 4
          %s3770 = int_to_ptr.hbm [resolvable:$true] %s3769
          %3775 = dma.vmem_to_hbm [thread:$0]  %s3768, 256, %s3770, %s3750, 128, 128, 8
        $region56: #{local_interaction.1} parent=47 // pred_fallthru
          _
        // Predicated region
        $region57: #{local_interaction.1} parent=47 // pred_check
          %p3776 = pneg %p248
        $region58: #{local_interaction.1} parent=47 // pred_check_branch
          %3778 = sbr.rel (%p3776) target = $region60
        $region59: #{local_interaction.1} parent=47 // pred_region
          %3780 = vsyncadd %s3755, 0
          %s3781 = smul.addr %s27, 3
          %s3782 = smul.addr %s3781, 8
          %s3783 = scalar_lea.hbm %s8, %s3782
          %s3784 = sshll.u32 %s3758, 4
          %s3785 = int_to_ptr.vmem [resolvable:$true] %s3784
          %s3786 = sshll.u32 %s3783, 4
          %s3787 = int_to_ptr.hbm [resolvable:$true] %s3786
          %3792 = dma.vmem_to_hbm [thread:$0]  %s3785, 384, %s3787, %s3755, 128, 128, 8
        $region60: #{local_interaction.1} parent=47 // pred_fallthru
          _
      $region48: #{local_interaction.1} parent=5 // pred_fallthru
        _
      %p3793 = scmp.le.s32.totalorder 2, %s22
      // Predicated region
      $region61: #{local_interaction.1} parent=5 // pred_check
        %p3794 = pneg %p3793
      $region62: #{local_interaction.1} parent=5 // pred_check_branch
        %3796 = sbr.rel (%p3794) target = $region64
      $region63: #{local_interaction.1} parent=5 // pred_region
        %s3797 = ssub.s32 %s22, 2
        // Predicated region
        $region65: #{local_interaction.1} parent=63 // pred_check
          %p3798 = pneg %p228
        $region66: #{local_interaction.1} parent=63 // pred_check_branch
          %3800 = sbr.rel (%p3798) target = $region68
        $region67: #{local_interaction.1} parent=63 // pred_region
          %s3801 = sand.u32 %s213, 1
          %s3802 = scalar_lea.sflag [#allocation3], %s3801
          %s3803 = sand.u32 %s213, 1
          %s3804 = smul.addr %s3803, 16
          %s3805 = scalar_lea.vmem [#allocation5], %s3804
          %3807 = dma.done %s3802, 256
        $region68: #{local_interaction.1} parent=63 // pred_fallthru
          _
        // Predicated region
        $region69: #{local_interaction.1} parent=63 // pred_check
          %p3808 = pneg %p254
        $region70: #{local_interaction.1} parent=63 // pred_check_branch
          %3810 = sbr.rel (%p3808) target = $region72
        $region71: #{local_interaction.1} parent=63 // pred_region
          %s3811 = sand.u32 %s239, 1
          %s3812 = scalar_lea.sflag [#allocation7], %s3811
          %s3813 = sand.u32 %s239, 1
          %s3814 = smul.addr %s3813, 24
          %s3815 = scalar_lea.vmem [#allocation6], %s3814
          %3817 = dma.done %s3812, 384
        $region72: #{local_interaction.1} parent=63 // pred_fallthru
          _
      $region64: #{local_interaction.1} parent=5 // pred_fallthru
        _
    $region6: #{local_interaction.1} parent=1 // loop_footer
      %s26 = sadd.s32 1, %s22
    $region7: #{local_interaction.1} parent=1 // loop_footer_branch
      %21 = sbr.rel target = $region3
    $region8: #{local_interaction.1} parent=1 // loop_exit
      _
    %3818 = vsyncpa [#allocation3], 1
    %s3819 = scalar_lea.sflag [#allocation3], 1
    %3820 = vsyncpa %s3819, 1
    %3821 = vsyncpa [#allocation7], 1
    %s3822 = scalar_lea.sflag [#allocation7], 1
    %3823 = vsyncpa %s3822, 1
    %3824 = vsyncpa [#allocation4], 1
    %s3825 = scalar_lea.sflag [#allocation4], 1
    %3826 = vsyncpa %s3825, 1

</llo_original>
